<compile_context>
chip_gen: v6e
topology: v6e:2x2x1
jax: 0.10.0
libtpu: 0.0.40
codegen_flags: <defaults>
</compile_context>

<pallas_src>
import functools

import numpy as np

import jax
import jax.numpy as jnp
from jax import lax
from jax.experimental import pallas as pl
from jax.experimental.pallas import tpu as pltpu


def _attention_head_kernel(xq_ref, xkv_ref, w_ref, b_ref, o_ref,
                           q_sc, kv_sc, m_sc, l_sc, acc_sc, *, hp, scale):
    """One (batch, q-tile, kv-tile) grid step of fused-QKV flash attention.

    xq_ref : (1, Tq,  D)       query-side activations
    xkv_ref: (1, Tkv, D)       key/value-side activations (read only at qi==0)
    w_ref  : (D, 3*hp)         fused [Wq | Wk | Wv] (lane-padded per section)
    b_ref  : (1, 3*hp)         fused [bq | bk | bv]
    o_ref  : (1, Tq, hp)       lane-dense output tile
    q_sc   : (Tq, hp)          scaled Q, cached per (batch, q-tile)
    kv_sc  : (n_kv, Tkv, 2*hp) projected K|V cache, filled per batch at qi==0
    m_sc/l_sc : (Tq, 1) f32    online-softmax statistics
    acc_sc : (Tq, hp) f32      output accumulator
    """
    qi = pl.program_id(1)
    ki = pl.program_id(2)
    n_kv = pl.num_programs(2)

    operand_dtype = xkv_ref.dtype
    # bf16 exp uses the EUP bf16 path on v6e/v7x; f32 inputs keep f32 exp.
    exp_dtype = jnp.bfloat16 if operand_dtype == jnp.bfloat16 else jnp.float32
    # f32 inputs: match the f32 reference (HIGHEST = fp32 contract precision).
    mm_prec = (lax.Precision.HIGHEST if operand_dtype == jnp.float32
               else lax.Precision.DEFAULT)

    # --- init per (batch, q-tile): project Q once, reset softmax state ------
    @pl.when(ki == 0)
    def _init():
        xq = xq_ref[0]                                              # (Tq, D)
        q = jnp.dot(xq, w_ref[:, :hp], precision=mm_prec,
                    preferred_element_type=jnp.float32)
        q = (q + b_ref[:, :hp].astype(jnp.float32)) * scale         # fold 1/sqrt(H)
        q_sc[...] = q.astype(q_sc.dtype)
        m_sc[...] = jnp.full_like(m_sc, -jnp.inf)
        l_sc[...] = jnp.zeros_like(l_sc)
        acc_sc[...] = jnp.zeros_like(acc_sc)

    # --- K/V projection: only on the first q-tile pass, cached in VMEM ------
    @pl.when(qi == 0)
    def _project_kv():
        xkv = xkv_ref[0]                                            # (Tkv, D)
        kvp = jnp.dot(xkv, w_ref[:, hp:], precision=mm_prec,
                      preferred_element_type=jnp.float32)
        kvp = kvp + b_ref[:, hp:].astype(jnp.float32)               # (Tkv, 2*hp)
        kv_sc[ki] = kvp.astype(kv_sc.dtype)

    kv_tile = kv_sc[ki]                                             # (Tkv, 2*hp)
    k = kv_tile[:, :hp]
    v = kv_tile[:, hp:]

    # --- scores: contract on the head dim (no explicit transpose of k) ------
    q = q_sc[...]
    s = lax.dot_general(q, k, (((1,), (1,)), ((), ())),
                        precision=mm_prec,
                        preferred_element_type=jnp.float32)         # (Tq, Tkv)

    # --- online-softmax update (statistics in f32) ---------------------------
    m_prev = m_sc[...]
    m_new = jnp.maximum(m_prev, s.max(axis=-1, keepdims=True))
    alpha = jnp.exp((m_prev - m_new).astype(exp_dtype)).astype(jnp.float32)
    p = jnp.exp((s - m_new).astype(exp_dtype))                      # (Tq, Tkv)
    l_sc[...] = alpha * l_sc[...] + jnp.sum(p, axis=-1, keepdims=True,
                                            dtype=jnp.float32)
    acc_sc[...] = alpha * acc_sc[...] + jnp.dot(
        p.astype(operand_dtype), v, precision=mm_prec,
        preferred_element_type=jnp.float32)
    m_sc[...] = m_new

    # --- finalize: one reciprocal-multiply normalization, lane-dense store ---
    @pl.when(ki == n_kv - 1)
    def _finish():
        approx = o_ref.dtype != jnp.float32          # approx recip ok for bf16
        inv_l = pl.reciprocal(l_sc[...], approx=approx)              # (Tq, 1)
        o_ref[0] = (acc_sc[...] * inv_l).astype(o_ref.dtype)


def _vmem_limit_bytes():
    """~3/4 of physical VMEM: ~96 MiB on v5e/v6e (128 MiB), ~48 MiB on v7x."""
    cap = 64 * 1024 * 1024
    try:
        info = pltpu.get_tpu_info()
        cap = int(getattr(info, "vmem_capacity_bytes", 0)) or cap
    except Exception:
        pass
    return int(min(cap * 3 // 4, 112 * 1024 * 1024))


def _pick_tile(s, target, mult):
    """Largest multiple-of-`mult` divisor of s that is <= target, else s."""
    if s <= target:
        return s
    t = (target // mult) * mult
    while t >= mult:
        if s % t == 0:
            return t
        t -= mult
    return s


def attention_head(x, wq, bq, wk, bk, wv, bv, *, q_tile=None, kv_tile=None):
    """x: (B, S, D); w*: (D, H); b*: (1, H) or (H,).  Returns (B, S, H)."""
    B, S, D = x.shape
    H = wq.shape[1]
    Hp = ((H + 127) // 128) * 128              # lane-dense head dim
    dtype = x.dtype
    itemsize = jnp.dtype(dtype).itemsize
    sub = max(8, 32 // itemsize)               # sublane rows: 8 f32 / 16 bf16 / 32 i8
    scale = 1.0 / float(H) ** 0.5

    def pad_w(w):
        return jnp.pad(w.astype(dtype), ((0, 0), (0, Hp - H)))

    def pad_b(b):
        return jnp.pad(b.astype(dtype).reshape(1, H), ((0, 0), (0, Hp - H)))

    # Fused (and per-section zero-padded) QKV weight / bias.
    w_qkv = jnp.concatenate([pad_w(wq), pad_w(wk), pad_w(wv)], axis=1)   # (D, 3Hp)
    b_qkv = jnp.concatenate([pad_b(bq), pad_b(bk), pad_b(bv)], axis=1)   # (1, 3Hp)

    vmem_limit = _vmem_limit_bytes()
    big_vmem = vmem_limit >= 80 * 1024 * 1024  # v5e/v6e vs v7x budgets
    Tq = q_tile if q_tile is not None else _pick_tile(S, 512 if big_vmem else 256, sub)
    Tkv = kv_tile if kv_tile is not None else _pick_tile(S, 1024 if big_vmem else 512, sub)
    assert S % Tq == 0 and S % Tkv == 0, "q_tile / kv_tile must divide seq length"
    n_q, n_kv = S // Tq, S // Tkv
    grid = (B, n_q, n_kv)

    kernel = functools.partial(_attention_head_kernel, hp=Hp, scale=scale)

    # q-side x: one fetch per (batch, q-tile); constant across the kv axis.
    xq_spec = pl.BlockSpec((1, Tq, D), lambda b, qi, ki: (b, qi, 0))

    # kv-side x: only consumed on the qi == 0 pass (K/V projection into the
    # VMEM cache).  For qi > 0 pin the block index to the last kv tile so the
    # pipeline never re-issues the DMA (identical consecutive block indices).
    def xkv_map(b, qi, ki):
        return (b, jnp.where(qi == 0, ki, n_kv - 1), 0)
    xkv_spec = pl.BlockSpec((1, Tkv, D), xkv_map)

    # Rough cost hint: QKV projection + QK^T + PV, exp per score element.
    flops = 2 * B * S * D * 3 * Hp + 4 * B * S * S * Hp
    cost = pl.CostEstimate(
        flops=int(flops),
        transcendentals=int(B * S * S),
        bytes_accessed=int(2 * x.size * itemsize + w_qkv.size * itemsize
                           + b_qkv.size * itemsize + B * S * Hp * itemsize))

    def build(single_buffer_weights):
        def const_spec(shape):
            # Grid-invariant weight/bias: single-buffer to reclaim dead VMEM.
            if single_buffer_weights:
                return pl.BlockSpec(shape, lambda b, qi, ki: (0, 0),
                                    pipeline_mode=pl.Buffered(1))
            return pl.BlockSpec(shape, lambda b, qi, ki: (0, 0))

        return pl.pallas_call(
            kernel,
            out_shape=jax.ShapeDtypeStruct((B, S, Hp), dtype),
            grid_spec=pltpu.PrefetchScalarGridSpec(
                num_scalar_prefetch=0,
                grid=grid,
                in_specs=[
                    xq_spec,
                    xkv_spec,
                    const_spec((D, 3 * Hp)),
                    const_spec((1, 3 * Hp)),
                ],
                out_specs=pl.BlockSpec((1, Tq, Hp), lambda b, qi, ki: (b, qi, 0)),
                scratch_shapes=[
                    pltpu.VMEM((Tq, Hp), dtype),              # scaled Q
                    pltpu.VMEM((n_kv, Tkv, 2 * Hp), dtype),   # projected K|V cache
                    pltpu.VMEM((Tq, 1), jnp.float32),         # running max
                    pltpu.VMEM((Tq, 1), jnp.float32),         # running denom
                    pltpu.VMEM((Tq, Hp), jnp.float32),        # output accumulator
                ],
            ),
            compiler_params=pltpu.CompilerParams(
                # The q-tile axis carries the K/V cache + DMA-skip state, so
                # it must stay sequential; batch provides megacore work.
                dimension_semantics=("parallel", "arbitrary", "arbitrary"),
                vmem_limit_bytes=vmem_limit,
            ),
            cost_estimate=cost,
        )

    try:
        out_padded = build(True)(x, x, w_qkv, b_qkv)
    except Exception:
        # Fallback for jax versions without BlockSpec(pipeline_mode=...)
        # support: default double-buffered constant weights.
        out_padded = build(False)(x, x, w_qkv, b_qkv)

    return out_padded[:, :, :H]


def _reference(x, wq, bq, wk, bk, wv, bv):
    """float64 numpy reference of the PyTorch AttentionHead forward."""
    x, wq, bq, wk, bk, wv, bv = (np.asarray(a, np.float64)
                                 for a in (x, wq, bq, wk, bk, wv, bv))
    q = x @ wq + bq
    k = x @ wk + bk
    v = x @ wv + bv
    s = (q @ np.swapaxes(k, -2, -1)) / np.sqrt(wq.shape[1])
    s = s - s.max(axis=-1, keepdims=True)
    p = np.exp(s)
    p = p / p.sum(axis=-1, keepdims=True)
    return (p @ v).astype(np.float32)


if __name__ == "__main__":
    d_model = 9
    head_size = 4

    key = jax.random.PRNGKey(0)
    kx1, kx2, kq, kbq, kk, kbk, kv_, kbv = jax.random.split(key, 8)

    # PyTorch nn.Linear params (W: (out,in), b: (out,)) stored transposed as
    # (d_model, head_size) / (1, head_size).
    bound = 1.0 / (d_model ** 0.5)
    wq = jax.random.uniform(kq, (d_model, head_size), jnp.float32, -bound, bound)
    wk = jax.random.uniform(kk, (d_model, head_size), jnp.float32, -bound, bound)
    wv = jax.random.uniform(kv_, (d_model, head_size), jnp.float32, -bound, bound)
    bq = jax.random.uniform(kbq, (1, head_size), jnp.float32, -bound, bound)
    bk = jax.random.uniform(kbk, (1, head_size), jnp.float32, -bound, bound)
    bv = jax.random.uniform(kbv, (1, head_size), jnp.float32, -bound, bound)

    # Test 1: tiny shape straight from the module spec (single q/kv tile).
    x1 = jax.random.normal(kx1, (2, 8, d_model), dtype=jnp.float32)
    out1 = attention_head(x1, wq, bq, wk, bk, wv, bv)
    jax.block_until_ready(out1)
    ref1 = _reference(x1, wq, bq, wk, bk, wv, bv)
    assert out1.shape == (2, 8, head_size)
    assert jnp.allclose(out1, ref1, atol=1e-3, rtol=1e-3), \
        float(jnp.abs(out1 - ref1).max())

    # Test 2: multiple q-tiles x multiple kv-tiles (exercises the online
    # softmax across kv tiles, the K/V VMEM cache and the kv-side DMA skip).
    x2 = jax.random.normal(kx2, (2, 64, d_model), dtype=jnp.float32)
    out2 = attention_head(x2, wq, bq, wk, bk, wv, bv, q_tile=16, kv_tile=16)
    jax.block_until_ready(out2)
    ref2 = _reference(x2, wq, bq, wk, bk, wv, bv)
    assert out2.shape == (2, 64, head_size)
    assert jnp.allclose(out2, ref2, atol=1e-3, rtol=1e-3), \
        float(jnp.abs(out2 - ref2).max())

    print("KERNEL_OK")
</pallas_src>

<mosaic_0001>
module attributes {stable_mosaic.version = 11 : i64} {
  func.func @_attention_head_kernel(%arg0: i32, %arg1: i32, %arg2: i32, %arg3: memref<1x8x9xf32, #tpu.memory_space<vmem>>, %arg4: memref<1x8x9xf32, #tpu.memory_space<vmem>>, %arg5: memref<9x384xf32, #tpu.memory_space<vmem>>, %arg6: memref<1x384xf32, #tpu.memory_space<vmem>>, %arg7: memref<1x8x128xf32, #tpu.memory_space<vmem>>, %arg8: memref<8x128xf32, #tpu.memory_space<vmem>>, %arg9: memref<1x8x256xf32, #tpu.memory_space<vmem>>, %arg10: memref<8x1xf32, #tpu.memory_space<vmem>>, %arg11: memref<8x1xf32, #tpu.memory_space<vmem>>, %arg12: memref<8x128xf32, #tpu.memory_space<vmem>>) attributes {dimension_semantics = [#tpu.dimension_semantics<parallel>, #tpu.dimension_semantics<arbitrary>, #tpu.dimension_semantics<arbitrary>], iteration_bounds = array<i64: 2, 1, 1>, scalar_prefetch = 0 : i64, scratch_operands = 5 : i64, tpu.core_type = #tpu.core_type<tc>, window_params = [{transform_indices = @transform_0, window_bounds = array<i64: 1, 8, 9>}, {transform_indices = @transform_1, window_bounds = array<i64: 1, 8, 9>}, {pipeline_mode = #tpu.pipeline_mode<synchronous>, transform_indices = @transform_2, window_bounds = array<i64: 9, 384>}, {pipeline_mode = #tpu.pipeline_mode<synchronous>, transform_indices = @transform_3, window_bounds = array<i64: 1, 384>}, {transform_indices = @transform_4, window_bounds = array<i64: 1, 8, 128>}]} {
    %c0_i32 = arith.constant 0 : i32
    %0 = arith.cmpi eq, %arg2, %c0_i32 : i32
    %1 = arith.extui %0 : i1 to i32
    %c0_i32_0 = arith.constant 0 : i32
    %2 = arith.cmpi ne, %1, %c0_i32_0 : i32
    scf.if %2 {
      %c0_23 = arith.constant 0 : index
      %c0_24 = arith.constant 0 : index
      %c0_25 = arith.constant 0 : index
      %38 = vector.load %arg3[%c0_23, %c0_24, %c0_25] : memref<1x8x9xf32, #tpu.memory_space<vmem>>, vector<1x8x9xf32>
      %39 = vector.shape_cast %38 : vector<1x8x9xf32> to vector<8x9xf32>
      %c0_26 = arith.constant 0 : index
      %c0_27 = arith.constant 0 : index
      %40 = vector.load %arg5[%c0_26, %c0_27] : memref<9x384xf32, #tpu.memory_space<vmem>>, vector<9x128xf32>
      %cst_28 = arith.constant dense<0.000000e+00> : vector<8x128xf32>
      %41 = tpu.matmul %39, %40, %cst_28 {dimension_numbers = #tpu.dot_dimension_numbers<[1], [0], [0], [1], [0, 0, 1, 1], [], []>, precision = #tpu.contract_precision<fp32>} : vector<8x9xf32>, vector<9x128xf32>, vector<8x128xf32> -> vector<8x128xf32>
      %c0_29 = arith.constant 0 : index
      %c0_30 = arith.constant 0 : index
      %42 = vector.load %arg6[%c0_29, %c0_30] : memref<1x384xf32, #tpu.memory_space<vmem>>, vector<1x128xf32>
      %43 = vector.broadcast %42 : vector<1x128xf32> to vector<8x128xf32>
      %44 = arith.addf %41, %43 : vector<8x128xf32>
      %cst_31 = arith.constant 5.000000e-01 : f32
      %45 = vector.broadcast %cst_31 : f32 to vector<8x128xf32>
      %46 = arith.mulf %44, %45 : vector<8x128xf32>
      %c0_32 = arith.constant 0 : index
      %c0_33 = arith.constant 0 : index
      %47 = vector.load %arg8[%c0_32, %c0_33] : memref<8x128xf32, #tpu.memory_space<vmem>>, vector<8x128xf32>
      tpu.vector_store %arg8[%c0_32, %c0_33], %46 {strides = array<i32>} : memref<8x128xf32, #tpu.memory_space<vmem>>, vector<8x128xf32>,
      %cst_34 = arith.constant 0xFF800000 : f32
      %48 = vector.broadcast %cst_34 : f32 to vector<8x1xf32>
      %c0_35 = arith.constant 0 : index
      %c0_36 = arith.constant 0 : index
      %49 = vector.load %arg10[%c0_35, %c0_36] : memref<8x1xf32, #tpu.memory_space<vmem>>, vector<8x1xf32>
      tpu.vector_store %arg10[%c0_35, %c0_36], %48 {strides = array<i32>} : memref<8x1xf32, #tpu.memory_space<vmem>>, vector<8x1xf32>,
      %cst_37 = arith.constant 0.000000e+00 : f32
      %50 = vector.broadcast %cst_37 : f32 to vector<8x1xf32>
      %c0_38 = arith.constant 0 : index
      %c0_39 = arith.constant 0 : index
      %51 = vector.load %arg11[%c0_38, %c0_39] : memref<8x1xf32, #tpu.memory_space<vmem>>, vector<8x1xf32>
      tpu.vector_store %arg11[%c0_38, %c0_39], %50 {strides = array<i32>} : memref<8x1xf32, #tpu.memory_space<vmem>>, vector<8x1xf32>,
      %cst_40 = arith.constant 0.000000e+00 : f32
      %52 = vector.broadcast %cst_40 : f32 to vector<8x128xf32>
      %c0_41 = arith.constant 0 : index
      %c0_42 = arith.constant 0 : index
      %53 = vector.load %arg12[%c0_41, %c0_42] : memref<8x128xf32, #tpu.memory_space<vmem>>, vector<8x128xf32>
      tpu.vector_store %arg12[%c0_41, %c0_42], %52 {strides = array<i32>} : memref<8x128xf32, #tpu.memory_space<vmem>>, vector<8x128xf32>,
    } else {
    }
    %c0_i32_1 = arith.constant 0 : i32
    %3 = arith.cmpi eq, %arg1, %c0_i32_1 : i32
    %4 = arith.extui %3 : i1 to i32
    %c0_i32_2 = arith.constant 0 : i32
    %5 = arith.cmpi ne, %4, %c0_i32_2 : i32
    scf.if %5 {
      %c0_23 = arith.constant 0 : index
      %c0_24 = arith.constant 0 : index
      %c0_25 = arith.constant 0 : index
      %38 = vector.load %arg4[%c0_23, %c0_24, %c0_25] : memref<1x8x9xf32, #tpu.memory_space<vmem>>, vector<1x8x9xf32>
      %39 = vector.shape_cast %38 : vector<1x8x9xf32> to vector<8x9xf32>
      %c0_26 = arith.constant 0 : index
      %c128 = arith.constant 128 : index
      %40 = vector.load %arg5[%c0_26, %c128] : memref<9x384xf32, #tpu.memory_space<vmem>>, vector<9x256xf32>
      %cst_27 = arith.constant dense<0.000000e+00> : vector<8x256xf32>
      %41 = tpu.matmul %39, %40, %cst_27 {dimension_numbers = #tpu.dot_dimension_numbers<[1], [0], [0], [1], [0, 0, 1, 1], [], []>, precision = #tpu.contract_precision<fp32>} : vector<8x9xf32>, vector<9x256xf32>, vector<8x256xf32> -> vector<8x256xf32>
      %c0_28 = arith.constant 0 : index
      %c128_29 = arith.constant 128 : index
      %42 = vector.load %arg6[%c0_28, %c128_29] : memref<1x384xf32, #tpu.memory_space<vmem>>, vector<1x256xf32>
      %43 = vector.broadcast %42 : vector<1x256xf32> to vector<8x256xf32>
      %44 = arith.addf %41, %43 : vector<8x256xf32>
      %45 = arith.index_cast %arg2 : i32 to index
      %c0_30 = arith.constant 0 : index
      %c0_31 = arith.constant 0 : index
      %46 = vector.load %arg9[%45, %c0_30, %c0_31] : memref<1x8x256xf32, #tpu.memory_space<vmem>>, vector<1x8x256xf32>
      %47 = vector.shape_cast %46 : vector<1x8x256xf32> to vector<8x256xf32>
      %48 = vector.shape_cast %44 : vector<8x256xf32> to vector<1x8x256xf32>
      tpu.vector_store %arg9[%45, %c0_30, %c0_31], %48 {strides = array<i32>} : memref<1x8x256xf32, #tpu.memory_space<vmem>>, vector<1x8x256xf32>,
    } else {
    }
    %6 = arith.index_cast %arg2 : i32 to index
    %c0 = arith.constant 0 : index
    %c0_3 = arith.constant 0 : index
    %7 = vector.load %arg9[%6, %c0, %c0_3] : memref<1x8x256xf32, #tpu.memory_space<vmem>>, vector<1x8x256xf32>
    %8 = vector.shape_cast %7 : vector<1x8x256xf32> to vector<8x256xf32>
    %9 = vector.extract_strided_slice %8 {offsets = [0, 0], sizes = [8, 128], strides = [1, 1]} : vector<8x256xf32> to vector<8x128xf32>
    %10 = vector.extract_strided_slice %8 {offsets = [0, 128], sizes = [8, 128], strides = [1, 1]} : vector<8x256xf32> to vector<8x128xf32>
    %c0_4 = arith.constant 0 : index
    %c0_5 = arith.constant 0 : index
    %11 = vector.load %arg8[%c0_4, %c0_5] : memref<8x128xf32, #tpu.memory_space<vmem>>, vector<8x128xf32>
    %cst = arith.constant dense<0.000000e+00> : vector<8x8xf32>
    %12 = tpu.matmul %11, %9, %cst {dimension_numbers = #tpu.dot_dimension_numbers<[1], [1], [0], [0], [0, 0, 1, 0], [], []>, precision = #tpu.contract_precision<fp32>} : vector<8x128xf32>, vector<8x128xf32>, vector<8x8xf32> -> vector<8x8xf32>
    %c0_6 = arith.constant 0 : index
    %c0_7 = arith.constant 0 : index
    %13 = vector.load %arg10[%c0_6, %c0_7] : memref<8x1xf32, #tpu.memory_space<vmem>>, vector<8x1xf32>
    %cst_8 = arith.constant dense<0xFF800000> : vector<8xf32>
    %14 = vector.multi_reduction <maximumf>, %12, %cst_8 [1] : vector<8x8xf32> to vector<8xf32>
    %15 = vector.shape_cast %14 : vector<8xf32> to vector<8x1xf32>
    %16 = arith.maximumf %13, %15 : vector<8x1xf32>
    %17 = arith.subf %13, %16 : vector<8x1xf32>
    %18 = math.exp %17 : vector<8x1xf32>
    %19 = vector.broadcast %16 : vector<8x1xf32> to vector<8x8xf32>
    %20 = arith.subf %12, %19 : vector<8x8xf32>
    %21 = math.exp %20 : vector<8x8xf32>
    %c0_9 = arith.constant 0 : index
    %c0_10 = arith.constant 0 : index
    %22 = vector.load %arg11[%c0_9, %c0_10] : memref<8x1xf32, #tpu.memory_space<vmem>>, vector<8x1xf32>
    %23 = arith.mulf %18, %22 : vector<8x1xf32>
    %cst_11 = arith.constant dense<0.000000e+00> : vector<8xf32>
    %24 = vector.multi_reduction <add>, %21, %cst_11 [1] : vector<8x8xf32> to vector<8xf32>
    %25 = vector.shape_cast %24 : vector<8xf32> to vector<8x1xf32>
    %26 = arith.addf %23, %25 : vector<8x1xf32>
    %c0_12 = arith.constant 0 : index
    %c0_13 = arith.constant 0 : index
    %27 = vector.load %arg11[%c0_12, %c0_13] : memref<8x1xf32, #tpu.memory_space<vmem>>, vector<8x1xf32>
    tpu.vector_store %arg11[%c0_12, %c0_13], %26 {strides = array<i32>} : memref<8x1xf32, #tpu.memory_space<vmem>>, vector<8x1xf32>,
    %c0_14 = arith.constant 0 : index
    %c0_15 = arith.constant 0 : index
    %28 = vector.load %arg12[%c0_14, %c0_15] : memref<8x128xf32, #tpu.memory_space<vmem>>, vector<8x128xf32>
    %29 = vector.broadcast %18 : vector<8x1xf32> to vector<8x128xf32>
    %30 = arith.mulf %29, %28 : vector<8x128xf32>
    %cst_16 = arith.constant dense<0.000000e+00> : vector<8x128xf32>
    %31 = tpu.matmul %21, %10, %cst_16 {dimension_numbers = #tpu.dot_dimension_numbers<[1], [0], [0], [1], [0, 0, 1, 1], [], []>, precision = #tpu.contract_precision<fp32>} : vector<8x8xf32>, vector<8x128xf32>, vector<8x128xf32> -> vector<8x128xf32>
    %32 = arith.addf %30, %31 : vector<8x128xf32>
    %c0_17 = arith.constant 0 : index
    %c0_18 = arith.constant 0 : index
    %33 = vector.load %arg12[%c0_17, %c0_18] : memref<8x128xf32, #tpu.memory_space<vmem>>, vector<8x128xf32>
    tpu.vector_store %arg12[%c0_17, %c0_18], %32 {strides = array<i32>} : memref<8x128xf32, #tpu.memory_space<vmem>>, vector<8x128xf32>,
    %c0_19 = arith.constant 0 : index
    %c0_20 = arith.constant 0 : index
    %34 = vector.load %arg10[%c0_19, %c0_20] : memref<8x1xf32, #tpu.memory_space<vmem>>, vector<8x1xf32>
    tpu.vector_store %arg10[%c0_19, %c0_20], %16 {strides = array<i32>} : memref<8x1xf32, #tpu.memory_space<vmem>>, vector<8x1xf32>,
    %c0_i32_21 = arith.constant 0 : i32
    %35 = arith.cmpi eq, %arg2, %c0_i32_21 : i32
    %36 = arith.extui %35 : i1 to i32
    %c0_i32_22 = arith.constant 0 : i32
    %37 = arith.cmpi ne, %36, %c0_i32_22 : i32
    scf.if %37 {
      %c0_23 = arith.constant 0 : index
      %c0_24 = arith.constant 0 : index
      %38 = vector.load %arg11[%c0_23, %c0_24] : memref<8x1xf32, #tpu.memory_space<vmem>>, vector<8x1xf32>
      %39 = tpu.reciprocal %38 : vector<8x1xf32> -> vector<8x1xf32>
      %c0_25 = arith.constant 0 : index
      %c0_26 = arith.constant 0 : index
      %40 = vector.load %arg12[%c0_25, %c0_26] : memref<8x128xf32, #tpu.memory_space<vmem>>, vector<8x128xf32>
      %41 = vector.broadcast %39 : vector<8x1xf32> to vector<8x128xf32>
      %42 = arith.mulf %40, %41 : vector<8x128xf32>
      %c0_27 = arith.constant 0 : index
      %c0_28 = arith.constant 0 : index
      %c0_29 = arith.constant 0 : index
      %43 = vector.load %arg7[%c0_27, %c0_28, %c0_29] : memref<1x8x128xf32, #tpu.memory_space<vmem>>, vector<1x8x128xf32>
      %44 = vector.shape_cast %43 : vector<1x8x128xf32> to vector<8x128xf32>
      %45 = vector.shape_cast %42 : vector<8x128xf32> to vector<1x8x128xf32>
      tpu.vector_store %arg7[%c0_27, %c0_28, %c0_29], %45 {strides = array<i32>} : memref<1x8x128xf32, #tpu.memory_space<vmem>>, vector<1x8x128xf32>,
    } else {
    }
    return
  }
  func.func @transform_0(%arg0: i32, %arg1: i32, %arg2: i32) -> (i32, i32, i32) {
    %c0_i32 = arith.constant 0 : i32
    %c0_i32_0 = arith.constant 0 : i32
    return %arg0, %arg1, %c0_i32 : i32, i32, i32
  }
  func.func @transform_1(%arg0: i32, %arg1: i32, %arg2: i32) -> (i32, i32, i32) {
    %c0_i32 = arith.constant 0 : i32
    %0 = arith.cmpi eq, %arg1, %c0_i32 : i32
    %c0_i32_0 = arith.constant 0 : i32
    %1 = arith.select %0, %arg2, %c0_i32_0 : i32
    %c0_i32_1 = arith.constant 0 : i32
    %c0_i32_2 = arith.constant 0 : i32
    return %arg0, %1, %c0_i32_1 : i32, i32, i32
  }
  func.func @transform_2(%arg0: i32, %arg1: i32, %arg2: i32) -> (i32, i32) {
    %c0_i32 = arith.constant 0 : i32
    %c0_i32_0 = arith.constant 0 : i32
    %c0_i32_1 = arith.constant 0 : i32
    return %c0_i32, %c0_i32_0 : i32, i32
  }
  func.func @transform_3(%arg0: i32, %arg1: i32, %arg2: i32) -> (i32, i32) {
    %c0_i32 = arith.constant 0 : i32
    %c0_i32_0 = arith.constant 0 : i32
    %c0_i32_1 = arith.constant 0 : i32
    return %c0_i32, %c0_i32_0 : i32, i32
  }
  func.func @transform_4(%arg0: i32, %arg1: i32, %arg2: i32) -> (i32, i32, i32) {
    %c0_i32 = arith.constant 0 : i32
    %c0_i32_0 = arith.constant 0 : i32
    return %arg0, %arg1, %c0_i32 : i32, i32, i32
  }
}

module attributes {stable_mosaic.version = 11 : i64} {
  func.func @_attention_head_kernel(%arg0: i32, %arg1: i32, %arg2: i32, %arg3: memref<1x8x9xf32, #tpu.memory_space<vmem>>, %arg4: memref<1x8x9xf32, #tpu.memory_space<vmem>>, %arg5: memref<9x384xf32, #tpu.memory_space<vmem>>, %arg6: memref<1x384xf32, #tpu.memory_space<vmem>>, %arg7: memref<1x8x128xf32, #tpu.memory_space<vmem>>, %arg8: memref<8x128xf32, #tpu.memory_space<vmem>>, %arg9: memref<1x8x256xf32, #tpu.memory_space<vmem>>, %arg10: memref<8x1xf32, #tpu.memory_space<vmem>>, %arg11: memref<8x1xf32, #tpu.memory_space<vmem>>, %arg12: memref<8x128xf32, #tpu.memory_space<vmem>>) attributes {dimension_semantics = [#tpu.dimension_semantics<parallel>, #tpu.dimension_semantics<arbitrary>, #tpu.dimension_semantics<arbitrary>], iteration_bounds = array<i64: 2, 1, 1>, scalar_prefetch = 0 : i64, scratch_operands = 5 : i64, tpu.core_type = #tpu.core_type<tc>, window_params = [{transform_indices = @transform_0, window_bounds = array<i64: 1, 8, 9>}, {transform_indices = @transform_1, window_bounds = array<i64: 1, 8, 9>}, {pipeline_mode = #tpu.pipeline_mode<synchronous>, transform_indices = @transform_2, window_bounds = array<i64: 9, 384>}, {pipeline_mode = #tpu.pipeline_mode<synchronous>, transform_indices = @transform_3, window_bounds = array<i64: 1, 384>}, {transform_indices = @transform_4, window_bounds = array<i64: 1, 8, 128>}]} {
    %c0_i32 = arith.constant 0 : i32
    %0 = arith.cmpi eq, %arg2, %c0_i32 : i32
    %1 = arith.extui %0 : i1 to i32
    %c0_i32_0 = arith.constant 0 : i32
    %2 = arith.cmpi ne, %1, %c0_i32_0 : i32
    scf.if %2 {
      %c0_23 = arith.constant 0 : index
      %c0_24 = arith.constant 0 : index
      %c0_25 = arith.constant 0 : index
      %38 = vector.load %arg3[%c0_23, %c0_24, %c0_25] : memref<1x8x9xf32, #tpu.memory_space<vmem>>, vector<1x8x9xf32>
      %39 = vector.shape_cast %38 : vector<1x8x9xf32> to vector<8x9xf32>
      %c0_26 = arith.constant 0 : index
      %c0_27 = arith.constant 0 : index
      %40 = vector.load %arg5[%c0_26, %c0_27] : memref<9x384xf32, #tpu.memory_space<vmem>>, vector<9x128xf32>
      %cst_28 = arith.constant dense<0.000000e+00> : vector<8x128xf32>
      %41 = tpu.matmul %39, %40, %cst_28 {dimension_numbers = #tpu.dot_dimension_numbers<[1], [0], [0], [1], [0, 0, 1, 1], [], []>, precision = #tpu.contract_precision<fp32>} : vector<8x9xf32>, vector<9x128xf32>, vector<8x128xf32> -> vector<8x128xf32>
      %c0_29 = arith.constant 0 : index
      %c0_30 = arith.constant 0 : index
      %42 = vector.load %arg6[%c0_29, %c0_30] : memref<1x384xf32, #tpu.memory_space<vmem>>, vector<1x128xf32>
      %43 = vector.broadcast %42 : vector<1x128xf32> to vector<8x128xf32>
      %44 = arith.addf %41, %43 : vector<8x128xf32>
      %cst_31 = arith.constant 5.000000e-01 : f32
      %45 = vector.broadcast %cst_31 : f32 to vector<8x128xf32>
      %46 = arith.mulf %44, %45 : vector<8x128xf32>
      %c0_32 = arith.constant 0 : index
      %c0_33 = arith.constant 0 : index
      %47 = vector.load %arg8[%c0_32, %c0_33] : memref<8x128xf32, #tpu.memory_space<vmem>>, vector<8x128xf32>
      tpu.vector_store %arg8[%c0_32, %c0_33], %46 {strides = array<i32>} : memref<8x128xf32, #tpu.memory_space<vmem>>, vector<8x128xf32>,
      %cst_34 = arith.constant 0xFF800000 : f32
      %48 = vector.broadcast %cst_34 : f32 to vector<8x1xf32>
      %c0_35 = arith.constant 0 : index
      %c0_36 = arith.constant 0 : index
      %49 = vector.load %arg10[%c0_35, %c0_36] : memref<8x1xf32, #tpu.memory_space<vmem>>, vector<8x1xf32>
      tpu.vector_store %arg10[%c0_35, %c0_36], %48 {strides = array<i32>} : memref<8x1xf32, #tpu.memory_space<vmem>>, vector<8x1xf32>,
      %cst_37 = arith.constant 0.000000e+00 : f32
      %50 = vector.broadcast %cst_37 : f32 to vector<8x1xf32>
      %c0_38 = arith.constant 0 : index
      %c0_39 = arith.constant 0 : index
      %51 = vector.load %arg11[%c0_38, %c0_39] : memref<8x1xf32, #tpu.memory_space<vmem>>, vector<8x1xf32>
      tpu.vector_store %arg11[%c0_38, %c0_39], %50 {strides = array<i32>} : memref<8x1xf32, #tpu.memory_space<vmem>>, vector<8x1xf32>,
      %cst_40 = arith.constant 0.000000e+00 : f32
      %52 = vector.broadcast %cst_40 : f32 to vector<8x128xf32>
      %c0_41 = arith.constant 0 : index
      %c0_42 = arith.constant 0 : index
      %53 = vector.load %arg12[%c0_41, %c0_42] : memref<8x128xf32, #tpu.memory_space<vmem>>, vector<8x128xf32>
      tpu.vector_store %arg12[%c0_41, %c0_42], %52 {strides = array<i32>} : memref<8x128xf32, #tpu.memory_space<vmem>>, vector<8x128xf32>,
    } else {
    }
    %c0_i32_1 = arith.constant 0 : i32
    %3 = arith.cmpi eq, %arg1, %c0_i32_1 : i32
    %4 = arith.extui %3 : i1 to i32
    %c0_i32_2 = arith.constant 0 : i32
    %5 = arith.cmpi ne, %4, %c0_i32_2 : i32
    scf.if %5 {
      %c0_23 = arith.constant 0 : index
      %c0_24 = arith.constant 0 : index
      %c0_25 = arith.constant 0 : index
      %38 = vector.load %arg4[%c0_23, %c0_24, %c0_25] : memref<1x8x9xf32, #tpu.memory_space<vmem>>, vector<1x8x9xf32>
      %39 = vector.shape_cast %38 : vector<1x8x9xf32> to vector<8x9xf32>
      %c0_26 = arith.constant 0 : index
      %c128 = arith.constant 128 : index
      %40 = vector.load %arg5[%c0_26, %c128] : memref<9x384xf32, #tpu.memory_space<vmem>>, vector<9x256xf32>
      %cst_27 = arith.constant dense<0.000000e+00> : vector<8x256xf32>
      %41 = tpu.matmul %39, %40, %cst_27 {dimension_numbers = #tpu.dot_dimension_numbers<[1], [0], [0], [1], [0, 0, 1, 1], [], []>, precision = #tpu.contract_precision<fp32>} : vector<8x9xf32>, vector<9x256xf32>, vector<8x256xf32> -> vector<8x256xf32>
      %c0_28 = arith.constant 0 : index
      %c128_29 = arith.constant 128 : index
      %42 = vector.load %arg6[%c0_28, %c128_29] : memref<1x384xf32, #tpu.memory_space<vmem>>, vector<1x256xf32>
      %43 = vector.broadcast %42 : vector<1x256xf32> to vector<8x256xf32>
      %44 = arith.addf %41, %43 : vector<8x256xf32>
      %45 = arith.index_cast %arg2 : i32 to index
      %c0_30 = arith.constant 0 : index
      %c0_31 = arith.constant 0 : index
      %46 = vector.load %arg9[%45, %c0_30, %c0_31] : memref<1x8x256xf32, #tpu.memory_space<vmem>>, vector<1x8x256xf32>
      %47 = vector.shape_cast %46 : vector<1x8x256xf32> to vector<8x256xf32>
      %48 = vector.shape_cast %44 : vector<8x256xf32> to vector<1x8x256xf32>
      tpu.vector_store %arg9[%45, %c0_30, %c0_31], %48 {strides = array<i32>} : memref<1x8x256xf32, #tpu.memory_space<vmem>>, vector<1x8x256xf32>,
    } else {
    }
    %6 = arith.index_cast %arg2 : i32 to index
    %c0 = arith.constant 0 : index
    %c0_3 = arith.constant 0 : index
    %7 = vector.load %arg9[%6, %c0, %c0_3] : memref<1x8x256xf32, #tpu.memory_space<vmem>>, vector<1x8x256xf32>
    %8 = vector.shape_cast %7 : vector<1x8x256xf32> to vector<8x256xf32>
    %9 = vector.extract_strided_slice %8 {offsets = [0, 0], sizes = [8, 128], strides = [1, 1]} : vector<8x256xf32> to vector<8x128xf32>
    %10 = vector.extract_strided_slice %8 {offsets = [0, 128], sizes = [8, 128], strides = [1, 1]} : vector<8x256xf32> to vector<8x128xf32>
    %c0_4 = arith.constant 0 : index
    %c0_5 = arith.constant 0 : index
    %11 = vector.load %arg8[%c0_4, %c0_5] : memref<8x128xf32, #tpu.memory_space<vmem>>, vector<8x128xf32>
    %cst = arith.constant dense<0.000000e+00> : vector<8x8xf32>
    %12 = tpu.matmul %11, %9, %cst {dimension_numbers = #tpu.dot_dimension_numbers<[1], [1], [0], [0], [0, 0, 1, 0], [], []>, precision = #tpu.contract_precision<fp32>} : vector<8x128xf32>, vector<8x128xf32>, vector<8x8xf32> -> vector<8x8xf32>
    %c0_6 = arith.constant 0 : index
    %c0_7 = arith.constant 0 : index
    %13 = vector.load %arg10[%c0_6, %c0_7] : memref<8x1xf32, #tpu.memory_space<vmem>>, vector<8x1xf32>
    %cst_8 = arith.constant dense<0xFF800000> : vector<8xf32>
    %14 = vector.multi_reduction <maximumf>, %12, %cst_8 [1] : vector<8x8xf32> to vector<8xf32>
    %15 = vector.shape_cast %14 : vector<8xf32> to vector<8x1xf32>
    %16 = arith.maximumf %13, %15 : vector<8x1xf32>
    %17 = arith.subf %13, %16 : vector<8x1xf32>
    %18 = math.exp %17 : vector<8x1xf32>
    %19 = vector.broadcast %16 : vector<8x1xf32> to vector<8x8xf32>
    %20 = arith.subf %12, %19 : vector<8x8xf32>
    %21 = math.exp %20 : vector<8x8xf32>
    %c0_9 = arith.constant 0 : index
    %c0_10 = arith.constant 0 : index
    %22 = vector.load %arg11[%c0_9, %c0_10] : memref<8x1xf32, #tpu.memory_space<vmem>>, vector<8x1xf32>
    %23 = arith.mulf %18, %22 : vector<8x1xf32>
    %cst_11 = arith.constant dense<0.000000e+00> : vector<8xf32>
    %24 = vector.multi_reduction <add>, %21, %cst_11 [1] : vector<8x8xf32> to vector<8xf32>
    %25 = vector.shape_cast %24 : vector<8xf32> to vector<8x1xf32>
    %26 = arith.addf %23, %25 : vector<8x1xf32>
    %c0_12 = arith.constant 0 : index
    %c0_13 = arith.constant 0 : index
    %27 = vector.load %arg11[%c0_12, %c0_13] : memref<8x1xf32, #tpu.memory_space<vmem>>, vector<8x1xf32>
    tpu.vector_store %arg11[%c0_12, %c0_13], %26 {strides = array<i32>} : memref<8x1xf32, #tpu.memory_space<vmem>>, vector<8x1xf32>,
    %c0_14 = arith.constant 0 : index
    %c0_15 = arith.constant 0 : index
    %28 = vector.load %arg12[%c0_14, %c0_15] : memref<8x128xf32, #tpu.memory_space<vmem>>, vector<8x128xf32>
    %29 = vector.broadcast %18 : vector<8x1xf32> to vector<8x128xf32>
    %30 = arith.mulf %29, %28 : vector<8x128xf32>
    %cst_16 = arith.constant dense<0.000000e+00> : vector<8x128xf32>
    %31 = tpu.matmul %21, %10, %cst_16 {dimension_numbers = #tpu.dot_dimension_numbers<[1], [0], [0], [1], [0, 0, 1, 1], [], []>, precision = #tpu.contract_precision<fp32>} : vector<8x8xf32>, vector<8x128xf32>, vector<8x128xf32> -> vector<8x128xf32>
    %32 = arith.addf %30, %31 : vector<8x128xf32>
    %c0_17 = arith.constant 0 : index
    %c0_18 = arith.constant 0 : index
    %33 = vector.load %arg12[%c0_17, %c0_18] : memref<8x128xf32, #tpu.memory_space<vmem>>, vector<8x128xf32>
    tpu.vector_store %arg12[%c0_17, %c0_18], %32 {strides = array<i32>} : memref<8x128xf32, #tpu.memory_space<vmem>>, vector<8x128xf32>,
    %c0_19 = arith.constant 0 : index
    %c0_20 = arith.constant 0 : index
    %34 = vector.load %arg10[%c0_19, %c0_20] : memref<8x1xf32, #tpu.memory_space<vmem>>, vector<8x1xf32>
    tpu.vector_store %arg10[%c0_19, %c0_20], %16 {strides = array<i32>} : memref<8x1xf32, #tpu.memory_space<vmem>>, vector<8x1xf32>,
    %c0_i32_21 = arith.constant 0 : i32
    %35 = arith.cmpi eq, %arg2, %c0_i32_21 : i32
    %36 = arith.extui %35 : i1 to i32
    %c0_i32_22 = arith.constant 0 : i32
    %37 = arith.cmpi ne, %36, %c0_i32_22 : i32
    scf.if %37 {
      %c0_23 = arith.constant 0 : index
      %c0_24 = arith.constant 0 : index
      %38 = vector.load %arg11[%c0_23, %c0_24] : memref<8x1xf32, #tpu.memory_space<vmem>>, vector<8x1xf32>
      %39 = tpu.reciprocal %38 : vector<8x1xf32> -> vector<8x1xf32>
      %c0_25 = arith.constant 0 : index
      %c0_26 = arith.constant 0 : index
      %40 = vector.load %arg12[%c0_25, %c0_26] : memref<8x128xf32, #tpu.memory_space<vmem>>, vector<8x128xf32>
      %41 = vector.broadcast %39 : vector<8x1xf32> to vector<8x128xf32>
      %42 = arith.mulf %40, %41 : vector<8x128xf32>
      %c0_27 = arith.constant 0 : index
      %c0_28 = arith.constant 0 : index
      %c0_29 = arith.constant 0 : index
      %43 = vector.load %arg7[%c0_27, %c0_28, %c0_29] : memref<1x8x128xf32, #tpu.memory_space<vmem>>, vector<1x8x128xf32>
      %44 = vector.shape_cast %43 : vector<1x8x128xf32> to vector<8x128xf32>
      %45 = vector.shape_cast %42 : vector<8x128xf32> to vector<1x8x128xf32>
      tpu.vector_store %arg7[%c0_27, %c0_28, %c0_29], %45 {strides = array<i32>} : memref<1x8x128xf32, #tpu.memory_space<vmem>>, vector<1x8x128xf32>,
    } else {
    }
    return
  }
  func.func @transform_0(%arg0: i32, %arg1: i32, %arg2: i32) -> (i32, i32, i32) {
    %c0_i32 = arith.constant 0 : i32
    %c0_i32_0 = arith.constant 0 : i32
    return %arg0, %arg1, %c0_i32 : i32, i32, i32
  }
  func.func @transform_1(%arg0: i32, %arg1: i32, %arg2: i32) -> (i32, i32, i32) {
    %c0_i32 = arith.constant 0 : i32
    %0 = arith.cmpi eq, %arg1, %c0_i32 : i32
    %c0_i32_0 = arith.constant 0 : i32
    %1 = arith.select %0, %arg2, %c0_i32_0 : i32
    %c0_i32_1 = arith.constant 0 : i32
    %c0_i32_2 = arith.constant 0 : i32
    return %arg0, %1, %c0_i32_1 : i32, i32, i32
  }
  func.func @transform_2(%arg0: i32, %arg1: i32, %arg2: i32) -> (i32, i32) {
    %c0_i32 = arith.constant 0 : i32
    %c0_i32_0 = arith.constant 0 : i32
    %c0_i32_1 = arith.constant 0 : i32
    return %c0_i32, %c0_i32_0 : i32, i32
  }
  func.func @transform_3(%arg0: i32, %arg1: i32, %arg2: i32) -> (i32, i32) {
    %c0_i32 = arith.constant 0 : i32
    %c0_i32_0 = arith.constant 0 : i32
    %c0_i32_1 = arith.constant 0 : i32
    return %c0_i32, %c0_i32_0 : i32, i32
  }
  func.func @transform_4(%arg0: i32, %arg1: i32, %arg2: i32) -> (i32, i32, i32) {
    %c0_i32 = arith.constant 0 : i32
    %c0_i32_0 = arith.constant 0 : i32
    return %arg0, %arg1, %c0_i32 : i32, i32, i32
  }
}

</mosaic_0001>

<llo_original>
// kernel: tpu_custom_call.1
$region0: #{tpu_custom_call.1}
  #allocation0 [shape = 'u32[]', space=smem, size = 0x4, offset = 0x4, fixed_abs, tag = 'smem constant byte address 0x4 - core index']
  #allocation1 [shape = 'u32[144,128]{1,0:T(1,128)}', space=vmem, size = 0x12000, scoped, tag = 'internal scratch']
  #allocation2 [shape = 'f32[8,128]{1,0:T(8,128)}', space=vmem, size = 0x1000, scoped, tag = 'scratch operand']
  #allocation3 [shape = 'f32[1,8,256]{2,1,0:T(8,128)}', space=vmem, size = 0x2000, scoped, tag = 'scratch operand']
  #allocation4 [shape = 'f32[8,1]{1,0:T(8,128)}', space=vmem, size = 0x1000, scoped, tag = 'scratch operand']
  #allocation5 [shape = 'f32[8,1]{1,0:T(8,128)}', space=vmem, size = 0x1000, scoped, tag = 'scratch operand']
  #allocation6 [shape = 'f32[8,128]{1,0:T(8,128)}', space=vmem, size = 0x1000, scoped, tag = 'scratch operand']
  %s0 = inlined_call_operand.hbm [shape: f32[2,8,9], index: 0, kind: input, shape index: {}]
  %s1 = inlined_call_operand.hbm [shape: f32[2,8,9], index: 1, kind: input, shape index: {}]
  %s2 = inlined_call_operand.hbm [shape: f32[9,384], index: 2, kind: input, shape index: {}]
  %s3 = inlined_call_operand.vmem [shape: f32[1,384], index: 3, kind: input, shape index: {}]
  %s4 = inlined_call_operand.hbm [shape: f32[2,8,128], index: 4, kind: output, shape index: {}]
  %s5 = sld [smem:[#allocation0]]
  $region73: #{tpu_custom_call.1} parent=0
    _
  %s7 = ssub.s32 1, %s5
  %s8 = scalar_select 0, %s7, %s5
  $region1: #{tpu_custom_call.1} parent=0
    #allocation7 [shape = 'u8[8192]{0}', space=vmem, size = 0x2000, scoped, tag = 'input window, operand 0']
    #allocation8 [shape = 's32[2]{0}', space=sflag, size = 0x8, scoped, tag = 'scoped memory for tpu_custom_call.1']
    #allocation9 [shape = 's32[2]{0}', space=sflag, size = 0x8, scoped, tag = 'scoped memory for tpu_custom_call.1']
    #allocation10 [shape = 'u8[8192]{0}', space=vmem, size = 0x2000, scoped, tag = 'input window, operand 1']
    #allocation11 [shape = 's32[2]{0}', space=sflag, size = 0x8, scoped, tag = 'scoped memory for tpu_custom_call.1']
    #allocation12 [shape = 'u8[24576]{0}', space=vmem, size = 0x6000, scoped, tag = 'input window, operand 2, single buffered']
    #allocation13 [shape = 'u8[8192]{0}', space=vmem, size = 0x2000, scoped, tag = 'output window, operand 0']
    %9 = vsyncpa [#allocation8], 0
    %s10 = scalar_lea.sflag [#allocation8], 1
    %11 = vsyncpa %s10, 0
    %12 = vsyncpa [#allocation11], 0
    %s13 = scalar_lea.sflag [#allocation11], 1
    %14 = vsyncpa %s13, 0
    %15 = vsyncpa [#allocation9], 0
    %s16 = scalar_lea.sflag [#allocation9], 1
    %17 = vsyncpa %s16, 0
    loop: start=0, step=1, limit=4
    $region2: #{tpu_custom_call.1} parent=1 // loop_pre_header
      _
    $region3: #{tpu_custom_call.1} parent=1 // loop_header
      %s19 = sphi 0, %s23
      %p20 = scmp.ge.s32.totalorder %s19, 4
      %s26 = sphi 0, %s45
      %s27 = sphi 0, %s41
      %s28 = sphi 0, %s37
      %s29 = sphi 0, %s26
      %s30 = sphi 0, %s27
      %s31 = sphi 0, %s28
      %s32 = sphi 0, %s29
      %s33 = sphi 0, %s30
      %s34 = sphi 0, %s31
      %s50 = sphi 0, %s52
      %s53 = sphi 0, %s50
      %s54 = sphi 0, %s53
      %s70 = sphi 0, %s54
      %s82 = sphi 0, %s84
      %s85 = sphi 0, %s82
      %s86 = sphi 0, %s85
      %s102 = sphi 0, %s86
      %s106 = sphi 0, %s106
      %s108 = sphi 0, %s106
      %s109 = sphi 0, %s108
      %s123 = sphi 0, %s109
      %s127 = sphi 0, %s127
      %s129 = sphi 0, %s127
      %s130 = sphi 0, %s129
      %s144 = sphi 0, %s130
      %s152 = sphi 0, %s154
      %s155 = sphi 0, %s152
      %s156 = sphi 0, %s155
      %s172 = sphi 0, %s156
    $region4: #{tpu_custom_call.1} parent=1 // loop_header_branch
      %22 = sbr.rel (%p20) target = $region8
    $region5: #{tpu_custom_call.1} parent=1 // loop_body
      %s24 = ssub.s32 %s19, 1
      %s25 = ssub.s32 %s19, 2
      %s35 = sadd.s32 1, %s28
      %p36 = scmp.ge.s32.totalorder %s35, 1
      %s37 = scalar_select %p36, 0, %s35
      %s38 = sadd.s32 1, %s27
      %s39 = scalar_select %p36, %s38, %s27
      %p40 = scmp.ge.s32.totalorder %s39, 1
      %s41 = scalar_select %p40, 0, %s39
      %s42 = sadd.s32 1, %s26
      %s43 = scalar_select %p40, %s42, %s26
      %p44 = scmp.ge.s32.totalorder %s43, 2
      %s45 = scalar_select %p44, 0, %s43
      %s46 = ssub.s32 %s26, %s45
      %s47 = ssub.s32 %s27, %s41
      %s48 = sor.u32 %s46, %s47
      %p49 = scmp.eq.s32.totalorder %s48, 0
      %s51 = sadd.s32 %s50, 1
      %s52 = scalar_select %p49, %s50, %s51
      %p55 = pneg %p49
      %p56 = scmp.eq.s32.totalorder %s19, 1
      %p57 = por %p55, %p56
      %p58 = scmp.ne.s32.totalorder %s50, %s53
      %p59 = scmp.eq.s32.totalorder %s19, 0
      %p60 = por %p58, %p59
      %p61 = scmp.ne.s32.totalorder %s50, %s53
      %p62 = scmp.eq.s32.totalorder %s24, 1
      %p63 = por %p61, %p62
      %p64 = scmp.ne.s32.totalorder %s53, %s54
      %p65 = scmp.eq.s32.totalorder %s24, 0
      %p66 = por %p64, %p65
      %p67 = scmp.ne.s32.totalorder %s53, %s54
      %p68 = scmp.eq.s32.totalorder %s25, 1
      %p69 = por %p67, %p68
      %p71 = scmp.ne.s32.totalorder %s54, %s70
      %p72 = scmp.eq.s32.totalorder %s25, 0
      %p73 = por %p71, %p72
      %p74 = scmp.eq.s32.totalorder %s27, 0
      %s75 = scalar_select %p74, %s28, 0
      %p76 = scmp.eq.s32.totalorder %s41, 0
      %s77 = scalar_select %p76, %s37, 0
      %s78 = ssub.s32 %s26, %s45
      %s79 = ssub.s32 %s75, %s77
      %s80 = sor.u32 %s78, %s79
      %p81 = scmp.eq.s32.totalorder %s80, 0
      %s83 = sadd.s32 %s82, 1
      %s84 = scalar_select %p81, %s82, %s83
      %p87 = pneg %p81
      %p88 = scmp.eq.s32.totalorder %s19, 1
      %p89 = por %p87, %p88
      %p90 = scmp.ne.s32.totalorder %s82, %s85
      %p91 = scmp.eq.s32.totalorder %s19, 0
      %p92 = por %p90, %p91
      %p93 = scmp.ne.s32.totalorder %s82, %s85
      %p94 = scmp.eq.s32.totalorder %s24, 1
      %p95 = por %p93, %p94
      %p96 = scmp.ne.s32.totalorder %s85, %s86
      %p97 = scmp.eq.s32.totalorder %s24, 0
      %p98 = por %p96, %p97
      %p99 = scmp.ne.s32.totalorder %s85, %s86
      %p100 = scmp.eq.s32.totalorder %s25, 1
      %p101 = por %p99, %p100
      %p103 = scmp.ne.s32.totalorder %s86, %s102
      %p104 = scmp.eq.s32.totalorder %s25, 0
      %p105 = por %p103, %p104
      %s107 = sadd.s32 %s106, 1
      %p110 = scmp.eq.s32.totalorder %s19, 1
      %p111 = scmp.ne.s32.totalorder %s106, %s108
      %p112 = scmp.eq.s32.totalorder %s19, 0
      %p113 = por %p111, %p112
      %p114 = scmp.ne.s32.totalorder %s106, %s108
      %p115 = scmp.eq.s32.totalorder %s24, 1
      %p116 = por %p114, %p115
      %p117 = scmp.ne.s32.totalorder %s108, %s109
      %p118 = scmp.eq.s32.totalorder %s24, 0
      %p119 = por %p117, %p118
      %p120 = scmp.ne.s32.totalorder %s108, %s109
      %p121 = scmp.eq.s32.totalorder %s25, 1
      %p122 = por %p120, %p121
      %p124 = scmp.ne.s32.totalorder %s109, %s123
      %p125 = scmp.eq.s32.totalorder %s25, 0
      %p126 = por %p124, %p125
      %s128 = sadd.s32 %s127, 1
      %p131 = scmp.eq.s32.totalorder %s19, 1
      %p132 = scmp.ne.s32.totalorder %s127, %s129
      %p133 = scmp.eq.s32.totalorder %s19, 0
      %p134 = por %p132, %p133
      %p135 = scmp.ne.s32.totalorder %s127, %s129
      %p136 = scmp.eq.s32.totalorder %s24, 1
      %p137 = por %p135, %p136
      %p138 = scmp.ne.s32.totalorder %s129, %s130
      %p139 = scmp.eq.s32.totalorder %s24, 0
      %p140 = por %p138, %p139
      %p141 = scmp.ne.s32.totalorder %s129, %s130
      %p142 = scmp.eq.s32.totalorder %s25, 1
      %p143 = por %p141, %p142
      %p145 = scmp.ne.s32.totalorder %s130, %s144
      %p146 = scmp.eq.s32.totalorder %s25, 0
      %p147 = por %p145, %p146
      %s148 = ssub.s32 %s26, %s45
      %s149 = ssub.s32 %s27, %s41
      %s150 = sor.u32 %s148, %s149
      %p151 = scmp.eq.s32.totalorder %s150, 0
      %s153 = sadd.s32 %s152, 1
      %s154 = scalar_select %p151, %s152, %s153
      %p157 = pneg %p151
      %p158 = scmp.eq.s32.totalorder %s19, 1
      %p159 = por %p157, %p158
      %p160 = scmp.ne.s32.totalorder %s152, %s155
      %p161 = scmp.eq.s32.totalorder %s19, 0
      %p162 = por %p160, %p161
      %p163 = scmp.ne.s32.totalorder %s152, %s155
      %p164 = scmp.eq.s32.totalorder %s24, 1
      %p165 = por %p163, %p164
      %p166 = scmp.ne.s32.totalorder %s155, %s156
      %p167 = scmp.eq.s32.totalorder %s24, 0
      %p168 = por %p166, %p167
      %p169 = scmp.ne.s32.totalorder %s155, %s156
      %p170 = scmp.eq.s32.totalorder %s25, 1
      %p171 = por %p169, %p170
      %p173 = scmp.ne.s32.totalorder %s156, %s172
      %p174 = scmp.eq.s32.totalorder %s25, 0
      %p175 = por %p173, %p174
      %p176 = scmp.le.s32.totalorder 1, %s19
      %p177 = scmp.lt.s32.totalorder %s19, 3
      %p178 = pnand %p176, %p177
      %p179 = pneg %p178
      // Predicated region
      $region9: #{tpu_custom_call.1} parent=5 // pred_check
        _
      $region10: #{tpu_custom_call.1} parent=5 // pred_check_branch
        %181 = sbr.rel (%p178) target = $region12
      $region11: #{tpu_custom_call.1} parent=5 // pred_region
        %s182 = ssub.s32 %s19, 1
        // Predicated region
        $region13: #{tpu_custom_call.1} parent=11 // pred_check
          %p183 = pneg %p119
        $region14: #{tpu_custom_call.1} parent=11 // pred_check_branch
          %185 = sbr.rel (%p183) target = $region16
        $region15: #{tpu_custom_call.1} parent=11 // pred_region
          %s187 = ssub.s32 768, 768
          %188 = vsyncadd [#allocation11], %s187
          %s189 = sshll.u32 [#allocation12], 4
          %s190 = int_to_ptr.vmem [resolvable:$true] %s189
          %195 = dma.hbm_to_vmem [thread:$0]  %s2, 768, %s190, [#allocation11], 384, 384, 24
        $region16: #{tpu_custom_call.1} parent=11 // pred_fallthru
          _
        // Predicated region
        $region17: #{tpu_custom_call.1} parent=11 // pred_check
          %p196 = pneg %p140
        $region18: #{tpu_custom_call.1} parent=11 // pred_check_branch
          %198 = sbr.rel (%p196) target = $region20
        $region19: #{tpu_custom_call.1} parent=11 // pred_region
          _
        $region20: #{tpu_custom_call.1} parent=11 // pred_fallthru
          _
      $region12: #{tpu_custom_call.1} parent=5 // pred_fallthru
        _
      %p199 = scmp.lt.s32.totalorder %s19, 2
      // Predicated region
      $region21: #{tpu_custom_call.1} parent=5 // pred_check
        %p200 = pneg %p199
      $region22: #{tpu_custom_call.1} parent=5 // pred_check_branch
        %202 = sbr.rel (%p200) target = $region24
      $region23: #{tpu_custom_call.1} parent=5 // pred_region
        // Predicated region
        $region25: #{tpu_custom_call.1} parent=23 // pred_check
          %p203 = pneg %p60
        $region26: #{tpu_custom_call.1} parent=23 // pred_check_branch
          %205 = sbr.rel (%p203) target = $region28
        $region27: #{tpu_custom_call.1} parent=23 // pred_region
          %s206 = sand.u32 %s50, 1
          %s207 = scalar_lea.sflag [#allocation8], %s206
          %s208 = sand.u32 %s50, 1
          %s209 = smul.addr %s208, 8
          %s210 = scalar_lea.vmem [#allocation7], %s209
          %s212 = ssub.s32 128, 128
          %213 = vsyncadd %s207, %s212
          %s214 = sadd.s32 %s27, %s26
          %s215 = smul.addr %s214, 128
          %s216 = scalar_lea.hbm %s0, %s215
          %s218 = sshll.u32 %s210, 4
          %s219 = int_to_ptr.vmem [resolvable:$true] %s218
          %221 = dma.hbm_to_vmem [thread:$0]  %s216, 128, %s219, %s207
        $region28: #{tpu_custom_call.1} parent=23 // pred_fallthru
          _
        // Predicated region
        $region29: #{tpu_custom_call.1} parent=23 // pred_check
          %p222 = pneg %p92
        $region30: #{tpu_custom_call.1} parent=23 // pred_check_branch
          %224 = sbr.rel (%p222) target = $region32
        $region31: #{tpu_custom_call.1} parent=23 // pred_region
          %s225 = sand.u32 %s19, 1
          %s226 = scalar_lea.sflag [#allocation11], %s225
          %s227 = sand.u32 %s82, 1
          %s228 = smul.addr %s227, 8
          %s229 = scalar_lea.vmem [#allocation10], %s228
          %p230 = scmp.eq.s32.totalorder %s27, 0
          %s231 = scalar_select %p230, %s28, 0
          %s233 = ssub.s32 128, 128
          %234 = vsyncadd %s226, %s233
          %s235 = sadd.s32 %s231, %s26
          %s236 = smul.addr %s235, 128
          %s237 = scalar_lea.hbm %s1, %s236
          %s239 = sshll.u32 %s229, 4
          %s240 = int_to_ptr.vmem [resolvable:$true] %s239
          %242 = dma.hbm_to_vmem [thread:$0]  %s237, 128, %s240, %s226
        $region32: #{tpu_custom_call.1} parent=23 // pred_fallthru
          _
      $region24: #{tpu_custom_call.1} parent=5 // pred_fallthru
        _
      %p243 = scmp.le.s32.totalorder 1, %s19
      %p244 = scmp.lt.s32.totalorder %s19, 3
      %p245 = pnand %p243, %p244
      %p246 = pneg %p245
      // Predicated region
      $region33: #{tpu_custom_call.1} parent=5 // pred_check
        _
      $region34: #{tpu_custom_call.1} parent=5 // pred_check_branch
        %248 = sbr.rel (%p245) target = $region36
      $region35: #{tpu_custom_call.1} parent=5 // pred_region
        %s249 = ssub.s32 %s19, 1
        %s250 = sand.u32 %s53, 1
        %s251 = scalar_lea.sflag [#allocation8], %s250
        %s252 = sand.u32 %s53, 1
        %s253 = smul.addr %s252, 8
        %s254 = scalar_lea.vmem [#allocation7], %s253
        // Predicated region
        $region37: #{tpu_custom_call.1} parent=35 // pred_check
          %p255 = pneg %p66
        $region38: #{tpu_custom_call.1} parent=35 // pred_check_branch
          %257 = sbr.rel (%p255) target = $region40
        $region39: #{tpu_custom_call.1} parent=35 // pred_region
          %258 = dma.done %s251, 128
        $region40: #{tpu_custom_call.1} parent=35 // pred_fallthru
          _
        %s259 = sand.u32 %s24, 1
        %s260 = scalar_lea.sflag [#allocation11], %s259
        %s261 = sand.u32 %s85, 1
        %s262 = smul.addr %s261, 8
        %s263 = scalar_lea.vmem [#allocation10], %s262
        // Predicated region
        $region41: #{tpu_custom_call.1} parent=35 // pred_check
          %p264 = pneg %p98
        $region42: #{tpu_custom_call.1} parent=35 // pred_check_branch
          %266 = sbr.rel (%p264) target = $region44
        $region43: #{tpu_custom_call.1} parent=35 // pred_region
          %267 = dma.done %s260, 128
        $region44: #{tpu_custom_call.1} parent=35 // pred_fallthru
          _
        // Predicated region
        $region45: #{tpu_custom_call.1} parent=35 // pred_check
          %p268 = pneg %p119
        $region46: #{tpu_custom_call.1} parent=35 // pred_check_branch
          %270 = sbr.rel (%p268) target = $region48
        $region47: #{tpu_custom_call.1} parent=35 // pred_region
          %271 = dma.done [#allocation11], 768
        $region48: #{tpu_custom_call.1} parent=35 // pred_fallthru
          _
        %s272 = sand.u32 %s53, 1
        %s273 = scalar_lea.sflag [#allocation8], %s272
        %s274 = sand.u32 %s53, 1
        %s275 = smul.addr %s274, 8
        %s276 = scalar_lea.vmem [#allocation7], %s275
        %p277 = pneg %p66
        %p278 = pneg %p63
        %s279 = sand.u32 %s24, 1
        %s280 = scalar_lea.sflag [#allocation11], %s279
        %s281 = sand.u32 %s85, 1
        %s282 = smul.addr %s281, 8
        %s283 = scalar_lea.vmem [#allocation10], %s282
        %p284 = pneg %p98
        %p285 = pneg %p95
        %p286 = pneg %p119
        %p287 = pneg %p116
        %p288 = pneg %p140
        %p289 = pneg %p137
        %p290 = pneg %p168
        %p291 = pneg %p165
        %s292 = sand.u32 %s155, 1
        %s293 = scalar_lea.sflag [#allocation9], %s292
        %s294 = sand.u32 %s155, 1
        %s295 = smul.addr %s294, 8
        %s296 = scalar_lea.vmem [#allocation13], %s295
        %p297 = scmp.eq.s32.totalorder %s30, 0
        %s298 = scalar_select %p297, %s31, 0
        %p299 = scmp.eq.s32.totalorder %s31, 0
        // Predicated region
        $region49: #{tpu_custom_call.1} parent=35 // pred_check
          %p300 = pneg %p299
        $region50: #{tpu_custom_call.1} parent=35 // pred_check_branch
          %302 = sbr.rel (%p300) target = $region52
        $region51: #{tpu_custom_call.1} parent=35 // pred_region
          %v303 = vld [vmem:[%s254] sm:$0xff]
          %v304 = vld [vmem:[#allocation12] sm:$0xff]
          %v305 = vld [vmem:[#allocation12 + $0x18] sm:$0x1]
          %v306 = vld [vmem:[%s3] sm:$0x1]
          %v308 = vlaneseq
          %v309 = vshrl.u32 %v308, 7
          %v310 = vsub.s32 0, %v309
          %v311 = vrot.slane %v306, %v310
          %vm313 = vcmask 72704
          %v315 = vsel %vm313, %v303, 0
          %vm317 = vcmask 1040384
          %v319 = vsel %vm317, %v305, 0
          %321 = vmatprep.subr.mxu0 0.0
          %322 = vmatpush1.msra.mxu0 0.0
          %323 = vmatprep.subr.mxu0 0.0
          %324 = vmatpush1.msra.mxu0 0.0
          %325 = vmatprep.subr.mxu0 0.0
          %326 = vmatpush1.msra.mxu0 0.0
          %327 = vmatprep.subr.mxu0 0.0
          %328 = vmatpush1.msra.mxu0 0.0
          %329 = vmatprep.subr.mxu0 0.0
          %330 = vmatpush1.msra.mxu0 0.0
          %331 = vmatprep.subr.mxu0 0.0
          %332 = vmatpush1.msra.mxu0 0.0
          %333 = vmatprep.subr.mxu0 0.0
          %334 = vmatpush1.msra.mxu0 0.0
          %335 = vmatprep.subr.mxu0 0.0
          %336 = vmatpush1.msra.mxu0 0.0
          %337 = vmatprep.subr.mxu0 0.0
          %338 = vmatpush1.msra.mxu0 0.0
          %339 = vmatprep.subr.mxu0 0.0
          %340 = vmatpush1.msra.mxu0 0.0
          %341 = vmatprep.subr.mxu0 0.0
          %342 = vmatpush1.msra.mxu0 0.0
          %343 = vmatprep.subr.mxu0 0.0
          %344 = vmatpush1.msra.mxu0 0.0
          %345 = vmatprep.subr.mxu0 0.0
          %346 = vmatpush1.msra.mxu0 0.0
          %347 = vmatprep.subr.mxu0 0.0
          %348 = vmatpush1.msra.mxu0 0.0
          %349 = vmatprep.subr.mxu0 0.0
          %v350 = vand.u32 %v319, 4294901760
          %351 = vmatpush1.msra.mxu0 %v350
          %352 = vmatprep.subr.mxu0 0.0
          %v353 = vand.u32 %v304, 4294901760
          %354 = vmatpush1.msra.mxu0 %v353
          %355 = vmatprep.subr.mxu0 0.0
          %356 = vmatpush2.msra.mxu0 0.0
          %357 = vmatprep.subr.mxu0 0.0
          %358 = vmatpush2.msra.mxu0 0.0
          %359 = vmatprep.subr.mxu0 0.0
          %360 = vmatpush2.msra.mxu0 0.0
          %361 = vmatprep.subr.mxu0 0.0
          %362 = vmatpush2.msra.mxu0 0.0
          %363 = vmatprep.subr.mxu0 0.0
          %364 = vmatpush2.msra.mxu0 0.0
          %365 = vmatprep.subr.mxu0 0.0
          %366 = vmatpush2.msra.mxu0 0.0
          %367 = vmatprep.subr.mxu0 0.0
          %368 = vmatpush2.msra.mxu0 0.0
          %369 = vmatprep.subr.mxu0 0.0
          %370 = vmatpush2.msra.mxu0 0.0
          %371 = vmatprep.subr.mxu0 0.0
          %372 = vmatpush2.msra.mxu0 0.0
          %373 = vmatprep.subr.mxu0 0.0
          %374 = vmatpush2.msra.mxu0 0.0
          %375 = vmatprep.subr.mxu0 0.0
          %376 = vmatpush2.msra.mxu0 0.0
          %377 = vmatprep.subr.mxu0 0.0
          %378 = vmatpush2.msra.mxu0 0.0
          %379 = vmatprep.subr.mxu0 0.0
          %380 = vmatpush2.msra.mxu0 0.0
          %381 = vmatprep.subr.mxu0 0.0
          %382 = vmatpush2.msra.mxu0 0.0
          %383 = vmatprep.subr.mxu0 0.0
          %384 = vmatpush2.msra.mxu0 0.0
          %385 = vmatprep.subr.mxu0 0.0
          %386 = vmatpush2.msra.mxu0 0.0
          %387 = vmatprep.mubr.f32.mxu0 0.0
          %v388 = vand.u32 %v315, 4294901760
          %v389 = vsub.f32 %v315, %v388
          %v390 = vand.u32 %v389, 4294901760
          %v391 = vsub.f32 %v389, %v390
          %v392 = vand.u32 %v391, 4294901760
          %393 = vmatmul.mubr.f32.gmra.mxu0 %v392
          %v394 = vpop.f32.mrf.mxu0
          %v395 = vadd.f32 %v311, %v394
          %v396 = vpop.f32.mrf.mxu0
          %397 = vdwg.mxu0
          %398 = vmatprep.subr.mxu0 0.0
          %399 = vmatpush1.msra.mxu0 0.0
          %400 = vmatprep.subr.mxu0 0.0
          %401 = vmatpush1.msra.mxu0 0.0
          %402 = vmatprep.subr.mxu0 0.0
          %403 = vmatpush1.msra.mxu0 0.0
          %404 = vmatprep.subr.mxu0 0.0
          %405 = vmatpush1.msra.mxu0 0.0
          %406 = vmatprep.subr.mxu0 0.0
          %407 = vmatpush1.msra.mxu0 0.0
          %408 = vmatprep.subr.mxu0 0.0
          %409 = vmatpush1.msra.mxu0 0.0
          %410 = vmatprep.subr.mxu0 0.0
          %411 = vmatpush1.msra.mxu0 0.0
          %412 = vmatprep.subr.mxu0 0.0
          %413 = vmatpush1.msra.mxu0 0.0
          %414 = vmatprep.subr.mxu0 0.0
          %415 = vmatpush1.msra.mxu0 0.0
          %416 = vmatprep.subr.mxu0 0.0
          %417 = vmatpush1.msra.mxu0 0.0
          %418 = vmatprep.subr.mxu0 0.0
          %419 = vmatpush1.msra.mxu0 0.0
          %420 = vmatprep.subr.mxu0 0.0
          %421 = vmatpush1.msra.mxu0 0.0
          %422 = vmatprep.subr.mxu0 0.0
          %423 = vmatpush1.msra.mxu0 0.0
          %424 = vmatprep.subr.mxu0 0.0
          %425 = vmatpush1.msra.mxu0 0.0
          %426 = vmatprep.subr.mxu0 0.0
          %v427 = vand.u32 %v319, 4294901760
          %v428 = vsub.f32 %v319, %v427
          %v429 = vand.u32 %v428, 4294901760
          %v430 = vsub.f32 %v428, %v429
          %v431 = vand.u32 %v430, 4294901760
          %432 = vmatpush1.msra.mxu0 %v431
          %433 = vmatprep.subr.mxu0 0.0
          %v434 = vand.u32 %v304, 4294901760
          %v435 = vsub.f32 %v304, %v434
          %v436 = vand.u32 %v435, 4294901760
          %v437 = vsub.f32 %v435, %v436
          %v438 = vand.u32 %v437, 4294901760
          %439 = vmatpush1.msra.mxu0 %v438
          %440 = vmatprep.subr.mxu0 0.0
          %441 = vmatpush2.msra.mxu0 0.0
          %442 = vmatprep.subr.mxu0 0.0
          %443 = vmatpush2.msra.mxu0 0.0
          %444 = vmatprep.subr.mxu0 0.0
          %445 = vmatpush2.msra.mxu0 0.0
          %446 = vmatprep.subr.mxu0 0.0
          %447 = vmatpush2.msra.mxu0 0.0
          %448 = vmatprep.subr.mxu0 0.0
          %449 = vmatpush2.msra.mxu0 0.0
          %450 = vmatprep.subr.mxu0 0.0
          %451 = vmatpush2.msra.mxu0 0.0
          %452 = vmatprep.subr.mxu0 0.0
          %453 = vmatpush2.msra.mxu0 0.0
          %454 = vmatprep.subr.mxu0 0.0
          %455 = vmatpush2.msra.mxu0 0.0
          %456 = vmatprep.subr.mxu0 0.0
          %457 = vmatpush2.msra.mxu0 0.0
          %458 = vmatprep.subr.mxu0 0.0
          %459 = vmatpush2.msra.mxu0 0.0
          %460 = vmatprep.subr.mxu0 0.0
          %461 = vmatpush2.msra.mxu0 0.0
          %462 = vmatprep.subr.mxu0 0.0
          %463 = vmatpush2.msra.mxu0 0.0
          %464 = vmatprep.subr.mxu0 0.0
          %465 = vmatpush2.msra.mxu0 0.0
          %466 = vmatprep.subr.mxu0 0.0
          %467 = vmatpush2.msra.mxu0 0.0
          %468 = vmatprep.subr.mxu0 0.0
          %469 = vmatpush2.msra.mxu0 0.0
          %470 = vmatprep.subr.mxu0 0.0
          %471 = vmatpush2.msra.mxu0 0.0
          %472 = vmatprep.mubr.f32.mxu0 0.0
          %v473 = vand.u32 %v315, 4294901760
          %474 = vmatmul.mubr.f32.gmra.mxu0 %v473
          %v475 = vpop.f32.mrf.mxu0
          %v476 = vadd.f32 %v395, %v475
          %v477 = vpop.f32.mrf.mxu0
          %478 = vdwg.mxu0
          %479 = vmatprep.subr.mxu0 0.0
          %480 = vmatpush1.msra.mxu0 0.0
          %481 = vmatprep.subr.mxu0 0.0
          %482 = vmatpush1.msra.mxu0 0.0
          %483 = vmatprep.subr.mxu0 0.0
          %484 = vmatpush1.msra.mxu0 0.0
          %485 = vmatprep.subr.mxu0 0.0
          %486 = vmatpush1.msra.mxu0 0.0
          %487 = vmatprep.subr.mxu0 0.0
          %488 = vmatpush1.msra.mxu0 0.0
          %489 = vmatprep.subr.mxu0 0.0
          %490 = vmatpush1.msra.mxu0 0.0
          %491 = vmatprep.subr.mxu0 0.0
          %492 = vmatpush1.msra.mxu0 0.0
          %493 = vmatprep.subr.mxu0 0.0
          %494 = vmatpush1.msra.mxu0 0.0
          %495 = vmatprep.subr.mxu0 0.0
          %496 = vmatpush1.msra.mxu0 0.0
          %497 = vmatprep.subr.mxu0 0.0
          %498 = vmatpush1.msra.mxu0 0.0
          %499 = vmatprep.subr.mxu0 0.0
          %500 = vmatpush1.msra.mxu0 0.0
          %501 = vmatprep.subr.mxu0 0.0
          %502 = vmatpush1.msra.mxu0 0.0
          %503 = vmatprep.subr.mxu0 0.0
          %504 = vmatpush1.msra.mxu0 0.0
          %505 = vmatprep.subr.mxu0 0.0
          %506 = vmatpush1.msra.mxu0 0.0
          %507 = vmatprep.subr.mxu0 0.0
          %v508 = vand.u32 %v319, 4294901760
          %v509 = vsub.f32 %v319, %v508
          %510 = vmatpush1.msra.mxu0 %v509
          %511 = vmatprep.subr.mxu0 0.0
          %v512 = vand.u32 %v304, 4294901760
          %v513 = vsub.f32 %v304, %v512
          %514 = vmatpush1.msra.mxu0 %v513
          %515 = vmatprep.subr.mxu0 0.0
          %516 = vmatpush2.msra.mxu0 0.0
          %517 = vmatprep.subr.mxu0 0.0
          %518 = vmatpush2.msra.mxu0 0.0
          %519 = vmatprep.subr.mxu0 0.0
          %520 = vmatpush2.msra.mxu0 0.0
          %521 = vmatprep.subr.mxu0 0.0
          %522 = vmatpush2.msra.mxu0 0.0
          %523 = vmatprep.subr.mxu0 0.0
          %524 = vmatpush2.msra.mxu0 0.0
          %525 = vmatprep.subr.mxu0 0.0
          %526 = vmatpush2.msra.mxu0 0.0
          %527 = vmatprep.subr.mxu0 0.0
          %528 = vmatpush2.msra.mxu0 0.0
          %529 = vmatprep.subr.mxu0 0.0
          %530 = vmatpush2.msra.mxu0 0.0
          %531 = vmatprep.subr.mxu0 0.0
          %532 = vmatpush2.msra.mxu0 0.0
          %533 = vmatprep.subr.mxu0 0.0
          %534 = vmatpush2.msra.mxu0 0.0
          %535 = vmatprep.subr.mxu0 0.0
          %536 = vmatpush2.msra.mxu0 0.0
          %537 = vmatprep.subr.mxu0 0.0
          %538 = vmatpush2.msra.mxu0 0.0
          %539 = vmatprep.subr.mxu0 0.0
          %540 = vmatpush2.msra.mxu0 0.0
          %541 = vmatprep.subr.mxu0 0.0
          %542 = vmatpush2.msra.mxu0 0.0
          %543 = vmatprep.subr.mxu0 0.0
          %544 = vmatpush2.msra.mxu0 0.0
          %545 = vmatprep.subr.mxu0 0.0
          %546 = vmatpush2.msra.mxu0 0.0
          %547 = vmatprep.mubr.f32.mxu0 0.0
          %v548 = vand.u32 %v315, 4294901760
          %v549 = vsub.f32 %v315, %v548
          %550 = vmatmul.mubr.f32.gmra.mxu0 %v549
          %v551 = vpop.f32.mrf.mxu0
          %v552 = vadd.f32 %v476, %v551
          %v553 = vpop.f32.mrf.mxu0
          %554 = vdwg.mxu0
          %555 = vmatprep.subr.mxu0 0.0
          %556 = vmatpush1.msra.mxu0 0.0
          %557 = vmatprep.subr.mxu0 0.0
          %558 = vmatpush1.msra.mxu0 0.0
          %559 = vmatprep.subr.mxu0 0.0
          %560 = vmatpush1.msra.mxu0 0.0
          %561 = vmatprep.subr.mxu0 0.0
          %562 = vmatpush1.msra.mxu0 0.0
          %563 = vmatprep.subr.mxu0 0.0
          %564 = vmatpush1.msra.mxu0 0.0
          %565 = vmatprep.subr.mxu0 0.0
          %566 = vmatpush1.msra.mxu0 0.0
          %567 = vmatprep.subr.mxu0 0.0
          %568 = vmatpush1.msra.mxu0 0.0
          %569 = vmatprep.subr.mxu0 0.0
          %570 = vmatpush1.msra.mxu0 0.0
          %571 = vmatprep.subr.mxu0 0.0
          %572 = vmatpush1.msra.mxu0 0.0
          %573 = vmatprep.subr.mxu0 0.0
          %574 = vmatpush1.msra.mxu0 0.0
          %575 = vmatprep.subr.mxu0 0.0
          %576 = vmatpush1.msra.mxu0 0.0
          %577 = vmatprep.subr.mxu0 0.0
          %578 = vmatpush1.msra.mxu0 0.0
          %579 = vmatprep.subr.mxu0 0.0
          %580 = vmatpush1.msra.mxu0 0.0
          %581 = vmatprep.subr.mxu0 0.0
          %582 = vmatpush1.msra.mxu0 0.0
          %583 = vmatprep.subr.mxu0 0.0
          %v584 = vand.u32 %v319, 4294901760
          %585 = vmatpush1.msra.mxu0 %v584
          %586 = vmatprep.subr.mxu0 0.0
          %v587 = vand.u32 %v304, 4294901760
          %588 = vmatpush1.msra.mxu0 %v587
          %589 = vmatprep.subr.mxu0 0.0
          %590 = vmatpush2.msra.mxu0 0.0
          %591 = vmatprep.subr.mxu0 0.0
          %592 = vmatpush2.msra.mxu0 0.0
          %593 = vmatprep.subr.mxu0 0.0
          %594 = vmatpush2.msra.mxu0 0.0
          %595 = vmatprep.subr.mxu0 0.0
          %596 = vmatpush2.msra.mxu0 0.0
          %597 = vmatprep.subr.mxu0 0.0
          %598 = vmatpush2.msra.mxu0 0.0
          %599 = vmatprep.subr.mxu0 0.0
          %600 = vmatpush2.msra.mxu0 0.0
          %601 = vmatprep.subr.mxu0 0.0
          %602 = vmatpush2.msra.mxu0 0.0
          %603 = vmatprep.subr.mxu0 0.0
          %604 = vmatpush2.msra.mxu0 0.0
          %605 = vmatprep.subr.mxu0 0.0
          %606 = vmatpush2.msra.mxu0 0.0
          %607 = vmatprep.subr.mxu0 0.0
          %608 = vmatpush2.msra.mxu0 0.0
          %609 = vmatprep.subr.mxu0 0.0
          %610 = vmatpush2.msra.mxu0 0.0
          %611 = vmatprep.subr.mxu0 0.0
          %612 = vmatpush2.msra.mxu0 0.0
          %613 = vmatprep.subr.mxu0 0.0
          %614 = vmatpush2.msra.mxu0 0.0
          %615 = vmatprep.subr.mxu0 0.0
          %616 = vmatpush2.msra.mxu0 0.0
          %617 = vmatprep.subr.mxu0 0.0
          %618 = vmatpush2.msra.mxu0 0.0
          %619 = vmatprep.subr.mxu0 0.0
          %620 = vmatpush2.msra.mxu0 0.0
          %621 = vmatprep.mubr.f32.mxu0 0.0
          %v622 = vand.u32 %v315, 4294901760
          %v623 = vsub.f32 %v315, %v622
          %v624 = vand.u32 %v623, 4294901760
          %625 = vmatmul.mubr.f32.gmra.mxu0 %v624
          %v626 = vpop.f32.mrf.mxu0
          %v627 = vadd.f32 %v552, %v626
          %v628 = vpop.f32.mrf.mxu0
          %629 = vdwg.mxu0
          %630 = vmatprep.subr.mxu0 0.0
          %631 = vmatpush1.msra.mxu0 0.0
          %632 = vmatprep.subr.mxu0 0.0
          %633 = vmatpush1.msra.mxu0 0.0
          %634 = vmatprep.subr.mxu0 0.0
          %635 = vmatpush1.msra.mxu0 0.0
          %636 = vmatprep.subr.mxu0 0.0
          %637 = vmatpush1.msra.mxu0 0.0
          %638 = vmatprep.subr.mxu0 0.0
          %639 = vmatpush1.msra.mxu0 0.0
          %640 = vmatprep.subr.mxu0 0.0
          %641 = vmatpush1.msra.mxu0 0.0
          %642 = vmatprep.subr.mxu0 0.0
          %643 = vmatpush1.msra.mxu0 0.0
          %644 = vmatprep.subr.mxu0 0.0
          %645 = vmatpush1.msra.mxu0 0.0
          %646 = vmatprep.subr.mxu0 0.0
          %647 = vmatpush1.msra.mxu0 0.0
          %648 = vmatprep.subr.mxu0 0.0
          %649 = vmatpush1.msra.mxu0 0.0
          %650 = vmatprep.subr.mxu0 0.0
          %651 = vmatpush1.msra.mxu0 0.0
          %652 = vmatprep.subr.mxu0 0.0
          %653 = vmatpush1.msra.mxu0 0.0
          %654 = vmatprep.subr.mxu0 0.0
          %655 = vmatpush1.msra.mxu0 0.0
          %656 = vmatprep.subr.mxu0 0.0
          %657 = vmatpush1.msra.mxu0 0.0
          %658 = vmatprep.subr.mxu0 0.0
          %v659 = vand.u32 %v319, 4294901760
          %v660 = vsub.f32 %v319, %v659
          %v661 = vand.u32 %v660, 4294901760
          %662 = vmatpush1.msra.mxu0 %v661
          %663 = vmatprep.subr.mxu0 0.0
          %v664 = vand.u32 %v304, 4294901760
          %v665 = vsub.f32 %v304, %v664
          %v666 = vand.u32 %v665, 4294901760
          %667 = vmatpush1.msra.mxu0 %v666
          %668 = vmatprep.subr.mxu0 0.0
          %669 = vmatpush2.msra.mxu0 0.0
          %670 = vmatprep.subr.mxu0 0.0
          %671 = vmatpush2.msra.mxu0 0.0
          %672 = vmatprep.subr.mxu0 0.0
          %673 = vmatpush2.msra.mxu0 0.0
          %674 = vmatprep.subr.mxu0 0.0
          %675 = vmatpush2.msra.mxu0 0.0
          %676 = vmatprep.subr.mxu0 0.0
          %677 = vmatpush2.msra.mxu0 0.0
          %678 = vmatprep.subr.mxu0 0.0
          %679 = vmatpush2.msra.mxu0 0.0
          %680 = vmatprep.subr.mxu0 0.0
          %681 = vmatpush2.msra.mxu0 0.0
          %682 = vmatprep.subr.mxu0 0.0
          %683 = vmatpush2.msra.mxu0 0.0
          %684 = vmatprep.subr.mxu0 0.0
          %685 = vmatpush2.msra.mxu0 0.0
          %686 = vmatprep.subr.mxu0 0.0
          %687 = vmatpush2.msra.mxu0 0.0
          %688 = vmatprep.subr.mxu0 0.0
          %689 = vmatpush2.msra.mxu0 0.0
          %690 = vmatprep.subr.mxu0 0.0
          %691 = vmatpush2.msra.mxu0 0.0
          %692 = vmatprep.subr.mxu0 0.0
          %693 = vmatpush2.msra.mxu0 0.0
          %694 = vmatprep.subr.mxu0 0.0
          %695 = vmatpush2.msra.mxu0 0.0
          %696 = vmatprep.subr.mxu0 0.0
          %697 = vmatpush2.msra.mxu0 0.0
          %698 = vmatprep.subr.mxu0 0.0
          %699 = vmatpush2.msra.mxu0 0.0
          %700 = vmatprep.mubr.f32.mxu0 0.0
          %v701 = vand.u32 %v315, 4294901760
          %702 = vmatmul.mubr.f32.gmra.mxu0 %v701
          %v703 = vpop.f32.mrf.mxu0
          %v704 = vadd.f32 %v627, %v703
          %v705 = vpop.f32.mrf.mxu0
          %706 = vdwg.mxu0
          %707 = vmatprep.subr.mxu0 0.0
          %708 = vmatpush1.msra.mxu0 0.0
          %709 = vmatprep.subr.mxu0 0.0
          %710 = vmatpush1.msra.mxu0 0.0
          %711 = vmatprep.subr.mxu0 0.0
          %712 = vmatpush1.msra.mxu0 0.0
          %713 = vmatprep.subr.mxu0 0.0
          %714 = vmatpush1.msra.mxu0 0.0
          %715 = vmatprep.subr.mxu0 0.0
          %716 = vmatpush1.msra.mxu0 0.0
          %717 = vmatprep.subr.mxu0 0.0
          %718 = vmatpush1.msra.mxu0 0.0
          %719 = vmatprep.subr.mxu0 0.0
          %720 = vmatpush1.msra.mxu0 0.0
          %721 = vmatprep.subr.mxu0 0.0
          %722 = vmatpush1.msra.mxu0 0.0
          %723 = vmatprep.subr.mxu0 0.0
          %724 = vmatpush1.msra.mxu0 0.0
          %725 = vmatprep.subr.mxu0 0.0
          %726 = vmatpush1.msra.mxu0 0.0
          %727 = vmatprep.subr.mxu0 0.0
          %728 = vmatpush1.msra.mxu0 0.0
          %729 = vmatprep.subr.mxu0 0.0
          %730 = vmatpush1.msra.mxu0 0.0
          %731 = vmatprep.subr.mxu0 0.0
          %732 = vmatpush1.msra.mxu0 0.0
          %733 = vmatprep.subr.mxu0 0.0
          %734 = vmatpush1.msra.mxu0 0.0
          %735 = vmatprep.subr.mxu0 0.0
          %v736 = vand.u32 %v319, 4294901760
          %737 = vmatpush1.msra.mxu0 %v736
          %738 = vmatprep.subr.mxu0 0.0
          %v739 = vand.u32 %v304, 4294901760
          %740 = vmatpush1.msra.mxu0 %v739
          %741 = vmatprep.subr.mxu0 0.0
          %742 = vmatpush2.msra.mxu0 0.0
          %743 = vmatprep.subr.mxu0 0.0
          %744 = vmatpush2.msra.mxu0 0.0
          %745 = vmatprep.subr.mxu0 0.0
          %746 = vmatpush2.msra.mxu0 0.0
          %747 = vmatprep.subr.mxu0 0.0
          %748 = vmatpush2.msra.mxu0 0.0
          %749 = vmatprep.subr.mxu0 0.0
          %750 = vmatpush2.msra.mxu0 0.0
          %751 = vmatprep.subr.mxu0 0.0
          %752 = vmatpush2.msra.mxu0 0.0
          %753 = vmatprep.subr.mxu0 0.0
          %754 = vmatpush2.msra.mxu0 0.0
          %755 = vmatprep.subr.mxu0 0.0
          %756 = vmatpush2.msra.mxu0 0.0
          %757 = vmatprep.subr.mxu0 0.0
          %758 = vmatpush2.msra.mxu0 0.0
          %759 = vmatprep.subr.mxu0 0.0
          %760 = vmatpush2.msra.mxu0 0.0
          %761 = vmatprep.subr.mxu0 0.0
          %762 = vmatpush2.msra.mxu0 0.0
          %763 = vmatprep.subr.mxu0 0.0
          %764 = vmatpush2.msra.mxu0 0.0
          %765 = vmatprep.subr.mxu0 0.0
          %766 = vmatpush2.msra.mxu0 0.0
          %767 = vmatprep.subr.mxu0 0.0
          %768 = vmatpush2.msra.mxu0 0.0
          %769 = vmatprep.subr.mxu0 0.0
          %770 = vmatpush2.msra.mxu0 0.0
          %771 = vmatprep.subr.mxu0 0.0
          %772 = vmatpush2.msra.mxu0 0.0
          %773 = vmatprep.mubr.f32.mxu0 0.0
          %v774 = vand.u32 %v315, 4294901760
          %775 = vmatmul.mubr.f32.gmra.mxu0 %v774
          %v776 = vpop.f32.mrf.mxu0
          %v777 = vadd.f32 %v704, %v776
          %v778 = vpop.f32.mrf.mxu0
          %779 = vdwg.mxu0
          %v780 = vmul.f32 %v777, 0.5
          %781 = vst [vmem:[#allocation2] sm:$0xff] %v780
          %vm782 = vcmask 7168
          %783 = vst.msk [vmem:[#allocation4] sm:$0xff] %vm782, -inf
          %784 = vst.msk [vmem:[#allocation5] sm:$0xff] %vm782, 0.0
          %785 = vst [vmem:[#allocation6] sm:$0xff] 0.0
        $region52: #{tpu_custom_call.1} parent=35 // pred_fallthru
          _
        %p786 = scmp.eq.s32.totalorder %s30, 0
        // Predicated region
        $region53: #{tpu_custom_call.1} parent=35 // pred_check
          %p787 = pneg %p786
        $region54: #{tpu_custom_call.1} parent=35 // pred_check_branch
          %789 = sbr.rel (%p787) target = $region56
        $region55: #{tpu_custom_call.1} parent=35 // pred_region
          %v790 = vld [vmem:[%s263] sm:$0xff]
          %v791 = vld [vmem:[#allocation12 + $0x8] sm:$0xff]
          %v792 = vld [vmem:[#allocation12 + $0x10] sm:$0xff]
          %v793 = vld [vmem:[#allocation12 + $0x20] sm:$0x1]
          %v794 = vld [vmem:[#allocation12 + $0x28] sm:$0x1]
          %v795 = vld [vmem:[%s3 + $0x1] sm:$0x3]
          %v797 = vlaneseq
          %v798 = vshrl.u32 %v797, 7
          %v799 = vsub.s32 0, %v798
          %v800 = vrot.slane %v795, %v799
          %v801 = vlaneseq
          %v802 = vshrl.u32 %v801, 7
          %v803 = vsub.s32 1, %v802
          %v804 = vrot.slane %v795, %v803
          %vm807 = vcmask 72704
          %v809 = vsel %vm807, %v790, 0
          %vm811 = vcmask 1040384
          %v813 = vsel %vm811, %v793, 0
          %v816 = vsel %vm811, %v794, 0
          %818 = vmatprep.subr.mxu0 0.0
          %819 = vmatpush1.msra.mxu0 0.0
          %820 = vmatprep.subr.mxu0 0.0
          %821 = vmatpush1.msra.mxu0 0.0
          %822 = vmatprep.subr.mxu0 0.0
          %823 = vmatpush1.msra.mxu0 0.0
          %824 = vmatprep.subr.mxu0 0.0
          %825 = vmatpush1.msra.mxu0 0.0
          %826 = vmatprep.subr.mxu0 0.0
          %827 = vmatpush1.msra.mxu0 0.0
          %828 = vmatprep.subr.mxu0 0.0
          %829 = vmatpush1.msra.mxu0 0.0
          %830 = vmatprep.subr.mxu0 0.0
          %831 = vmatpush1.msra.mxu0 0.0
          %832 = vmatprep.subr.mxu0 0.0
          %833 = vmatpush1.msra.mxu0 0.0
          %834 = vmatprep.subr.mxu0 0.0
          %835 = vmatpush1.msra.mxu0 0.0
          %836 = vmatprep.subr.mxu0 0.0
          %837 = vmatpush1.msra.mxu0 0.0
          %838 = vmatprep.subr.mxu0 0.0
          %839 = vmatpush1.msra.mxu0 0.0
          %840 = vmatprep.subr.mxu0 0.0
          %841 = vmatpush1.msra.mxu0 0.0
          %842 = vmatprep.subr.mxu0 0.0
          %843 = vmatpush1.msra.mxu0 0.0
          %844 = vmatprep.subr.mxu0 0.0
          %845 = vmatpush1.msra.mxu0 0.0
          %v846 = vand.u32 %v816, 4294901760
          %847 = vmatprep.subr.mxu0 %v846
          %v848 = vand.u32 %v813, 4294901760
          %849 = vmatpush1.msra.mxu0 %v848
          %v850 = vand.u32 %v792, 4294901760
          %851 = vmatprep.subr.mxu0 %v850
          %v852 = vand.u32 %v791, 4294901760
          %853 = vmatpush1.msra.mxu0 %v852
          %854 = vmatprep.subr.mxu0 0.0
          %855 = vmatpush2.msra.mxu0 0.0
          %856 = vmatprep.subr.mxu0 0.0
          %857 = vmatpush2.msra.mxu0 0.0
          %858 = vmatprep.subr.mxu0 0.0
          %859 = vmatpush2.msra.mxu0 0.0
          %860 = vmatprep.subr.mxu0 0.0
          %861 = vmatpush2.msra.mxu0 0.0
          %862 = vmatprep.subr.mxu0 0.0
          %863 = vmatpush2.msra.mxu0 0.0
          %864 = vmatprep.subr.mxu0 0.0
          %865 = vmatpush2.msra.mxu0 0.0
          %866 = vmatprep.subr.mxu0 0.0
          %867 = vmatpush2.msra.mxu0 0.0
          %868 = vmatprep.subr.mxu0 0.0
          %869 = vmatpush2.msra.mxu0 0.0
          %870 = vmatprep.subr.mxu0 0.0
          %871 = vmatpush2.msra.mxu0 0.0
          %872 = vmatprep.subr.mxu0 0.0
          %873 = vmatpush2.msra.mxu0 0.0
          %874 = vmatprep.subr.mxu0 0.0
          %875 = vmatpush2.msra.mxu0 0.0
          %876 = vmatprep.subr.mxu0 0.0
          %877 = vmatpush2.msra.mxu0 0.0
          %878 = vmatprep.subr.mxu0 0.0
          %879 = vmatpush2.msra.mxu0 0.0
          %880 = vmatprep.subr.mxu0 0.0
          %881 = vmatpush2.msra.mxu0 0.0
          %882 = vmatprep.subr.mxu0 0.0
          %883 = vmatpush2.msra.mxu0 0.0
          %884 = vmatprep.subr.mxu0 0.0
          %885 = vmatpush2.msra.mxu0 0.0
          %886 = vmatprep.mubr.f32.mxu0 0.0
          %v887 = vand.u32 %v809, 4294901760
          %v888 = vsub.f32 %v809, %v887
          %v889 = vand.u32 %v888, 4294901760
          %v890 = vsub.f32 %v888, %v889
          %v891 = vand.u32 %v890, 4294901760
          %892 = vmatmul.mubr.f32.gmra.mxu0 %v891
          %v893 = vpop.f32.mrf.mxu0
          %v894 = vadd.f32 %v800, %v893
          %v895 = vpop.f32.mrf.mxu0
          %v896 = vadd.f32 %v804, %v895
          %897 = vdwg.mxu0
          %898 = vmatprep.subr.mxu0 0.0
          %899 = vmatpush1.msra.mxu0 0.0
          %900 = vmatprep.subr.mxu0 0.0
          %901 = vmatpush1.msra.mxu0 0.0
          %902 = vmatprep.subr.mxu0 0.0
          %903 = vmatpush1.msra.mxu0 0.0
          %904 = vmatprep.subr.mxu0 0.0
          %905 = vmatpush1.msra.mxu0 0.0
          %906 = vmatprep.subr.mxu0 0.0
          %907 = vmatpush1.msra.mxu0 0.0
          %908 = vmatprep.subr.mxu0 0.0
          %909 = vmatpush1.msra.mxu0 0.0
          %910 = vmatprep.subr.mxu0 0.0
          %911 = vmatpush1.msra.mxu0 0.0
          %912 = vmatprep.subr.mxu0 0.0
          %913 = vmatpush1.msra.mxu0 0.0
          %914 = vmatprep.subr.mxu0 0.0
          %915 = vmatpush1.msra.mxu0 0.0
          %916 = vmatprep.subr.mxu0 0.0
          %917 = vmatpush1.msra.mxu0 0.0
          %918 = vmatprep.subr.mxu0 0.0
          %919 = vmatpush1.msra.mxu0 0.0
          %920 = vmatprep.subr.mxu0 0.0
          %921 = vmatpush1.msra.mxu0 0.0
          %922 = vmatprep.subr.mxu0 0.0
          %923 = vmatpush1.msra.mxu0 0.0
          %924 = vmatprep.subr.mxu0 0.0
          %925 = vmatpush1.msra.mxu0 0.0
          %v926 = vand.u32 %v816, 4294901760
          %v927 = vsub.f32 %v816, %v926
          %v928 = vand.u32 %v927, 4294901760
          %v929 = vsub.f32 %v927, %v928
          %v930 = vand.u32 %v929, 4294901760
          %931 = vmatprep.subr.mxu0 %v930
          %v932 = vand.u32 %v813, 4294901760
          %v933 = vsub.f32 %v813, %v932
          %v934 = vand.u32 %v933, 4294901760
          %v935 = vsub.f32 %v933, %v934
          %v936 = vand.u32 %v935, 4294901760
          %937 = vmatpush1.msra.mxu0 %v936
          %v938 = vand.u32 %v792, 4294901760
          %v939 = vsub.f32 %v792, %v938
          %v940 = vand.u32 %v939, 4294901760
          %v941 = vsub.f32 %v939, %v940
          %v942 = vand.u32 %v941, 4294901760
          %943 = vmatprep.subr.mxu0 %v942
          %v944 = vand.u32 %v791, 4294901760
          %v945 = vsub.f32 %v791, %v944
          %v946 = vand.u32 %v945, 4294901760
          %v947 = vsub.f32 %v945, %v946
          %v948 = vand.u32 %v947, 4294901760
          %949 = vmatpush1.msra.mxu0 %v948
          %950 = vmatprep.subr.mxu0 0.0
          %951 = vmatpush2.msra.mxu0 0.0
          %952 = vmatprep.subr.mxu0 0.0
          %953 = vmatpush2.msra.mxu0 0.0
          %954 = vmatprep.subr.mxu0 0.0
          %955 = vmatpush2.msra.mxu0 0.0
          %956 = vmatprep.subr.mxu0 0.0
          %957 = vmatpush2.msra.mxu0 0.0
          %958 = vmatprep.subr.mxu0 0.0
          %959 = vmatpush2.msra.mxu0 0.0
          %960 = vmatprep.subr.mxu0 0.0
          %961 = vmatpush2.msra.mxu0 0.0
          %962 = vmatprep.subr.mxu0 0.0
          %963 = vmatpush2.msra.mxu0 0.0
          %964 = vmatprep.subr.mxu0 0.0
          %965 = vmatpush2.msra.mxu0 0.0
          %966 = vmatprep.subr.mxu0 0.0
          %967 = vmatpush2.msra.mxu0 0.0
          %968 = vmatprep.subr.mxu0 0.0
          %969 = vmatpush2.msra.mxu0 0.0
          %970 = vmatprep.subr.mxu0 0.0
          %971 = vmatpush2.msra.mxu0 0.0
          %972 = vmatprep.subr.mxu0 0.0
          %973 = vmatpush2.msra.mxu0 0.0
          %974 = vmatprep.subr.mxu0 0.0
          %975 = vmatpush2.msra.mxu0 0.0
          %976 = vmatprep.subr.mxu0 0.0
          %977 = vmatpush2.msra.mxu0 0.0
          %978 = vmatprep.subr.mxu0 0.0
          %979 = vmatpush2.msra.mxu0 0.0
          %980 = vmatprep.subr.mxu0 0.0
          %981 = vmatpush2.msra.mxu0 0.0
          %982 = vmatprep.mubr.f32.mxu0 0.0
          %v983 = vand.u32 %v809, 4294901760
          %984 = vmatmul.mubr.f32.gmra.mxu0 %v983
          %v985 = vpop.f32.mrf.mxu0
          %v986 = vadd.f32 %v894, %v985
          %v987 = vpop.f32.mrf.mxu0
          %v988 = vadd.f32 %v896, %v987
          %989 = vdwg.mxu0
          %990 = vmatprep.subr.mxu0 0.0
          %991 = vmatpush1.msra.mxu0 0.0
          %992 = vmatprep.subr.mxu0 0.0
          %993 = vmatpush1.msra.mxu0 0.0
          %994 = vmatprep.subr.mxu0 0.0
          %995 = vmatpush1.msra.mxu0 0.0
          %996 = vmatprep.subr.mxu0 0.0
          %997 = vmatpush1.msra.mxu0 0.0
          %998 = vmatprep.subr.mxu0 0.0
          %999 = vmatpush1.msra.mxu0 0.0
          %1000 = vmatprep.subr.mxu0 0.0
          %1001 = vmatpush1.msra.mxu0 0.0
          %1002 = vmatprep.subr.mxu0 0.0
          %1003 = vmatpush1.msra.mxu0 0.0
          %1004 = vmatprep.subr.mxu0 0.0
          %1005 = vmatpush1.msra.mxu0 0.0
          %1006 = vmatprep.subr.mxu0 0.0
          %1007 = vmatpush1.msra.mxu0 0.0
          %1008 = vmatprep.subr.mxu0 0.0
          %1009 = vmatpush1.msra.mxu0 0.0
          %1010 = vmatprep.subr.mxu0 0.0
          %1011 = vmatpush1.msra.mxu0 0.0
          %1012 = vmatprep.subr.mxu0 0.0
          %1013 = vmatpush1.msra.mxu0 0.0
          %1014 = vmatprep.subr.mxu0 0.0
          %1015 = vmatpush1.msra.mxu0 0.0
          %1016 = vmatprep.subr.mxu0 0.0
          %1017 = vmatpush1.msra.mxu0 0.0
          %v1018 = vand.u32 %v816, 4294901760
          %v1019 = vsub.f32 %v816, %v1018
          %1020 = vmatprep.subr.mxu0 %v1019
          %v1021 = vand.u32 %v813, 4294901760
          %v1022 = vsub.f32 %v813, %v1021
          %1023 = vmatpush1.msra.mxu0 %v1022
          %v1024 = vand.u32 %v792, 4294901760
          %v1025 = vsub.f32 %v792, %v1024
          %1026 = vmatprep.subr.mxu0 %v1025
          %v1027 = vand.u32 %v791, 4294901760
          %v1028 = vsub.f32 %v791, %v1027
          %1029 = vmatpush1.msra.mxu0 %v1028
          %1030 = vmatprep.subr.mxu0 0.0
          %1031 = vmatpush2.msra.mxu0 0.0
          %1032 = vmatprep.subr.mxu0 0.0
          %1033 = vmatpush2.msra.mxu0 0.0
          %1034 = vmatprep.subr.mxu0 0.0
          %1035 = vmatpush2.msra.mxu0 0.0
          %1036 = vmatprep.subr.mxu0 0.0
          %1037 = vmatpush2.msra.mxu0 0.0
          %1038 = vmatprep.subr.mxu0 0.0
          %1039 = vmatpush2.msra.mxu0 0.0
          %1040 = vmatprep.subr.mxu0 0.0
          %1041 = vmatpush2.msra.mxu0 0.0
          %1042 = vmatprep.subr.mxu0 0.0
          %1043 = vmatpush2.msra.mxu0 0.0
          %1044 = vmatprep.subr.mxu0 0.0
          %1045 = vmatpush2.msra.mxu0 0.0
          %1046 = vmatprep.subr.mxu0 0.0
          %1047 = vmatpush2.msra.mxu0 0.0
          %1048 = vmatprep.subr.mxu0 0.0
          %1049 = vmatpush2.msra.mxu0 0.0
          %1050 = vmatprep.subr.mxu0 0.0
          %1051 = vmatpush2.msra.mxu0 0.0
          %1052 = vmatprep.subr.mxu0 0.0
          %1053 = vmatpush2.msra.mxu0 0.0
          %1054 = vmatprep.subr.mxu0 0.0
          %1055 = vmatpush2.msra.mxu0 0.0
          %1056 = vmatprep.subr.mxu0 0.0
          %1057 = vmatpush2.msra.mxu0 0.0
          %1058 = vmatprep.subr.mxu0 0.0
          %1059 = vmatpush2.msra.mxu0 0.0
          %1060 = vmatprep.subr.mxu0 0.0
          %1061 = vmatpush2.msra.mxu0 0.0
          %1062 = vmatprep.mubr.f32.mxu0 0.0
          %v1063 = vand.u32 %v809, 4294901760
          %v1064 = vsub.f32 %v809, %v1063
          %1065 = vmatmul.mubr.f32.gmra.mxu0 %v1064
          %v1066 = vpop.f32.mrf.mxu0
          %v1067 = vadd.f32 %v986, %v1066
          %v1068 = vpop.f32.mrf.mxu0
          %v1069 = vadd.f32 %v988, %v1068
          %1070 = vdwg.mxu0
          %1071 = vmatprep.subr.mxu0 0.0
          %1072 = vmatpush1.msra.mxu0 0.0
          %1073 = vmatprep.subr.mxu0 0.0
          %1074 = vmatpush1.msra.mxu0 0.0
          %1075 = vmatprep.subr.mxu0 0.0
          %1076 = vmatpush1.msra.mxu0 0.0
          %1077 = vmatprep.subr.mxu0 0.0
          %1078 = vmatpush1.msra.mxu0 0.0
          %1079 = vmatprep.subr.mxu0 0.0
          %1080 = vmatpush1.msra.mxu0 0.0
          %1081 = vmatprep.subr.mxu0 0.0
          %1082 = vmatpush1.msra.mxu0 0.0
          %1083 = vmatprep.subr.mxu0 0.0
          %1084 = vmatpush1.msra.mxu0 0.0
          %1085 = vmatprep.subr.mxu0 0.0
          %1086 = vmatpush1.msra.mxu0 0.0
          %1087 = vmatprep.subr.mxu0 0.0
          %1088 = vmatpush1.msra.mxu0 0.0
          %1089 = vmatprep.subr.mxu0 0.0
          %1090 = vmatpush1.msra.mxu0 0.0
          %1091 = vmatprep.subr.mxu0 0.0
          %1092 = vmatpush1.msra.mxu0 0.0
          %1093 = vmatprep.subr.mxu0 0.0
          %1094 = vmatpush1.msra.mxu0 0.0
          %1095 = vmatprep.subr.mxu0 0.0
          %1096 = vmatpush1.msra.mxu0 0.0
          %1097 = vmatprep.subr.mxu0 0.0
          %1098 = vmatpush1.msra.mxu0 0.0
          %v1099 = vand.u32 %v816, 4294901760
          %1100 = vmatprep.subr.mxu0 %v1099
          %v1101 = vand.u32 %v813, 4294901760
          %1102 = vmatpush1.msra.mxu0 %v1101
          %v1103 = vand.u32 %v792, 4294901760
          %1104 = vmatprep.subr.mxu0 %v1103
          %v1105 = vand.u32 %v791, 4294901760
          %1106 = vmatpush1.msra.mxu0 %v1105
          %1107 = vmatprep.subr.mxu0 0.0
          %1108 = vmatpush2.msra.mxu0 0.0
          %1109 = vmatprep.subr.mxu0 0.0
          %1110 = vmatpush2.msra.mxu0 0.0
          %1111 = vmatprep.subr.mxu0 0.0
          %1112 = vmatpush2.msra.mxu0 0.0
          %1113 = vmatprep.subr.mxu0 0.0
          %1114 = vmatpush2.msra.mxu0 0.0
          %1115 = vmatprep.subr.mxu0 0.0
          %1116 = vmatpush2.msra.mxu0 0.0
          %1117 = vmatprep.subr.mxu0 0.0
          %1118 = vmatpush2.msra.mxu0 0.0
          %1119 = vmatprep.subr.mxu0 0.0
          %1120 = vmatpush2.msra.mxu0 0.0
          %1121 = vmatprep.subr.mxu0 0.0
          %1122 = vmatpush2.msra.mxu0 0.0
          %1123 = vmatprep.subr.mxu0 0.0
          %1124 = vmatpush2.msra.mxu0 0.0
          %1125 = vmatprep.subr.mxu0 0.0
          %1126 = vmatpush2.msra.mxu0 0.0
          %1127 = vmatprep.subr.mxu0 0.0
          %1128 = vmatpush2.msra.mxu0 0.0
          %1129 = vmatprep.subr.mxu0 0.0
          %1130 = vmatpush2.msra.mxu0 0.0
          %1131 = vmatprep.subr.mxu0 0.0
          %1132 = vmatpush2.msra.mxu0 0.0
          %1133 = vmatprep.subr.mxu0 0.0
          %1134 = vmatpush2.msra.mxu0 0.0
          %1135 = vmatprep.subr.mxu0 0.0
          %1136 = vmatpush2.msra.mxu0 0.0
          %1137 = vmatprep.subr.mxu0 0.0
          %1138 = vmatpush2.msra.mxu0 0.0
          %1139 = vmatprep.mubr.f32.mxu0 0.0
          %v1140 = vand.u32 %v809, 4294901760
          %v1141 = vsub.f32 %v809, %v1140
          %v1142 = vand.u32 %v1141, 4294901760
          %1143 = vmatmul.mubr.f32.gmra.mxu0 %v1142
          %v1144 = vpop.f32.mrf.mxu0
          %v1145 = vadd.f32 %v1067, %v1144
          %v1146 = vpop.f32.mrf.mxu0
          %v1147 = vadd.f32 %v1069, %v1146
          %1148 = vdwg.mxu0
          %1149 = vmatprep.subr.mxu0 0.0
          %1150 = vmatpush1.msra.mxu0 0.0
          %1151 = vmatprep.subr.mxu0 0.0
          %1152 = vmatpush1.msra.mxu0 0.0
          %1153 = vmatprep.subr.mxu0 0.0
          %1154 = vmatpush1.msra.mxu0 0.0
          %1155 = vmatprep.subr.mxu0 0.0
          %1156 = vmatpush1.msra.mxu0 0.0
          %1157 = vmatprep.subr.mxu0 0.0
          %1158 = vmatpush1.msra.mxu0 0.0
          %1159 = vmatprep.subr.mxu0 0.0
          %1160 = vmatpush1.msra.mxu0 0.0
          %1161 = vmatprep.subr.mxu0 0.0
          %1162 = vmatpush1.msra.mxu0 0.0
          %1163 = vmatprep.subr.mxu0 0.0
          %1164 = vmatpush1.msra.mxu0 0.0
          %1165 = vmatprep.subr.mxu0 0.0
          %1166 = vmatpush1.msra.mxu0 0.0
          %1167 = vmatprep.subr.mxu0 0.0
          %1168 = vmatpush1.msra.mxu0 0.0
          %1169 = vmatprep.subr.mxu0 0.0
          %1170 = vmatpush1.msra.mxu0 0.0
          %1171 = vmatprep.subr.mxu0 0.0
          %1172 = vmatpush1.msra.mxu0 0.0
          %1173 = vmatprep.subr.mxu0 0.0
          %1174 = vmatpush1.msra.mxu0 0.0
          %1175 = vmatprep.subr.mxu0 0.0
          %1176 = vmatpush1.msra.mxu0 0.0
          %v1177 = vand.u32 %v816, 4294901760
          %v1178 = vsub.f32 %v816, %v1177
          %v1179 = vand.u32 %v1178, 4294901760
          %1180 = vmatprep.subr.mxu0 %v1179
          %v1181 = vand.u32 %v813, 4294901760
          %v1182 = vsub.f32 %v813, %v1181
          %v1183 = vand.u32 %v1182, 4294901760
          %1184 = vmatpush1.msra.mxu0 %v1183
          %v1185 = vand.u32 %v792, 4294901760
          %v1186 = vsub.f32 %v792, %v1185
          %v1187 = vand.u32 %v1186, 4294901760
          %1188 = vmatprep.subr.mxu0 %v1187
          %v1189 = vand.u32 %v791, 4294901760
          %v1190 = vsub.f32 %v791, %v1189
          %v1191 = vand.u32 %v1190, 4294901760
          %1192 = vmatpush1.msra.mxu0 %v1191
          %1193 = vmatprep.subr.mxu0 0.0
          %1194 = vmatpush2.msra.mxu0 0.0
          %1195 = vmatprep.subr.mxu0 0.0
          %1196 = vmatpush2.msra.mxu0 0.0
          %1197 = vmatprep.subr.mxu0 0.0
          %1198 = vmatpush2.msra.mxu0 0.0
          %1199 = vmatprep.subr.mxu0 0.0
          %1200 = vmatpush2.msra.mxu0 0.0
          %1201 = vmatprep.subr.mxu0 0.0
          %1202 = vmatpush2.msra.mxu0 0.0
          %1203 = vmatprep.subr.mxu0 0.0
          %1204 = vmatpush2.msra.mxu0 0.0
          %1205 = vmatprep.subr.mxu0 0.0
          %1206 = vmatpush2.msra.mxu0 0.0
          %1207 = vmatprep.subr.mxu0 0.0
          %1208 = vmatpush2.msra.mxu0 0.0
          %1209 = vmatprep.subr.mxu0 0.0
          %1210 = vmatpush2.msra.mxu0 0.0
          %1211 = vmatprep.subr.mxu0 0.0
          %1212 = vmatpush2.msra.mxu0 0.0
          %1213 = vmatprep.subr.mxu0 0.0
          %1214 = vmatpush2.msra.mxu0 0.0
          %1215 = vmatprep.subr.mxu0 0.0
          %1216 = vmatpush2.msra.mxu0 0.0
          %1217 = vmatprep.subr.mxu0 0.0
          %1218 = vmatpush2.msra.mxu0 0.0
          %1219 = vmatprep.subr.mxu0 0.0
          %1220 = vmatpush2.msra.mxu0 0.0
          %1221 = vmatprep.subr.mxu0 0.0
          %1222 = vmatpush2.msra.mxu0 0.0
          %1223 = vmatprep.subr.mxu0 0.0
          %1224 = vmatpush2.msra.mxu0 0.0
          %1225 = vmatprep.mubr.f32.mxu0 0.0
          %v1226 = vand.u32 %v809, 4294901760
          %1227 = vmatmul.mubr.f32.gmra.mxu0 %v1226
          %v1228 = vpop.f32.mrf.mxu0
          %v1229 = vadd.f32 %v1145, %v1228
          %v1230 = vpop.f32.mrf.mxu0
          %v1231 = vadd.f32 %v1147, %v1230
          %1232 = vdwg.mxu0
          %1233 = vmatprep.subr.mxu0 0.0
          %1234 = vmatpush1.msra.mxu0 0.0
          %1235 = vmatprep.subr.mxu0 0.0
          %1236 = vmatpush1.msra.mxu0 0.0
          %1237 = vmatprep.subr.mxu0 0.0
          %1238 = vmatpush1.msra.mxu0 0.0
          %1239 = vmatprep.subr.mxu0 0.0
          %1240 = vmatpush1.msra.mxu0 0.0
          %1241 = vmatprep.subr.mxu0 0.0
          %1242 = vmatpush1.msra.mxu0 0.0
          %1243 = vmatprep.subr.mxu0 0.0
          %1244 = vmatpush1.msra.mxu0 0.0
          %1245 = vmatprep.subr.mxu0 0.0
          %1246 = vmatpush1.msra.mxu0 0.0
          %1247 = vmatprep.subr.mxu0 0.0
          %1248 = vmatpush1.msra.mxu0 0.0
          %1249 = vmatprep.subr.mxu0 0.0
          %1250 = vmatpush1.msra.mxu0 0.0
          %1251 = vmatprep.subr.mxu0 0.0
          %1252 = vmatpush1.msra.mxu0 0.0
          %1253 = vmatprep.subr.mxu0 0.0
          %1254 = vmatpush1.msra.mxu0 0.0
          %1255 = vmatprep.subr.mxu0 0.0
          %1256 = vmatpush1.msra.mxu0 0.0
          %1257 = vmatprep.subr.mxu0 0.0
          %1258 = vmatpush1.msra.mxu0 0.0
          %1259 = vmatprep.subr.mxu0 0.0
          %1260 = vmatpush1.msra.mxu0 0.0
          %v1261 = vand.u32 %v816, 4294901760
          %1262 = vmatprep.subr.mxu0 %v1261
          %v1263 = vand.u32 %v813, 4294901760
          %1264 = vmatpush1.msra.mxu0 %v1263
          %v1265 = vand.u32 %v792, 4294901760
          %1266 = vmatprep.subr.mxu0 %v1265
          %v1267 = vand.u32 %v791, 4294901760
          %1268 = vmatpush1.msra.mxu0 %v1267
          %1269 = vmatprep.subr.mxu0 0.0
          %1270 = vmatpush2.msra.mxu0 0.0
          %1271 = vmatprep.subr.mxu0 0.0
          %1272 = vmatpush2.msra.mxu0 0.0
          %1273 = vmatprep.subr.mxu0 0.0
          %1274 = vmatpush2.msra.mxu0 0.0
          %1275 = vmatprep.subr.mxu0 0.0
          %1276 = vmatpush2.msra.mxu0 0.0
          %1277 = vmatprep.subr.mxu0 0.0
          %1278 = vmatpush2.msra.mxu0 0.0
          %1279 = vmatprep.subr.mxu0 0.0
          %1280 = vmatpush2.msra.mxu0 0.0
          %1281 = vmatprep.subr.mxu0 0.0
          %1282 = vmatpush2.msra.mxu0 0.0
          %1283 = vmatprep.subr.mxu0 0.0
          %1284 = vmatpush2.msra.mxu0 0.0
          %1285 = vmatprep.subr.mxu0 0.0
          %1286 = vmatpush2.msra.mxu0 0.0
          %1287 = vmatprep.subr.mxu0 0.0
          %1288 = vmatpush2.msra.mxu0 0.0
          %1289 = vmatprep.subr.mxu0 0.0
          %1290 = vmatpush2.msra.mxu0 0.0
          %1291 = vmatprep.subr.mxu0 0.0
          %1292 = vmatpush2.msra.mxu0 0.0
          %1293 = vmatprep.subr.mxu0 0.0
          %1294 = vmatpush2.msra.mxu0 0.0
          %1295 = vmatprep.subr.mxu0 0.0
          %1296 = vmatpush2.msra.mxu0 0.0
          %1297 = vmatprep.subr.mxu0 0.0
          %1298 = vmatpush2.msra.mxu0 0.0
          %1299 = vmatprep.subr.mxu0 0.0
          %1300 = vmatpush2.msra.mxu0 0.0
          %1301 = vmatprep.mubr.f32.mxu0 0.0
          %v1302 = vand.u32 %v809, 4294901760
          %1303 = vmatmul.mubr.f32.gmra.mxu0 %v1302
          %v1304 = vpop.f32.mrf.mxu0
          %v1305 = vadd.f32 %v1229, %v1304
          %v1306 = vpop.f32.mrf.mxu0
          %v1307 = vadd.f32 %v1231, %v1306
          %1308 = vdwg.mxu0
          %s1309 = smul.u32 %s31, 2
          %s1310 = smul.addr %s1309, 8
          %s1311 = scalar_lea.vmem [#allocation3], %s1310
          %1312 = vst [vmem:[%s1311] sm:$0xff] %v1305
          %1313 = vst [vmem:[%s1311 + $0x8] sm:$0xff] %v1307
        $region56: #{tpu_custom_call.1} parent=35 // pred_fallthru
          _
        %s1314 = smul.u32 %s31, 2
        %s1315 = smul.addr %s1314, 8
        %s1316 = scalar_lea.vmem [#allocation3], %s1315
        %v1317 = vld [vmem:[%s1316] sm:$0xff]
        %v1318 = vld [vmem:[%s1316 + $0x8] sm:$0xff]
        %v1319 = vld [vmem:[#allocation2] sm:$0xff]
        %1320 = vmatprep.subr.mxu0 0.0
        %1321 = vmatpush1.xpose.msra.mxu0 0.0
        %1322 = vmatprep.subr.mxu0 0.0
        %1323 = vmatpush1.xpose.msra.mxu0 0.0
        %1324 = vmatprep.subr.mxu0 0.0
        %1325 = vmatpush1.xpose.msra.mxu0 0.0
        %1326 = vmatprep.subr.mxu0 0.0
        %1327 = vmatpush1.xpose.msra.mxu0 0.0
        %1328 = vmatprep.subr.mxu0 0.0
        %1329 = vmatpush1.xpose.msra.mxu0 0.0
        %1330 = vmatprep.subr.mxu0 0.0
        %1331 = vmatpush1.xpose.msra.mxu0 0.0
        %1332 = vmatprep.subr.mxu0 0.0
        %1333 = vmatpush1.xpose.msra.mxu0 0.0
        %1334 = vmatprep.subr.mxu0 0.0
        %1335 = vmatpush1.xpose.msra.mxu0 0.0
        %1336 = vmatprep.subr.mxu0 0.0
        %1337 = vmatpush1.xpose.msra.mxu0 0.0
        %1338 = vmatprep.subr.mxu0 0.0
        %1339 = vmatpush1.xpose.msra.mxu0 0.0
        %1340 = vmatprep.subr.mxu0 0.0
        %1341 = vmatpush1.xpose.msra.mxu0 0.0
        %1342 = vmatprep.subr.mxu0 0.0
        %1343 = vmatpush1.xpose.msra.mxu0 0.0
        %1344 = vmatprep.subr.mxu0 0.0
        %1345 = vmatpush1.xpose.msra.mxu0 0.0
        %1346 = vmatprep.subr.mxu0 0.0
        %1347 = vmatpush1.xpose.msra.mxu0 0.0
        %1348 = vmatprep.subr.mxu0 0.0
        %1349 = vmatpush1.xpose.msra.mxu0 0.0
        %1350 = vmatprep.subr.mxu0 0.0
        %v1351 = vand.u32 %v1317, 4294901760
        %1352 = vmatpush1.xpose.msra.mxu0 %v1351
        %1353 = vmatprep.subr.mxu0 0.0
        %1354 = vmatpush2.xpose.msra.mxu0 0.0
        %1355 = vmatprep.subr.mxu0 0.0
        %1356 = vmatpush2.xpose.msra.mxu0 0.0
        %1357 = vmatprep.subr.mxu0 0.0
        %1358 = vmatpush2.xpose.msra.mxu0 0.0
        %1359 = vmatprep.subr.mxu0 0.0
        %1360 = vmatpush2.xpose.msra.mxu0 0.0
        %1361 = vmatprep.subr.mxu0 0.0
        %1362 = vmatpush2.xpose.msra.mxu0 0.0
        %1363 = vmatprep.subr.mxu0 0.0
        %1364 = vmatpush2.xpose.msra.mxu0 0.0
        %1365 = vmatprep.subr.mxu0 0.0
        %1366 = vmatpush2.xpose.msra.mxu0 0.0
        %1367 = vmatprep.subr.mxu0 0.0
        %1368 = vmatpush2.xpose.msra.mxu0 0.0
        %1369 = vmatprep.subr.mxu0 0.0
        %1370 = vmatpush2.xpose.msra.mxu0 0.0
        %1371 = vmatprep.subr.mxu0 0.0
        %1372 = vmatpush2.xpose.msra.mxu0 0.0
        %1373 = vmatprep.subr.mxu0 0.0
        %1374 = vmatpush2.xpose.msra.mxu0 0.0
        %1375 = vmatprep.subr.mxu0 0.0
        %1376 = vmatpush2.xpose.msra.mxu0 0.0
        %1377 = vmatprep.subr.mxu0 0.0
        %1378 = vmatpush2.xpose.msra.mxu0 0.0
        %1379 = vmatprep.subr.mxu0 0.0
        %1380 = vmatpush2.xpose.msra.mxu0 0.0
        %1381 = vmatprep.subr.mxu0 0.0
        %1382 = vmatpush2.xpose.msra.mxu0 0.0
        %1383 = vmatprep.subr.mxu0 0.0
        %1384 = vmatpush2.xpose.msra.mxu0 0.0
        %1385 = vmatprep.mubr.f32.mxu0 0.0
        %v1386 = vand.u32 %v1319, 4294901760
        %v1387 = vsub.f32 %v1319, %v1386
        %v1388 = vand.u32 %v1387, 4294901760
        %v1389 = vsub.f32 %v1387, %v1388
        %v1390 = vand.u32 %v1389, 4294901760
        %1391 = vmatmul.mubr.f32.gmra.mxu0 %v1390
        %v1392 = vpop.f32.mrf.mxu0
        %v1393 = vadd.f32 0.0, %v1392
        %v1394 = vpop.f32.mrf.mxu0
        %1395 = vdwg.mxu0
        %1396 = vmatprep.subr.mxu0 0.0
        %1397 = vmatpush1.xpose.msra.mxu0 0.0
        %1398 = vmatprep.subr.mxu0 0.0
        %1399 = vmatpush1.xpose.msra.mxu0 0.0
        %1400 = vmatprep.subr.mxu0 0.0
        %1401 = vmatpush1.xpose.msra.mxu0 0.0
        %1402 = vmatprep.subr.mxu0 0.0
        %1403 = vmatpush1.xpose.msra.mxu0 0.0
        %1404 = vmatprep.subr.mxu0 0.0
        %1405 = vmatpush1.xpose.msra.mxu0 0.0
        %1406 = vmatprep.subr.mxu0 0.0
        %1407 = vmatpush1.xpose.msra.mxu0 0.0
        %1408 = vmatprep.subr.mxu0 0.0
        %1409 = vmatpush1.xpose.msra.mxu0 0.0
        %1410 = vmatprep.subr.mxu0 0.0
        %1411 = vmatpush1.xpose.msra.mxu0 0.0
        %1412 = vmatprep.subr.mxu0 0.0
        %1413 = vmatpush1.xpose.msra.mxu0 0.0
        %1414 = vmatprep.subr.mxu0 0.0
        %1415 = vmatpush1.xpose.msra.mxu0 0.0
        %1416 = vmatprep.subr.mxu0 0.0
        %1417 = vmatpush1.xpose.msra.mxu0 0.0
        %1418 = vmatprep.subr.mxu0 0.0
        %1419 = vmatpush1.xpose.msra.mxu0 0.0
        %1420 = vmatprep.subr.mxu0 0.0
        %1421 = vmatpush1.xpose.msra.mxu0 0.0
        %1422 = vmatprep.subr.mxu0 0.0
        %1423 = vmatpush1.xpose.msra.mxu0 0.0
        %1424 = vmatprep.subr.mxu0 0.0
        %1425 = vmatpush1.xpose.msra.mxu0 0.0
        %1426 = vmatprep.subr.mxu0 0.0
        %v1427 = vand.u32 %v1317, 4294901760
        %v1428 = vsub.f32 %v1317, %v1427
        %v1429 = vand.u32 %v1428, 4294901760
        %v1430 = vsub.f32 %v1428, %v1429
        %v1431 = vand.u32 %v1430, 4294901760
        %1432 = vmatpush1.xpose.msra.mxu0 %v1431
        %1433 = vmatprep.subr.mxu0 0.0
        %1434 = vmatpush2.xpose.msra.mxu0 0.0
        %1435 = vmatprep.subr.mxu0 0.0
        %1436 = vmatpush2.xpose.msra.mxu0 0.0
        %1437 = vmatprep.subr.mxu0 0.0
        %1438 = vmatpush2.xpose.msra.mxu0 0.0
        %1439 = vmatprep.subr.mxu0 0.0
        %1440 = vmatpush2.xpose.msra.mxu0 0.0
        %1441 = vmatprep.subr.mxu0 0.0
        %1442 = vmatpush2.xpose.msra.mxu0 0.0
        %1443 = vmatprep.subr.mxu0 0.0
        %1444 = vmatpush2.xpose.msra.mxu0 0.0
        %1445 = vmatprep.subr.mxu0 0.0
        %1446 = vmatpush2.xpose.msra.mxu0 0.0
        %1447 = vmatprep.subr.mxu0 0.0
        %1448 = vmatpush2.xpose.msra.mxu0 0.0
        %1449 = vmatprep.subr.mxu0 0.0
        %1450 = vmatpush2.xpose.msra.mxu0 0.0
        %1451 = vmatprep.subr.mxu0 0.0
        %1452 = vmatpush2.xpose.msra.mxu0 0.0
        %1453 = vmatprep.subr.mxu0 0.0
        %1454 = vmatpush2.xpose.msra.mxu0 0.0
        %1455 = vmatprep.subr.mxu0 0.0
        %1456 = vmatpush2.xpose.msra.mxu0 0.0
        %1457 = vmatprep.subr.mxu0 0.0
        %1458 = vmatpush2.xpose.msra.mxu0 0.0
        %1459 = vmatprep.subr.mxu0 0.0
        %1460 = vmatpush2.xpose.msra.mxu0 0.0
        %1461 = vmatprep.subr.mxu0 0.0
        %1462 = vmatpush2.xpose.msra.mxu0 0.0
        %1463 = vmatprep.subr.mxu0 0.0
        %1464 = vmatpush2.xpose.msra.mxu0 0.0
        %1465 = vmatprep.mubr.f32.mxu0 0.0
        %v1466 = vand.u32 %v1319, 4294901760
        %1467 = vmatmul.mubr.f32.gmra.mxu0 %v1466
        %v1468 = vpop.f32.mrf.mxu0
        %v1469 = vadd.f32 %v1393, %v1468
        %v1470 = vpop.f32.mrf.mxu0
        %1471 = vdwg.mxu0
        %1472 = vmatprep.subr.mxu0 0.0
        %1473 = vmatpush1.xpose.msra.mxu0 0.0
        %1474 = vmatprep.subr.mxu0 0.0
        %1475 = vmatpush1.xpose.msra.mxu0 0.0
        %1476 = vmatprep.subr.mxu0 0.0
        %1477 = vmatpush1.xpose.msra.mxu0 0.0
        %1478 = vmatprep.subr.mxu0 0.0
        %1479 = vmatpush1.xpose.msra.mxu0 0.0
        %1480 = vmatprep.subr.mxu0 0.0
        %1481 = vmatpush1.xpose.msra.mxu0 0.0
        %1482 = vmatprep.subr.mxu0 0.0
        %1483 = vmatpush1.xpose.msra.mxu0 0.0
        %1484 = vmatprep.subr.mxu0 0.0
        %1485 = vmatpush1.xpose.msra.mxu0 0.0
        %1486 = vmatprep.subr.mxu0 0.0
        %1487 = vmatpush1.xpose.msra.mxu0 0.0
        %1488 = vmatprep.subr.mxu0 0.0
        %1489 = vmatpush1.xpose.msra.mxu0 0.0
        %1490 = vmatprep.subr.mxu0 0.0
        %1491 = vmatpush1.xpose.msra.mxu0 0.0
        %1492 = vmatprep.subr.mxu0 0.0
        %1493 = vmatpush1.xpose.msra.mxu0 0.0
        %1494 = vmatprep.subr.mxu0 0.0
        %1495 = vmatpush1.xpose.msra.mxu0 0.0
        %1496 = vmatprep.subr.mxu0 0.0
        %1497 = vmatpush1.xpose.msra.mxu0 0.0
        %1498 = vmatprep.subr.mxu0 0.0
        %1499 = vmatpush1.xpose.msra.mxu0 0.0
        %1500 = vmatprep.subr.mxu0 0.0
        %1501 = vmatpush1.xpose.msra.mxu0 0.0
        %1502 = vmatprep.subr.mxu0 0.0
        %v1503 = vand.u32 %v1317, 4294901760
        %v1504 = vsub.f32 %v1317, %v1503
        %1505 = vmatpush1.xpose.msra.mxu0 %v1504
        %1506 = vmatprep.subr.mxu0 0.0
        %1507 = vmatpush2.xpose.msra.mxu0 0.0
        %1508 = vmatprep.subr.mxu0 0.0
        %1509 = vmatpush2.xpose.msra.mxu0 0.0
        %1510 = vmatprep.subr.mxu0 0.0
        %1511 = vmatpush2.xpose.msra.mxu0 0.0
        %1512 = vmatprep.subr.mxu0 0.0
        %1513 = vmatpush2.xpose.msra.mxu0 0.0
        %1514 = vmatprep.subr.mxu0 0.0
        %1515 = vmatpush2.xpose.msra.mxu0 0.0
        %1516 = vmatprep.subr.mxu0 0.0
        %1517 = vmatpush2.xpose.msra.mxu0 0.0
        %1518 = vmatprep.subr.mxu0 0.0
        %1519 = vmatpush2.xpose.msra.mxu0 0.0
        %1520 = vmatprep.subr.mxu0 0.0
        %1521 = vmatpush2.xpose.msra.mxu0 0.0
        %1522 = vmatprep.subr.mxu0 0.0
        %1523 = vmatpush2.xpose.msra.mxu0 0.0
        %1524 = vmatprep.subr.mxu0 0.0
        %1525 = vmatpush2.xpose.msra.mxu0 0.0
        %1526 = vmatprep.subr.mxu0 0.0
        %1527 = vmatpush2.xpose.msra.mxu0 0.0
        %1528 = vmatprep.subr.mxu0 0.0
        %1529 = vmatpush2.xpose.msra.mxu0 0.0
        %1530 = vmatprep.subr.mxu0 0.0
        %1531 = vmatpush2.xpose.msra.mxu0 0.0
        %1532 = vmatprep.subr.mxu0 0.0
        %1533 = vmatpush2.xpose.msra.mxu0 0.0
        %1534 = vmatprep.subr.mxu0 0.0
        %1535 = vmatpush2.xpose.msra.mxu0 0.0
        %1536 = vmatprep.subr.mxu0 0.0
        %1537 = vmatpush2.xpose.msra.mxu0 0.0
        %1538 = vmatprep.mubr.f32.mxu0 0.0
        %v1539 = vand.u32 %v1319, 4294901760
        %v1540 = vsub.f32 %v1319, %v1539
        %1541 = vmatmul.mubr.f32.gmra.mxu0 %v1540
        %v1542 = vpop.f32.mrf.mxu0
        %v1543 = vadd.f32 %v1469, %v1542
        %v1544 = vpop.f32.mrf.mxu0
        %1545 = vdwg.mxu0
        %1546 = vmatprep.subr.mxu0 0.0
        %1547 = vmatpush1.xpose.msra.mxu0 0.0
        %1548 = vmatprep.subr.mxu0 0.0
        %1549 = vmatpush1.xpose.msra.mxu0 0.0
        %1550 = vmatprep.subr.mxu0 0.0
        %1551 = vmatpush1.xpose.msra.mxu0 0.0
        %1552 = vmatprep.subr.mxu0 0.0
        %1553 = vmatpush1.xpose.msra.mxu0 0.0
        %1554 = vmatprep.subr.mxu0 0.0
        %1555 = vmatpush1.xpose.msra.mxu0 0.0
        %1556 = vmatprep.subr.mxu0 0.0
        %1557 = vmatpush1.xpose.msra.mxu0 0.0
        %1558 = vmatprep.subr.mxu0 0.0
        %1559 = vmatpush1.xpose.msra.mxu0 0.0
        %1560 = vmatprep.subr.mxu0 0.0
        %1561 = vmatpush1.xpose.msra.mxu0 0.0
        %1562 = vmatprep.subr.mxu0 0.0
        %1563 = vmatpush1.xpose.msra.mxu0 0.0
        %1564 = vmatprep.subr.mxu0 0.0
        %1565 = vmatpush1.xpose.msra.mxu0 0.0
        %1566 = vmatprep.subr.mxu0 0.0
        %1567 = vmatpush1.xpose.msra.mxu0 0.0
        %1568 = vmatprep.subr.mxu0 0.0
        %1569 = vmatpush1.xpose.msra.mxu0 0.0
        %1570 = vmatprep.subr.mxu0 0.0
        %1571 = vmatpush1.xpose.msra.mxu0 0.0
        %1572 = vmatprep.subr.mxu0 0.0
        %1573 = vmatpush1.xpose.msra.mxu0 0.0
        %1574 = vmatprep.subr.mxu0 0.0
        %1575 = vmatpush1.xpose.msra.mxu0 0.0
        %1576 = vmatprep.subr.mxu0 0.0
        %v1577 = vand.u32 %v1317, 4294901760
        %1578 = vmatpush1.xpose.msra.mxu0 %v1577
        %1579 = vmatprep.subr.mxu0 0.0
        %1580 = vmatpush2.xpose.msra.mxu0 0.0
        %1581 = vmatprep.subr.mxu0 0.0
        %1582 = vmatpush2.xpose.msra.mxu0 0.0
        %1583 = vmatprep.subr.mxu0 0.0
        %1584 = vmatpush2.xpose.msra.mxu0 0.0
        %1585 = vmatprep.subr.mxu0 0.0
        %1586 = vmatpush2.xpose.msra.mxu0 0.0
        %1587 = vmatprep.subr.mxu0 0.0
        %1588 = vmatpush2.xpose.msra.mxu0 0.0
        %1589 = vmatprep.subr.mxu0 0.0
        %1590 = vmatpush2.xpose.msra.mxu0 0.0
        %1591 = vmatprep.subr.mxu0 0.0
        %1592 = vmatpush2.xpose.msra.mxu0 0.0
        %1593 = vmatprep.subr.mxu0 0.0
        %1594 = vmatpush2.xpose.msra.mxu0 0.0
        %1595 = vmatprep.subr.mxu0 0.0
        %1596 = vmatpush2.xpose.msra.mxu0 0.0
        %1597 = vmatprep.subr.mxu0 0.0
        %1598 = vmatpush2.xpose.msra.mxu0 0.0
        %1599 = vmatprep.subr.mxu0 0.0
        %1600 = vmatpush2.xpose.msra.mxu0 0.0
        %1601 = vmatprep.subr.mxu0 0.0
        %1602 = vmatpush2.xpose.msra.mxu0 0.0
        %1603 = vmatprep.subr.mxu0 0.0
        %1604 = vmatpush2.xpose.msra.mxu0 0.0
        %1605 = vmatprep.subr.mxu0 0.0
        %1606 = vmatpush2.xpose.msra.mxu0 0.0
        %1607 = vmatprep.subr.mxu0 0.0
        %1608 = vmatpush2.xpose.msra.mxu0 0.0
        %1609 = vmatprep.subr.mxu0 0.0
        %1610 = vmatpush2.xpose.msra.mxu0 0.0
        %1611 = vmatprep.mubr.f32.mxu0 0.0
        %v1612 = vand.u32 %v1319, 4294901760
        %v1613 = vsub.f32 %v1319, %v1612
        %v1614 = vand.u32 %v1613, 4294901760
        %1615 = vmatmul.mubr.f32.gmra.mxu0 %v1614
        %v1616 = vpop.f32.mrf.mxu0
        %v1617 = vadd.f32 %v1543, %v1616
        %v1618 = vpop.f32.mrf.mxu0
        %1619 = vdwg.mxu0
        %1620 = vmatprep.subr.mxu0 0.0
        %1621 = vmatpush1.xpose.msra.mxu0 0.0
        %1622 = vmatprep.subr.mxu0 0.0
        %1623 = vmatpush1.xpose.msra.mxu0 0.0
        %1624 = vmatprep.subr.mxu0 0.0
        %1625 = vmatpush1.xpose.msra.mxu0 0.0
        %1626 = vmatprep.subr.mxu0 0.0
        %1627 = vmatpush1.xpose.msra.mxu0 0.0
        %1628 = vmatprep.subr.mxu0 0.0
        %1629 = vmatpush1.xpose.msra.mxu0 0.0
        %1630 = vmatprep.subr.mxu0 0.0
        %1631 = vmatpush1.xpose.msra.mxu0 0.0
        %1632 = vmatprep.subr.mxu0 0.0
        %1633 = vmatpush1.xpose.msra.mxu0 0.0
        %1634 = vmatprep.subr.mxu0 0.0
        %1635 = vmatpush1.xpose.msra.mxu0 0.0
        %1636 = vmatprep.subr.mxu0 0.0
        %1637 = vmatpush1.xpose.msra.mxu0 0.0
        %1638 = vmatprep.subr.mxu0 0.0
        %1639 = vmatpush1.xpose.msra.mxu0 0.0
        %1640 = vmatprep.subr.mxu0 0.0
        %1641 = vmatpush1.xpose.msra.mxu0 0.0
        %1642 = vmatprep.subr.mxu0 0.0
        %1643 = vmatpush1.xpose.msra.mxu0 0.0
        %1644 = vmatprep.subr.mxu0 0.0
        %1645 = vmatpush1.xpose.msra.mxu0 0.0
        %1646 = vmatprep.subr.mxu0 0.0
        %1647 = vmatpush1.xpose.msra.mxu0 0.0
        %1648 = vmatprep.subr.mxu0 0.0
        %1649 = vmatpush1.xpose.msra.mxu0 0.0
        %1650 = vmatprep.subr.mxu0 0.0
        %v1651 = vand.u32 %v1317, 4294901760
        %v1652 = vsub.f32 %v1317, %v1651
        %v1653 = vand.u32 %v1652, 4294901760
        %1654 = vmatpush1.xpose.msra.mxu0 %v1653
        %1655 = vmatprep.subr.mxu0 0.0
        %1656 = vmatpush2.xpose.msra.mxu0 0.0
        %1657 = vmatprep.subr.mxu0 0.0
        %1658 = vmatpush2.xpose.msra.mxu0 0.0
        %1659 = vmatprep.subr.mxu0 0.0
        %1660 = vmatpush2.xpose.msra.mxu0 0.0
        %1661 = vmatprep.subr.mxu0 0.0
        %1662 = vmatpush2.xpose.msra.mxu0 0.0
        %1663 = vmatprep.subr.mxu0 0.0
        %1664 = vmatpush2.xpose.msra.mxu0 0.0
        %1665 = vmatprep.subr.mxu0 0.0
        %1666 = vmatpush2.xpose.msra.mxu0 0.0
        %1667 = vmatprep.subr.mxu0 0.0
        %1668 = vmatpush2.xpose.msra.mxu0 0.0
        %1669 = vmatprep.subr.mxu0 0.0
        %1670 = vmatpush2.xpose.msra.mxu0 0.0
        %1671 = vmatprep.subr.mxu0 0.0
        %1672 = vmatpush2.xpose.msra.mxu0 0.0
        %1673 = vmatprep.subr.mxu0 0.0
        %1674 = vmatpush2.xpose.msra.mxu0 0.0
        %1675 = vmatprep.subr.mxu0 0.0
        %1676 = vmatpush2.xpose.msra.mxu0 0.0
        %1677 = vmatprep.subr.mxu0 0.0
        %1678 = vmatpush2.xpose.msra.mxu0 0.0
        %1679 = vmatprep.subr.mxu0 0.0
        %1680 = vmatpush2.xpose.msra.mxu0 0.0
        %1681 = vmatprep.subr.mxu0 0.0
        %1682 = vmatpush2.xpose.msra.mxu0 0.0
        %1683 = vmatprep.subr.mxu0 0.0
        %1684 = vmatpush2.xpose.msra.mxu0 0.0
        %1685 = vmatprep.subr.mxu0 0.0
        %1686 = vmatpush2.xpose.msra.mxu0 0.0
        %1687 = vmatprep.mubr.f32.mxu0 0.0
        %v1688 = vand.u32 %v1319, 4294901760
        %1689 = vmatmul.mubr.f32.gmra.mxu0 %v1688
        %v1690 = vpop.f32.mrf.mxu0
        %v1691 = vadd.f32 %v1617, %v1690
        %v1692 = vpop.f32.mrf.mxu0
        %1693 = vdwg.mxu0
        %1694 = vmatprep.subr.mxu0 0.0
        %1695 = vmatpush1.xpose.msra.mxu0 0.0
        %1696 = vmatprep.subr.mxu0 0.0
        %1697 = vmatpush1.xpose.msra.mxu0 0.0
        %1698 = vmatprep.subr.mxu0 0.0
        %1699 = vmatpush1.xpose.msra.mxu0 0.0
        %1700 = vmatprep.subr.mxu0 0.0
        %1701 = vmatpush1.xpose.msra.mxu0 0.0
        %1702 = vmatprep.subr.mxu0 0.0
        %1703 = vmatpush1.xpose.msra.mxu0 0.0
        %1704 = vmatprep.subr.mxu0 0.0
        %1705 = vmatpush1.xpose.msra.mxu0 0.0
        %1706 = vmatprep.subr.mxu0 0.0
        %1707 = vmatpush1.xpose.msra.mxu0 0.0
        %1708 = vmatprep.subr.mxu0 0.0
        %1709 = vmatpush1.xpose.msra.mxu0 0.0
        %1710 = vmatprep.subr.mxu0 0.0
        %1711 = vmatpush1.xpose.msra.mxu0 0.0
        %1712 = vmatprep.subr.mxu0 0.0
        %1713 = vmatpush1.xpose.msra.mxu0 0.0
        %1714 = vmatprep.subr.mxu0 0.0
        %1715 = vmatpush1.xpose.msra.mxu0 0.0
        %1716 = vmatprep.subr.mxu0 0.0
        %1717 = vmatpush1.xpose.msra.mxu0 0.0
        %1718 = vmatprep.subr.mxu0 0.0
        %1719 = vmatpush1.xpose.msra.mxu0 0.0
        %1720 = vmatprep.subr.mxu0 0.0
        %1721 = vmatpush1.xpose.msra.mxu0 0.0
        %1722 = vmatprep.subr.mxu0 0.0
        %1723 = vmatpush1.xpose.msra.mxu0 0.0
        %1724 = vmatprep.subr.mxu0 0.0
        %v1725 = vand.u32 %v1317, 4294901760
        %1726 = vmatpush1.xpose.msra.mxu0 %v1725
        %1727 = vmatprep.subr.mxu0 0.0
        %1728 = vmatpush2.xpose.msra.mxu0 0.0
        %1729 = vmatprep.subr.mxu0 0.0
        %1730 = vmatpush2.xpose.msra.mxu0 0.0
        %1731 = vmatprep.subr.mxu0 0.0
        %1732 = vmatpush2.xpose.msra.mxu0 0.0
        %1733 = vmatprep.subr.mxu0 0.0
        %1734 = vmatpush2.xpose.msra.mxu0 0.0
        %1735 = vmatprep.subr.mxu0 0.0
        %1736 = vmatpush2.xpose.msra.mxu0 0.0
        %1737 = vmatprep.subr.mxu0 0.0
        %1738 = vmatpush2.xpose.msra.mxu0 0.0
        %1739 = vmatprep.subr.mxu0 0.0
        %1740 = vmatpush2.xpose.msra.mxu0 0.0
        %1741 = vmatprep.subr.mxu0 0.0
        %1742 = vmatpush2.xpose.msra.mxu0 0.0
        %1743 = vmatprep.subr.mxu0 0.0
        %1744 = vmatpush2.xpose.msra.mxu0 0.0
        %1745 = vmatprep.subr.mxu0 0.0
        %1746 = vmatpush2.xpose.msra.mxu0 0.0
        %1747 = vmatprep.subr.mxu0 0.0
        %1748 = vmatpush2.xpose.msra.mxu0 0.0
        %1749 = vmatprep.subr.mxu0 0.0
        %1750 = vmatpush2.xpose.msra.mxu0 0.0
        %1751 = vmatprep.subr.mxu0 0.0
        %1752 = vmatpush2.xpose.msra.mxu0 0.0
        %1753 = vmatprep.subr.mxu0 0.0
        %1754 = vmatpush2.xpose.msra.mxu0 0.0
        %1755 = vmatprep.subr.mxu0 0.0
        %1756 = vmatpush2.xpose.msra.mxu0 0.0
        %1757 = vmatprep.subr.mxu0 0.0
        %1758 = vmatpush2.xpose.msra.mxu0 0.0
        %1759 = vmatprep.mubr.f32.mxu0 0.0
        %v1760 = vand.u32 %v1319, 4294901760
        %1761 = vmatmul.mubr.f32.gmra.mxu0 %v1760
        %v1762 = vpop.f32.mrf.mxu0
        %v1763 = vadd.f32 %v1691, %v1762
        %v1764 = vpop.f32.mrf.mxu0
        %1765 = vdwg.mxu0
        %v1766 = vld [vmem:[#allocation4] sm:$0xff]
        %vm1767 = vcmask 64512
        %v1768 = vsel %vm1767, %v1763, -inf
        %1769 = vmax.xlane.f32.xlu0 %v1768
        %v1770 = vpop.xlane.xlu0 %1769
        %v1771 = vmax.f32 %v1766, %v1770
        %v1772 = vsub.f32 %v1766, %v1771
        %v1773 = vmul.f32 %v1772, 1.442695
        %v1774 = vpow.pop %v1773
        %1776 = vset.pattern.permute.xlu0 0
        %1777 = vperm.xlu0 %1776, %v1771
        %v1778 = vpop.permute.xlu0 %1777
        %v1780 = vsub.f32 %v1763, %v1778
        %v1781 = vmul.f32 %v1780, 1.442695
        %v1782 = vpow.pop %v1781
        %v1783 = vld [vmem:[#allocation5] sm:$0xff]
        %v1784 = vmul.f32 %v1774, %v1783
        %v1785 = vsel %vm1767, %v1782, 0.0
        %1786 = vadd.xlane.f32.xlu0 %v1785
        %v1787 = vpop.xlane.xlu0 %1786
        %v1788 = vadd.f32 %v1784, %v1787
        %vm1789 = vcmask 7168
        %1790 = vst.msk [vmem:[#allocation5] sm:$0xff] %vm1789, %v1788
        %v1791 = vld [vmem:[#allocation6] sm:$0xff]
        %1793 = vset.pattern.permute.xlu0 0
        %1794 = vperm.xlu0 %1793, %v1774
        %v1795 = vpop.permute.xlu0 %1794
        %v1797 = vmul.f32 %v1795, %v1791
        %v1799 = vsel %vm1767, %v1782, 0
        %1801 = vmatprep.subr.mxu0 0.0
        %1802 = vmatpush1.msra.mxu0 0.0
        %1803 = vmatprep.subr.mxu0 0.0
        %1804 = vmatpush1.msra.mxu0 0.0
        %1805 = vmatprep.subr.mxu0 0.0
        %1806 = vmatpush1.msra.mxu0 0.0
        %1807 = vmatprep.subr.mxu0 0.0
        %1808 = vmatpush1.msra.mxu0 0.0
        %1809 = vmatprep.subr.mxu0 0.0
        %1810 = vmatpush1.msra.mxu0 0.0
        %1811 = vmatprep.subr.mxu0 0.0
        %1812 = vmatpush1.msra.mxu0 0.0
        %1813 = vmatprep.subr.mxu0 0.0
        %1814 = vmatpush1.msra.mxu0 0.0
        %1815 = vmatprep.subr.mxu0 0.0
        %1816 = vmatpush1.msra.mxu0 0.0
        %1817 = vmatprep.subr.mxu0 0.0
        %1818 = vmatpush1.msra.mxu0 0.0
        %1819 = vmatprep.subr.mxu0 0.0
        %1820 = vmatpush1.msra.mxu0 0.0
        %1821 = vmatprep.subr.mxu0 0.0
        %1822 = vmatpush1.msra.mxu0 0.0
        %1823 = vmatprep.subr.mxu0 0.0
        %1824 = vmatpush1.msra.mxu0 0.0
        %1825 = vmatprep.subr.mxu0 0.0
        %1826 = vmatpush1.msra.mxu0 0.0
        %1827 = vmatprep.subr.mxu0 0.0
        %1828 = vmatpush1.msra.mxu0 0.0
        %1829 = vmatprep.subr.mxu0 0.0
        %1830 = vmatpush1.msra.mxu0 0.0
        %1831 = vmatprep.subr.mxu0 0.0
        %v1832 = vand.u32 %v1318, 4294901760
        %1833 = vmatpush1.msra.mxu0 %v1832
        %1834 = vmatprep.subr.mxu0 0.0
        %1835 = vmatpush2.msra.mxu0 0.0
        %1836 = vmatprep.subr.mxu0 0.0
        %1837 = vmatpush2.msra.mxu0 0.0
        %1838 = vmatprep.subr.mxu0 0.0
        %1839 = vmatpush2.msra.mxu0 0.0
        %1840 = vmatprep.subr.mxu0 0.0
        %1841 = vmatpush2.msra.mxu0 0.0
        %1842 = vmatprep.subr.mxu0 0.0
        %1843 = vmatpush2.msra.mxu0 0.0
        %1844 = vmatprep.subr.mxu0 0.0
        %1845 = vmatpush2.msra.mxu0 0.0
        %1846 = vmatprep.subr.mxu0 0.0
        %1847 = vmatpush2.msra.mxu0 0.0
        %1848 = vmatprep.subr.mxu0 0.0
        %1849 = vmatpush2.msra.mxu0 0.0
        %1850 = vmatprep.subr.mxu0 0.0
        %1851 = vmatpush2.msra.mxu0 0.0
        %1852 = vmatprep.subr.mxu0 0.0
        %1853 = vmatpush2.msra.mxu0 0.0
        %1854 = vmatprep.subr.mxu0 0.0
        %1855 = vmatpush2.msra.mxu0 0.0
        %1856 = vmatprep.subr.mxu0 0.0
        %1857 = vmatpush2.msra.mxu0 0.0
        %1858 = vmatprep.subr.mxu0 0.0
        %1859 = vmatpush2.msra.mxu0 0.0
        %1860 = vmatprep.subr.mxu0 0.0
        %1861 = vmatpush2.msra.mxu0 0.0
        %1862 = vmatprep.subr.mxu0 0.0
        %1863 = vmatpush2.msra.mxu0 0.0
        %1864 = vmatprep.subr.mxu0 0.0
        %1865 = vmatpush2.msra.mxu0 0.0
        %1866 = vmatprep.mubr.f32.mxu0 0.0
        %v1867 = vand.u32 %v1799, 4294901760
        %v1868 = vsub.f32 %v1799, %v1867
        %v1869 = vand.u32 %v1868, 4294901760
        %v1870 = vsub.f32 %v1868, %v1869
        %v1871 = vand.u32 %v1870, 4294901760
        %1872 = vmatmul.mubr.f32.gmra.mxu0 %v1871
        %v1873 = vpop.f32.mrf.mxu0
        %v1874 = vadd.f32 0.0, %v1873
        %v1875 = vpop.f32.mrf.mxu0
        %1876 = vdwg.mxu0
        %1877 = vmatprep.subr.mxu0 0.0
        %1878 = vmatpush1.msra.mxu0 0.0
        %1879 = vmatprep.subr.mxu0 0.0
        %1880 = vmatpush1.msra.mxu0 0.0
        %1881 = vmatprep.subr.mxu0 0.0
        %1882 = vmatpush1.msra.mxu0 0.0
        %1883 = vmatprep.subr.mxu0 0.0
        %1884 = vmatpush1.msra.mxu0 0.0
        %1885 = vmatprep.subr.mxu0 0.0
        %1886 = vmatpush1.msra.mxu0 0.0
        %1887 = vmatprep.subr.mxu0 0.0
        %1888 = vmatpush1.msra.mxu0 0.0
        %1889 = vmatprep.subr.mxu0 0.0
        %1890 = vmatpush1.msra.mxu0 0.0
        %1891 = vmatprep.subr.mxu0 0.0
        %1892 = vmatpush1.msra.mxu0 0.0
        %1893 = vmatprep.subr.mxu0 0.0
        %1894 = vmatpush1.msra.mxu0 0.0
        %1895 = vmatprep.subr.mxu0 0.0
        %1896 = vmatpush1.msra.mxu0 0.0
        %1897 = vmatprep.subr.mxu0 0.0
        %1898 = vmatpush1.msra.mxu0 0.0
        %1899 = vmatprep.subr.mxu0 0.0
        %1900 = vmatpush1.msra.mxu0 0.0
        %1901 = vmatprep.subr.mxu0 0.0
        %1902 = vmatpush1.msra.mxu0 0.0
        %1903 = vmatprep.subr.mxu0 0.0
        %1904 = vmatpush1.msra.mxu0 0.0
        %1905 = vmatprep.subr.mxu0 0.0
        %1906 = vmatpush1.msra.mxu0 0.0
        %1907 = vmatprep.subr.mxu0 0.0
        %v1908 = vand.u32 %v1318, 4294901760
        %v1909 = vsub.f32 %v1318, %v1908
        %v1910 = vand.u32 %v1909, 4294901760
        %v1911 = vsub.f32 %v1909, %v1910
        %v1912 = vand.u32 %v1911, 4294901760
        %1913 = vmatpush1.msra.mxu0 %v1912
        %1914 = vmatprep.subr.mxu0 0.0
        %1915 = vmatpush2.msra.mxu0 0.0
        %1916 = vmatprep.subr.mxu0 0.0
        %1917 = vmatpush2.msra.mxu0 0.0
        %1918 = vmatprep.subr.mxu0 0.0
        %1919 = vmatpush2.msra.mxu0 0.0
        %1920 = vmatprep.subr.mxu0 0.0
        %1921 = vmatpush2.msra.mxu0 0.0
        %1922 = vmatprep.subr.mxu0 0.0
        %1923 = vmatpush2.msra.mxu0 0.0
        %1924 = vmatprep.subr.mxu0 0.0
        %1925 = vmatpush2.msra.mxu0 0.0
        %1926 = vmatprep.subr.mxu0 0.0
        %1927 = vmatpush2.msra.mxu0 0.0
        %1928 = vmatprep.subr.mxu0 0.0
        %1929 = vmatpush2.msra.mxu0 0.0
        %1930 = vmatprep.subr.mxu0 0.0
        %1931 = vmatpush2.msra.mxu0 0.0
        %1932 = vmatprep.subr.mxu0 0.0
        %1933 = vmatpush2.msra.mxu0 0.0
        %1934 = vmatprep.subr.mxu0 0.0
        %1935 = vmatpush2.msra.mxu0 0.0
        %1936 = vmatprep.subr.mxu0 0.0
        %1937 = vmatpush2.msra.mxu0 0.0
        %1938 = vmatprep.subr.mxu0 0.0
        %1939 = vmatpush2.msra.mxu0 0.0
        %1940 = vmatprep.subr.mxu0 0.0
        %1941 = vmatpush2.msra.mxu0 0.0
        %1942 = vmatprep.subr.mxu0 0.0
        %1943 = vmatpush2.msra.mxu0 0.0
        %1944 = vmatprep.subr.mxu0 0.0
        %1945 = vmatpush2.msra.mxu0 0.0
        %1946 = vmatprep.mubr.f32.mxu0 0.0
        %v1947 = vand.u32 %v1799, 4294901760
        %1948 = vmatmul.mubr.f32.gmra.mxu0 %v1947
        %v1949 = vpop.f32.mrf.mxu0
        %v1950 = vadd.f32 %v1874, %v1949
        %v1951 = vpop.f32.mrf.mxu0
        %1952 = vdwg.mxu0
        %1953 = vmatprep.subr.mxu0 0.0
        %1954 = vmatpush1.msra.mxu0 0.0
        %1955 = vmatprep.subr.mxu0 0.0
        %1956 = vmatpush1.msra.mxu0 0.0
        %1957 = vmatprep.subr.mxu0 0.0
        %1958 = vmatpush1.msra.mxu0 0.0
        %1959 = vmatprep.subr.mxu0 0.0
        %1960 = vmatpush1.msra.mxu0 0.0
        %1961 = vmatprep.subr.mxu0 0.0
        %1962 = vmatpush1.msra.mxu0 0.0
        %1963 = vmatprep.subr.mxu0 0.0
        %1964 = vmatpush1.msra.mxu0 0.0
        %1965 = vmatprep.subr.mxu0 0.0
        %1966 = vmatpush1.msra.mxu0 0.0
        %1967 = vmatprep.subr.mxu0 0.0
        %1968 = vmatpush1.msra.mxu0 0.0
        %1969 = vmatprep.subr.mxu0 0.0
        %1970 = vmatpush1.msra.mxu0 0.0
        %1971 = vmatprep.subr.mxu0 0.0
        %1972 = vmatpush1.msra.mxu0 0.0
        %1973 = vmatprep.subr.mxu0 0.0
        %1974 = vmatpush1.msra.mxu0 0.0
        %1975 = vmatprep.subr.mxu0 0.0
        %1976 = vmatpush1.msra.mxu0 0.0
        %1977 = vmatprep.subr.mxu0 0.0
        %1978 = vmatpush1.msra.mxu0 0.0
        %1979 = vmatprep.subr.mxu0 0.0
        %1980 = vmatpush1.msra.mxu0 0.0
        %1981 = vmatprep.subr.mxu0 0.0
        %1982 = vmatpush1.msra.mxu0 0.0
        %1983 = vmatprep.subr.mxu0 0.0
        %v1984 = vand.u32 %v1318, 4294901760
        %v1985 = vsub.f32 %v1318, %v1984
        %1986 = vmatpush1.msra.mxu0 %v1985
        %1987 = vmatprep.subr.mxu0 0.0
        %1988 = vmatpush2.msra.mxu0 0.0
        %1989 = vmatprep.subr.mxu0 0.0
        %1990 = vmatpush2.msra.mxu0 0.0
        %1991 = vmatprep.subr.mxu0 0.0
        %1992 = vmatpush2.msra.mxu0 0.0
        %1993 = vmatprep.subr.mxu0 0.0
        %1994 = vmatpush2.msra.mxu0 0.0
        %1995 = vmatprep.subr.mxu0 0.0
        %1996 = vmatpush2.msra.mxu0 0.0
        %1997 = vmatprep.subr.mxu0 0.0
        %1998 = vmatpush2.msra.mxu0 0.0
        %1999 = vmatprep.subr.mxu0 0.0
        %2000 = vmatpush2.msra.mxu0 0.0
        %2001 = vmatprep.subr.mxu0 0.0
        %2002 = vmatpush2.msra.mxu0 0.0
        %2003 = vmatprep.subr.mxu0 0.0
        %2004 = vmatpush2.msra.mxu0 0.0
        %2005 = vmatprep.subr.mxu0 0.0
        %2006 = vmatpush2.msra.mxu0 0.0
        %2007 = vmatprep.subr.mxu0 0.0
        %2008 = vmatpush2.msra.mxu0 0.0
        %2009 = vmatprep.subr.mxu0 0.0
        %2010 = vmatpush2.msra.mxu0 0.0
        %2011 = vmatprep.subr.mxu0 0.0
        %2012 = vmatpush2.msra.mxu0 0.0
        %2013 = vmatprep.subr.mxu0 0.0
        %2014 = vmatpush2.msra.mxu0 0.0
        %2015 = vmatprep.subr.mxu0 0.0
        %2016 = vmatpush2.msra.mxu0 0.0
        %2017 = vmatprep.subr.mxu0 0.0
        %2018 = vmatpush2.msra.mxu0 0.0
        %2019 = vmatprep.mubr.f32.mxu0 0.0
        %v2020 = vand.u32 %v1799, 4294901760
        %v2021 = vsub.f32 %v1799, %v2020
        %2022 = vmatmul.mubr.f32.gmra.mxu0 %v2021
        %v2023 = vpop.f32.mrf.mxu0
        %v2024 = vadd.f32 %v1950, %v2023
        %v2025 = vpop.f32.mrf.mxu0
        %2026 = vdwg.mxu0
        %2027 = vmatprep.subr.mxu0 0.0
        %2028 = vmatpush1.msra.mxu0 0.0
        %2029 = vmatprep.subr.mxu0 0.0
        %2030 = vmatpush1.msra.mxu0 0.0
        %2031 = vmatprep.subr.mxu0 0.0
        %2032 = vmatpush1.msra.mxu0 0.0
        %2033 = vmatprep.subr.mxu0 0.0
        %2034 = vmatpush1.msra.mxu0 0.0
        %2035 = vmatprep.subr.mxu0 0.0
        %2036 = vmatpush1.msra.mxu0 0.0
        %2037 = vmatprep.subr.mxu0 0.0
        %2038 = vmatpush1.msra.mxu0 0.0
        %2039 = vmatprep.subr.mxu0 0.0
        %2040 = vmatpush1.msra.mxu0 0.0
        %2041 = vmatprep.subr.mxu0 0.0
        %2042 = vmatpush1.msra.mxu0 0.0
        %2043 = vmatprep.subr.mxu0 0.0
        %2044 = vmatpush1.msra.mxu0 0.0
        %2045 = vmatprep.subr.mxu0 0.0
        %2046 = vmatpush1.msra.mxu0 0.0
        %2047 = vmatprep.subr.mxu0 0.0
        %2048 = vmatpush1.msra.mxu0 0.0
        %2049 = vmatprep.subr.mxu0 0.0
        %2050 = vmatpush1.msra.mxu0 0.0
        %2051 = vmatprep.subr.mxu0 0.0
        %2052 = vmatpush1.msra.mxu0 0.0
        %2053 = vmatprep.subr.mxu0 0.0
        %2054 = vmatpush1.msra.mxu0 0.0
        %2055 = vmatprep.subr.mxu0 0.0
        %2056 = vmatpush1.msra.mxu0 0.0
        %2057 = vmatprep.subr.mxu0 0.0
        %v2058 = vand.u32 %v1318, 4294901760
        %2059 = vmatpush1.msra.mxu0 %v2058
        %2060 = vmatprep.subr.mxu0 0.0
        %2061 = vmatpush2.msra.mxu0 0.0
        %2062 = vmatprep.subr.mxu0 0.0
        %2063 = vmatpush2.msra.mxu0 0.0
        %2064 = vmatprep.subr.mxu0 0.0
        %2065 = vmatpush2.msra.mxu0 0.0
        %2066 = vmatprep.subr.mxu0 0.0
        %2067 = vmatpush2.msra.mxu0 0.0
        %2068 = vmatprep.subr.mxu0 0.0
        %2069 = vmatpush2.msra.mxu0 0.0
        %2070 = vmatprep.subr.mxu0 0.0
        %2071 = vmatpush2.msra.mxu0 0.0
        %2072 = vmatprep.subr.mxu0 0.0
        %2073 = vmatpush2.msra.mxu0 0.0
        %2074 = vmatprep.subr.mxu0 0.0
        %2075 = vmatpush2.msra.mxu0 0.0
        %2076 = vmatprep.subr.mxu0 0.0
        %2077 = vmatpush2.msra.mxu0 0.0
        %2078 = vmatprep.subr.mxu0 0.0
        %2079 = vmatpush2.msra.mxu0 0.0
        %2080 = vmatprep.subr.mxu0 0.0
        %2081 = vmatpush2.msra.mxu0 0.0
        %2082 = vmatprep.subr.mxu0 0.0
        %2083 = vmatpush2.msra.mxu0 0.0
        %2084 = vmatprep.subr.mxu0 0.0
        %2085 = vmatpush2.msra.mxu0 0.0
        %2086 = vmatprep.subr.mxu0 0.0
        %2087 = vmatpush2.msra.mxu0 0.0
        %2088 = vmatprep.subr.mxu0 0.0
        %2089 = vmatpush2.msra.mxu0 0.0
        %2090 = vmatprep.subr.mxu0 0.0
        %2091 = vmatpush2.msra.mxu0 0.0
        %2092 = vmatprep.mubr.f32.mxu0 0.0
        %v2093 = vand.u32 %v1799, 4294901760
        %v2094 = vsub.f32 %v1799, %v2093
        %v2095 = vand.u32 %v2094, 4294901760
        %2096 = vmatmul.mubr.f32.gmra.mxu0 %v2095
        %v2097 = vpop.f32.mrf.mxu0
        %v2098 = vadd.f32 %v2024, %v2097
        %v2099 = vpop.f32.mrf.mxu0
        %2100 = vdwg.mxu0
        %2101 = vmatprep.subr.mxu0 0.0
        %2102 = vmatpush1.msra.mxu0 0.0
        %2103 = vmatprep.subr.mxu0 0.0
        %2104 = vmatpush1.msra.mxu0 0.0
        %2105 = vmatprep.subr.mxu0 0.0
        %2106 = vmatpush1.msra.mxu0 0.0
        %2107 = vmatprep.subr.mxu0 0.0
        %2108 = vmatpush1.msra.mxu0 0.0
        %2109 = vmatprep.subr.mxu0 0.0
        %2110 = vmatpush1.msra.mxu0 0.0
        %2111 = vmatprep.subr.mxu0 0.0
        %2112 = vmatpush1.msra.mxu0 0.0
        %2113 = vmatprep.subr.mxu0 0.0
        %2114 = vmatpush1.msra.mxu0 0.0
        %2115 = vmatprep.subr.mxu0 0.0
        %2116 = vmatpush1.msra.mxu0 0.0
        %2117 = vmatprep.subr.mxu0 0.0
        %2118 = vmatpush1.msra.mxu0 0.0
        %2119 = vmatprep.subr.mxu0 0.0
        %2120 = vmatpush1.msra.mxu0 0.0
        %2121 = vmatprep.subr.mxu0 0.0
        %2122 = vmatpush1.msra.mxu0 0.0
        %2123 = vmatprep.subr.mxu0 0.0
        %2124 = vmatpush1.msra.mxu0 0.0
        %2125 = vmatprep.subr.mxu0 0.0
        %2126 = vmatpush1.msra.mxu0 0.0
        %2127 = vmatprep.subr.mxu0 0.0
        %2128 = vmatpush1.msra.mxu0 0.0
        %2129 = vmatprep.subr.mxu0 0.0
        %2130 = vmatpush1.msra.mxu0 0.0
        %2131 = vmatprep.subr.mxu0 0.0
        %v2132 = vand.u32 %v1318, 4294901760
        %v2133 = vsub.f32 %v1318, %v2132
        %v2134 = vand.u32 %v2133, 4294901760
        %2135 = vmatpush1.msra.mxu0 %v2134
        %2136 = vmatprep.subr.mxu0 0.0
        %2137 = vmatpush2.msra.mxu0 0.0
        %2138 = vmatprep.subr.mxu0 0.0
        %2139 = vmatpush2.msra.mxu0 0.0
        %2140 = vmatprep.subr.mxu0 0.0
        %2141 = vmatpush2.msra.mxu0 0.0
        %2142 = vmatprep.subr.mxu0 0.0
        %2143 = vmatpush2.msra.mxu0 0.0
        %2144 = vmatprep.subr.mxu0 0.0
        %2145 = vmatpush2.msra.mxu0 0.0
        %2146 = vmatprep.subr.mxu0 0.0
        %2147 = vmatpush2.msra.mxu0 0.0
        %2148 = vmatprep.subr.mxu0 0.0
        %2149 = vmatpush2.msra.mxu0 0.0
        %2150 = vmatprep.subr.mxu0 0.0
        %2151 = vmatpush2.msra.mxu0 0.0
        %2152 = vmatprep.subr.mxu0 0.0
        %2153 = vmatpush2.msra.mxu0 0.0
        %2154 = vmatprep.subr.mxu0 0.0
        %2155 = vmatpush2.msra.mxu0 0.0
        %2156 = vmatprep.subr.mxu0 0.0
        %2157 = vmatpush2.msra.mxu0 0.0
        %2158 = vmatprep.subr.mxu0 0.0
        %2159 = vmatpush2.msra.mxu0 0.0
        %2160 = vmatprep.subr.mxu0 0.0
        %2161 = vmatpush2.msra.mxu0 0.0
        %2162 = vmatprep.subr.mxu0 0.0
        %2163 = vmatpush2.msra.mxu0 0.0
        %2164 = vmatprep.subr.mxu0 0.0
        %2165 = vmatpush2.msra.mxu0 0.0
        %2166 = vmatprep.subr.mxu0 0.0
        %2167 = vmatpush2.msra.mxu0 0.0
        %2168 = vmatprep.mubr.f32.mxu0 0.0
        %v2169 = vand.u32 %v1799, 4294901760
        %2170 = vmatmul.mubr.f32.gmra.mxu0 %v2169
        %v2171 = vpop.f32.mrf.mxu0
        %v2172 = vadd.f32 %v2098, %v2171
        %v2173 = vpop.f32.mrf.mxu0
        %2174 = vdwg.mxu0
        %2175 = vmatprep.subr.mxu0 0.0
        %2176 = vmatpush1.msra.mxu0 0.0
        %2177 = vmatprep.subr.mxu0 0.0
        %2178 = vmatpush1.msra.mxu0 0.0
        %2179 = vmatprep.subr.mxu0 0.0
        %2180 = vmatpush1.msra.mxu0 0.0
        %2181 = vmatprep.subr.mxu0 0.0
        %2182 = vmatpush1.msra.mxu0 0.0
        %2183 = vmatprep.subr.mxu0 0.0
        %2184 = vmatpush1.msra.mxu0 0.0
        %2185 = vmatprep.subr.mxu0 0.0
        %2186 = vmatpush1.msra.mxu0 0.0
        %2187 = vmatprep.subr.mxu0 0.0
        %2188 = vmatpush1.msra.mxu0 0.0
        %2189 = vmatprep.subr.mxu0 0.0
        %2190 = vmatpush1.msra.mxu0 0.0
        %2191 = vmatprep.subr.mxu0 0.0
        %2192 = vmatpush1.msra.mxu0 0.0
        %2193 = vmatprep.subr.mxu0 0.0
        %2194 = vmatpush1.msra.mxu0 0.0
        %2195 = vmatprep.subr.mxu0 0.0
        %2196 = vmatpush1.msra.mxu0 0.0
        %2197 = vmatprep.subr.mxu0 0.0
        %2198 = vmatpush1.msra.mxu0 0.0
        %2199 = vmatprep.subr.mxu0 0.0
        %2200 = vmatpush1.msra.mxu0 0.0
        %2201 = vmatprep.subr.mxu0 0.0
        %2202 = vmatpush1.msra.mxu0 0.0
        %2203 = vmatprep.subr.mxu0 0.0
        %2204 = vmatpush1.msra.mxu0 0.0
        %2205 = vmatprep.subr.mxu0 0.0
        %v2206 = vand.u32 %v1318, 4294901760
        %2207 = vmatpush1.msra.mxu0 %v2206
        %2208 = vmatprep.subr.mxu0 0.0
        %2209 = vmatpush2.msra.mxu0 0.0
        %2210 = vmatprep.subr.mxu0 0.0
        %2211 = vmatpush2.msra.mxu0 0.0
        %2212 = vmatprep.subr.mxu0 0.0
        %2213 = vmatpush2.msra.mxu0 0.0
        %2214 = vmatprep.subr.mxu0 0.0
        %2215 = vmatpush2.msra.mxu0 0.0
        %2216 = vmatprep.subr.mxu0 0.0
        %2217 = vmatpush2.msra.mxu0 0.0
        %2218 = vmatprep.subr.mxu0 0.0
        %2219 = vmatpush2.msra.mxu0 0.0
        %2220 = vmatprep.subr.mxu0 0.0
        %2221 = vmatpush2.msra.mxu0 0.0
        %2222 = vmatprep.subr.mxu0 0.0
        %2223 = vmatpush2.msra.mxu0 0.0
        %2224 = vmatprep.subr.mxu0 0.0
        %2225 = vmatpush2.msra.mxu0 0.0
        %2226 = vmatprep.subr.mxu0 0.0
        %2227 = vmatpush2.msra.mxu0 0.0
        %2228 = vmatprep.subr.mxu0 0.0
        %2229 = vmatpush2.msra.mxu0 0.0
        %2230 = vmatprep.subr.mxu0 0.0
        %2231 = vmatpush2.msra.mxu0 0.0
        %2232 = vmatprep.subr.mxu0 0.0
        %2233 = vmatpush2.msra.mxu0 0.0
        %2234 = vmatprep.subr.mxu0 0.0
        %2235 = vmatpush2.msra.mxu0 0.0
        %2236 = vmatprep.subr.mxu0 0.0
        %2237 = vmatpush2.msra.mxu0 0.0
        %2238 = vmatprep.subr.mxu0 0.0
        %2239 = vmatpush2.msra.mxu0 0.0
        %2240 = vmatprep.mubr.f32.mxu0 0.0
        %v2241 = vand.u32 %v1799, 4294901760
        %2242 = vmatmul.mubr.f32.gmra.mxu0 %v2241
        %v2243 = vpop.f32.mrf.mxu0
        %v2244 = vadd.f32 %v2172, %v2243
        %v2245 = vpop.f32.mrf.mxu0
        %2246 = vdwg.mxu0
        %v2247 = vadd.f32 %v1797, %v2244
        %2248 = vst [vmem:[#allocation6] sm:$0xff] %v2247
        %2249 = vst.msk [vmem:[#allocation4] sm:$0xff] %vm1789, %v1771
        // Predicated region
        $region57: #{tpu_custom_call.1} parent=35 // pred_check
          %p2250 = pneg %p299
        $region58: #{tpu_custom_call.1} parent=35 // pred_check_branch
          %2252 = sbr.rel (%p2250) target = $region60
        $region59: #{tpu_custom_call.1} parent=35 // pred_region
          %v2253 = vld [vmem:[#allocation5] sm:$0xff]
          %v2254 = vrcp.pop %v2253
          %v2255 = vld [vmem:[#allocation6] sm:$0xff]
          %2257 = vset.pattern.permute.xlu0 0
          %2258 = vperm.xlu0 %2257, %v2254
          %v2259 = vpop.permute.xlu0 %2258
          %v2261 = vmul.f32 %v2255, %v2259
          %2262 = vst [vmem:[%s296] sm:$0xff] %v2261
        $region60: #{tpu_custom_call.1} parent=35 // pred_fallthru
          _
        %s2263 = sand.u32 %s155, 1
        %s2264 = scalar_lea.sflag [#allocation9], %s2263
        %s2265 = sand.u32 %s155, 1
        %s2266 = smul.addr %s2265, 8
        %s2267 = scalar_lea.vmem [#allocation13], %s2266
        // Predicated region
        $region61: #{tpu_custom_call.1} parent=35 // pred_check
          %p2268 = pneg %p165
        $region62: #{tpu_custom_call.1} parent=35 // pred_check_branch
          %2270 = sbr.rel (%p2268) target = $region64
        $region63: #{tpu_custom_call.1} parent=35 // pred_region
          %s2272 = ssub.s32 128, 128
          %2273 = vsyncadd %s2264, %s2272
          %s2274 = sadd.s32 %s30, %s29
          %s2275 = smul.addr %s2274, 128
          %s2276 = scalar_lea.hbm %s4, %s2275
          %s2278 = sshll.u32 %s2267, 4
          %s2279 = int_to_ptr.vmem [resolvable:$true] %s2278
          %2281 = dma.vmem_to_hbm [thread:$0]  %s2279, 128, %s2276, %s2264
        $region64: #{tpu_custom_call.1} parent=35 // pred_fallthru
          _
      $region36: #{tpu_custom_call.1} parent=5 // pred_fallthru
        _
      %p2282 = scmp.le.s32.totalorder 2, %s19
      // Predicated region
      $region65: #{tpu_custom_call.1} parent=5 // pred_check
        %p2283 = pneg %p2282
      $region66: #{tpu_custom_call.1} parent=5 // pred_check_branch
        %2285 = sbr.rel (%p2283) target = $region68
      $region67: #{tpu_custom_call.1} parent=5 // pred_region
        %s2286 = ssub.s32 %s19, 2
        // Predicated region
        $region69: #{tpu_custom_call.1} parent=67 // pred_check
          %p2287 = pneg %p171
        $region70: #{tpu_custom_call.1} parent=67 // pred_check_branch
          %2289 = sbr.rel (%p2287) target = $region72
        $region71: #{tpu_custom_call.1} parent=67 // pred_region
          %s2290 = sand.u32 %s156, 1
          %s2291 = scalar_lea.sflag [#allocation9], %s2290
          %s2292 = sand.u32 %s156, 1
          %s2293 = smul.addr %s2292, 8
          %s2294 = scalar_lea.vmem [#allocation13], %s2293
          %2295 = dma.done %s2291, 128
        $region72: #{tpu_custom_call.1} parent=67 // pred_fallthru
          _
      $region68: #{tpu_custom_call.1} parent=5 // pred_fallthru
        _
    $region6: #{tpu_custom_call.1} parent=1 // loop_footer
      %s23 = sadd.s32 1, %s19
    $region7: #{tpu_custom_call.1} parent=1 // loop_footer_branch
      %18 = sbr.rel target = $region3
    $region8: #{tpu_custom_call.1} parent=1 // loop_exit
      _
    %2296 = vsyncpa [#allocation8], 1
    %s2297 = scalar_lea.sflag [#allocation8], 1
    %2298 = vsyncpa %s2297, 1
    %2299 = vsyncpa [#allocation11], 1
    %s2300 = scalar_lea.sflag [#allocation11], 1
    %2301 = vsyncpa %s2300, 1
    %2302 = vsyncpa [#allocation9], 1
    %s2303 = scalar_lea.sflag [#allocation9], 1
    %2304 = vsyncpa %s2303, 1

// kernel: tpu_custom_call.1
$region0: #{tpu_custom_call.1}
  #allocation0 [shape = 'u32[]', space=smem, size = 0x4, offset = 0x4, fixed_abs, tag = 'smem constant byte address 0x4 - core index']
  #allocation1 [shape = 'u32[144,128]{1,0:T(1,128)}', space=vmem, size = 0x12000, scoped, tag = 'internal scratch']
  #allocation2 [shape = 'f32[8,128]{1,0:T(8,128)}', space=vmem, size = 0x1000, scoped, tag = 'scratch operand']
  #allocation3 [shape = 'f32[1,8,256]{2,1,0:T(8,128)}', space=vmem, size = 0x2000, scoped, tag = 'scratch operand']
  #allocation4 [shape = 'f32[8,1]{1,0:T(8,128)}', space=vmem, size = 0x1000, scoped, tag = 'scratch operand']
  #allocation5 [shape = 'f32[8,1]{1,0:T(8,128)}', space=vmem, size = 0x1000, scoped, tag = 'scratch operand']
  #allocation6 [shape = 'f32[8,128]{1,0:T(8,128)}', space=vmem, size = 0x1000, scoped, tag = 'scratch operand']
  %s0 = inlined_call_operand.hbm [shape: f32[2,8,9], index: 0, kind: input, shape index: {}]
  %s1 = inlined_call_operand.hbm [shape: f32[2,8,9], index: 1, kind: input, shape index: {}]
  %s2 = inlined_call_operand.hbm [shape: f32[9,384], index: 2, kind: input, shape index: {}]
  %s3 = inlined_call_operand.vmem [shape: f32[1,384], index: 3, kind: input, shape index: {}]
  %s4 = inlined_call_operand.hbm [shape: f32[2,8,128], index: 4, kind: output, shape index: {}]
  %s5 = sld [smem:[#allocation0]]
  $region73: #{tpu_custom_call.1} parent=0
    _
  %s7 = ssub.s32 1, %s5
  %s8 = scalar_select 0, %s7, %s5
  $region1: #{tpu_custom_call.1} parent=0
    #allocation7 [shape = 'u8[8192]{0}', space=vmem, size = 0x2000, scoped, tag = 'input window, operand 0']
    #allocation8 [shape = 's32[2]{0}', space=sflag, size = 0x8, scoped, tag = 'scoped memory for tpu_custom_call.1']
    #allocation9 [shape = 's32[2]{0}', space=sflag, size = 0x8, scoped, tag = 'scoped memory for tpu_custom_call.1']
    #allocation10 [shape = 'u8[8192]{0}', space=vmem, size = 0x2000, scoped, tag = 'input window, operand 1']
    #allocation11 [shape = 's32[2]{0}', space=sflag, size = 0x8, scoped, tag = 'scoped memory for tpu_custom_call.1']
    #allocation12 [shape = 'u8[24576]{0}', space=vmem, size = 0x6000, scoped, tag = 'input window, operand 2, single buffered']
    #allocation13 [shape = 'u8[8192]{0}', space=vmem, size = 0x2000, scoped, tag = 'output window, operand 0']
    %9 = vsyncpa [#allocation8], 0
    %s10 = scalar_lea.sflag [#allocation8], 1
    %11 = vsyncpa %s10, 0
    %12 = vsyncpa [#allocation11], 0
    %s13 = scalar_lea.sflag [#allocation11], 1
    %14 = vsyncpa %s13, 0
    %15 = vsyncpa [#allocation9], 0
    %s16 = scalar_lea.sflag [#allocation9], 1
    %17 = vsyncpa %s16, 0
    loop: start=0, step=1, limit=4
    $region2: #{tpu_custom_call.1} parent=1 // loop_pre_header
      _
    $region3: #{tpu_custom_call.1} parent=1 // loop_header
      %s19 = sphi 0, %s23
      %p20 = scmp.ge.s32.totalorder %s19, 4
      %s26 = sphi 0, %s45
      %s27 = sphi 0, %s41
      %s28 = sphi 0, %s37
      %s29 = sphi 0, %s26
      %s30 = sphi 0, %s27
      %s31 = sphi 0, %s28
      %s32 = sphi 0, %s29
      %s33 = sphi 0, %s30
      %s34 = sphi 0, %s31
      %s50 = sphi 0, %s52
      %s53 = sphi 0, %s50
      %s54 = sphi 0, %s53
      %s70 = sphi 0, %s54
      %s82 = sphi 0, %s84
      %s85 = sphi 0, %s82
      %s86 = sphi 0, %s85
      %s102 = sphi 0, %s86
      %s106 = sphi 0, %s106
      %s108 = sphi 0, %s106
      %s109 = sphi 0, %s108
      %s123 = sphi 0, %s109
      %s127 = sphi 0, %s127
      %s129 = sphi 0, %s127
      %s130 = sphi 0, %s129
      %s144 = sphi 0, %s130
      %s152 = sphi 0, %s154
      %s155 = sphi 0, %s152
      %s156 = sphi 0, %s155
      %s172 = sphi 0, %s156
    $region4: #{tpu_custom_call.1} parent=1 // loop_header_branch
      %22 = sbr.rel (%p20) target = $region8
    $region5: #{tpu_custom_call.1} parent=1 // loop_body
      %s24 = ssub.s32 %s19, 1
      %s25 = ssub.s32 %s19, 2
      %s35 = sadd.s32 1, %s28
      %p36 = scmp.ge.s32.totalorder %s35, 1
      %s37 = scalar_select %p36, 0, %s35
      %s38 = sadd.s32 1, %s27
      %s39 = scalar_select %p36, %s38, %s27
      %p40 = scmp.ge.s32.totalorder %s39, 1
      %s41 = scalar_select %p40, 0, %s39
      %s42 = sadd.s32 1, %s26
      %s43 = scalar_select %p40, %s42, %s26
      %p44 = scmp.ge.s32.totalorder %s43, 2
      %s45 = scalar_select %p44, 0, %s43
      %s46 = ssub.s32 %s26, %s45
      %s47 = ssub.s32 %s27, %s41
      %s48 = sor.u32 %s46, %s47
      %p49 = scmp.eq.s32.totalorder %s48, 0
      %s51 = sadd.s32 %s50, 1
      %s52 = scalar_select %p49, %s50, %s51
      %p55 = pneg %p49
      %p56 = scmp.eq.s32.totalorder %s19, 1
      %p57 = por %p55, %p56
      %p58 = scmp.ne.s32.totalorder %s50, %s53
      %p59 = scmp.eq.s32.totalorder %s19, 0
      %p60 = por %p58, %p59
      %p61 = scmp.ne.s32.totalorder %s50, %s53
      %p62 = scmp.eq.s32.totalorder %s24, 1
      %p63 = por %p61, %p62
      %p64 = scmp.ne.s32.totalorder %s53, %s54
      %p65 = scmp.eq.s32.totalorder %s24, 0
      %p66 = por %p64, %p65
      %p67 = scmp.ne.s32.totalorder %s53, %s54
      %p68 = scmp.eq.s32.totalorder %s25, 1
      %p69 = por %p67, %p68
      %p71 = scmp.ne.s32.totalorder %s54, %s70
      %p72 = scmp.eq.s32.totalorder %s25, 0
      %p73 = por %p71, %p72
      %p74 = scmp.eq.s32.totalorder %s27, 0
      %s75 = scalar_select %p74, %s28, 0
      %p76 = scmp.eq.s32.totalorder %s41, 0
      %s77 = scalar_select %p76, %s37, 0
      %s78 = ssub.s32 %s26, %s45
      %s79 = ssub.s32 %s75, %s77
      %s80 = sor.u32 %s78, %s79
      %p81 = scmp.eq.s32.totalorder %s80, 0
      %s83 = sadd.s32 %s82, 1
      %s84 = scalar_select %p81, %s82, %s83
      %p87 = pneg %p81
      %p88 = scmp.eq.s32.totalorder %s19, 1
      %p89 = por %p87, %p88
      %p90 = scmp.ne.s32.totalorder %s82, %s85
      %p91 = scmp.eq.s32.totalorder %s19, 0
      %p92 = por %p90, %p91
      %p93 = scmp.ne.s32.totalorder %s82, %s85
      %p94 = scmp.eq.s32.totalorder %s24, 1
      %p95 = por %p93, %p94
      %p96 = scmp.ne.s32.totalorder %s85, %s86
      %p97 = scmp.eq.s32.totalorder %s24, 0
      %p98 = por %p96, %p97
      %p99 = scmp.ne.s32.totalorder %s85, %s86
      %p100 = scmp.eq.s32.totalorder %s25, 1
      %p101 = por %p99, %p100
      %p103 = scmp.ne.s32.totalorder %s86, %s102
      %p104 = scmp.eq.s32.totalorder %s25, 0
      %p105 = por %p103, %p104
      %s107 = sadd.s32 %s106, 1
      %p110 = scmp.eq.s32.totalorder %s19, 1
      %p111 = scmp.ne.s32.totalorder %s106, %s108
      %p112 = scmp.eq.s32.totalorder %s19, 0
      %p113 = por %p111, %p112
      %p114 = scmp.ne.s32.totalorder %s106, %s108
      %p115 = scmp.eq.s32.totalorder %s24, 1
      %p116 = por %p114, %p115
      %p117 = scmp.ne.s32.totalorder %s108, %s109
      %p118 = scmp.eq.s32.totalorder %s24, 0
      %p119 = por %p117, %p118
      %p120 = scmp.ne.s32.totalorder %s108, %s109
      %p121 = scmp.eq.s32.totalorder %s25, 1
      %p122 = por %p120, %p121
      %p124 = scmp.ne.s32.totalorder %s109, %s123
      %p125 = scmp.eq.s32.totalorder %s25, 0
      %p126 = por %p124, %p125
      %s128 = sadd.s32 %s127, 1
      %p131 = scmp.eq.s32.totalorder %s19, 1
      %p132 = scmp.ne.s32.totalorder %s127, %s129
      %p133 = scmp.eq.s32.totalorder %s19, 0
      %p134 = por %p132, %p133
      %p135 = scmp.ne.s32.totalorder %s127, %s129
      %p136 = scmp.eq.s32.totalorder %s24, 1
      %p137 = por %p135, %p136
      %p138 = scmp.ne.s32.totalorder %s129, %s130
      %p139 = scmp.eq.s32.totalorder %s24, 0
      %p140 = por %p138, %p139
      %p141 = scmp.ne.s32.totalorder %s129, %s130
      %p142 = scmp.eq.s32.totalorder %s25, 1
      %p143 = por %p141, %p142
      %p145 = scmp.ne.s32.totalorder %s130, %s144
      %p146 = scmp.eq.s32.totalorder %s25, 0
      %p147 = por %p145, %p146
      %s148 = ssub.s32 %s26, %s45
      %s149 = ssub.s32 %s27, %s41
      %s150 = sor.u32 %s148, %s149
      %p151 = scmp.eq.s32.totalorder %s150, 0
      %s153 = sadd.s32 %s152, 1
      %s154 = scalar_select %p151, %s152, %s153
      %p157 = pneg %p151
      %p158 = scmp.eq.s32.totalorder %s19, 1
      %p159 = por %p157, %p158
      %p160 = scmp.ne.s32.totalorder %s152, %s155
      %p161 = scmp.eq.s32.totalorder %s19, 0
      %p162 = por %p160, %p161
      %p163 = scmp.ne.s32.totalorder %s152, %s155
      %p164 = scmp.eq.s32.totalorder %s24, 1
      %p165 = por %p163, %p164
      %p166 = scmp.ne.s32.totalorder %s155, %s156
      %p167 = scmp.eq.s32.totalorder %s24, 0
      %p168 = por %p166, %p167
      %p169 = scmp.ne.s32.totalorder %s155, %s156
      %p170 = scmp.eq.s32.totalorder %s25, 1
      %p171 = por %p169, %p170
      %p173 = scmp.ne.s32.totalorder %s156, %s172
      %p174 = scmp.eq.s32.totalorder %s25, 0
      %p175 = por %p173, %p174
      %p176 = scmp.le.s32.totalorder 1, %s19
      %p177 = scmp.lt.s32.totalorder %s19, 3
      %p178 = pnand %p176, %p177
      %p179 = pneg %p178
      // Predicated region
      $region9: #{tpu_custom_call.1} parent=5 // pred_check
        _
      $region10: #{tpu_custom_call.1} parent=5 // pred_check_branch
        %181 = sbr.rel (%p178) target = $region12
      $region11: #{tpu_custom_call.1} parent=5 // pred_region
        %s182 = ssub.s32 %s19, 1
        // Predicated region
        $region13: #{tpu_custom_call.1} parent=11 // pred_check
          %p183 = pneg %p119
        $region14: #{tpu_custom_call.1} parent=11 // pred_check_branch
          %185 = sbr.rel (%p183) target = $region16
        $region15: #{tpu_custom_call.1} parent=11 // pred_region
          %s187 = ssub.s32 768, 768
          %188 = vsyncadd [#allocation11], %s187
          %s189 = sshll.u32 [#allocation12], 4
          %s190 = int_to_ptr.vmem [resolvable:$true] %s189
          %195 = dma.hbm_to_vmem [thread:$0]  %s2, 768, %s190, [#allocation11], 384, 384, 24
        $region16: #{tpu_custom_call.1} parent=11 // pred_fallthru
          _
        // Predicated region
        $region17: #{tpu_custom_call.1} parent=11 // pred_check
          %p196 = pneg %p140
        $region18: #{tpu_custom_call.1} parent=11 // pred_check_branch
          %198 = sbr.rel (%p196) target = $region20
        $region19: #{tpu_custom_call.1} parent=11 // pred_region
          _
        $region20: #{tpu_custom_call.1} parent=11 // pred_fallthru
          _
      $region12: #{tpu_custom_call.1} parent=5 // pred_fallthru
        _
      %p199 = scmp.lt.s32.totalorder %s19, 2
      // Predicated region
      $region21: #{tpu_custom_call.1} parent=5 // pred_check
        %p200 = pneg %p199
      $region22: #{tpu_custom_call.1} parent=5 // pred_check_branch
        %202 = sbr.rel (%p200) target = $region24
      $region23: #{tpu_custom_call.1} parent=5 // pred_region
        // Predicated region
        $region25: #{tpu_custom_call.1} parent=23 // pred_check
          %p203 = pneg %p60
        $region26: #{tpu_custom_call.1} parent=23 // pred_check_branch
          %205 = sbr.rel (%p203) target = $region28
        $region27: #{tpu_custom_call.1} parent=23 // pred_region
          %s206 = sand.u32 %s50, 1
          %s207 = scalar_lea.sflag [#allocation8], %s206
          %s208 = sand.u32 %s50, 1
          %s209 = smul.addr %s208, 8
          %s210 = scalar_lea.vmem [#allocation7], %s209
          %s212 = ssub.s32 128, 128
          %213 = vsyncadd %s207, %s212
          %s214 = sadd.s32 %s27, %s26
          %s215 = smul.addr %s214, 128
          %s216 = scalar_lea.hbm %s0, %s215
          %s218 = sshll.u32 %s210, 4
          %s219 = int_to_ptr.vmem [resolvable:$true] %s218
          %221 = dma.hbm_to_vmem [thread:$0]  %s216, 128, %s219, %s207
        $region28: #{tpu_custom_call.1} parent=23 // pred_fallthru
          _
        // Predicated region
        $region29: #{tpu_custom_call.1} parent=23 // pred_check
          %p222 = pneg %p92
        $region30: #{tpu_custom_call.1} parent=23 // pred_check_branch
          %224 = sbr.rel (%p222) target = $region32
        $region31: #{tpu_custom_call.1} parent=23 // pred_region
          %s225 = sand.u32 %s19, 1
          %s226 = scalar_lea.sflag [#allocation11], %s225
          %s227 = sand.u32 %s82, 1
          %s228 = smul.addr %s227, 8
          %s229 = scalar_lea.vmem [#allocation10], %s228
          %p230 = scmp.eq.s32.totalorder %s27, 0
          %s231 = scalar_select %p230, %s28, 0
          %s233 = ssub.s32 128, 128
          %234 = vsyncadd %s226, %s233
          %s235 = sadd.s32 %s231, %s26
          %s236 = smul.addr %s235, 128
          %s237 = scalar_lea.hbm %s1, %s236
          %s239 = sshll.u32 %s229, 4
          %s240 = int_to_ptr.vmem [resolvable:$true] %s239
          %242 = dma.hbm_to_vmem [thread:$0]  %s237, 128, %s240, %s226
        $region32: #{tpu_custom_call.1} parent=23 // pred_fallthru
          _
      $region24: #{tpu_custom_call.1} parent=5 // pred_fallthru
        _
      %p243 = scmp.le.s32.totalorder 1, %s19
      %p244 = scmp.lt.s32.totalorder %s19, 3
      %p245 = pnand %p243, %p244
      %p246 = pneg %p245
      // Predicated region
      $region33: #{tpu_custom_call.1} parent=5 // pred_check
        _
      $region34: #{tpu_custom_call.1} parent=5 // pred_check_branch
        %248 = sbr.rel (%p245) target = $region36
      $region35: #{tpu_custom_call.1} parent=5 // pred_region
        %s249 = ssub.s32 %s19, 1
        %s250 = sand.u32 %s53, 1
        %s251 = scalar_lea.sflag [#allocation8], %s250
        %s252 = sand.u32 %s53, 1
        %s253 = smul.addr %s252, 8
        %s254 = scalar_lea.vmem [#allocation7], %s253
        // Predicated region
        $region37: #{tpu_custom_call.1} parent=35 // pred_check
          %p255 = pneg %p66
        $region38: #{tpu_custom_call.1} parent=35 // pred_check_branch
          %257 = sbr.rel (%p255) target = $region40
        $region39: #{tpu_custom_call.1} parent=35 // pred_region
          %258 = dma.done %s251, 128
        $region40: #{tpu_custom_call.1} parent=35 // pred_fallthru
          _
        %s259 = sand.u32 %s24, 1
        %s260 = scalar_lea.sflag [#allocation11], %s259
        %s261 = sand.u32 %s85, 1
        %s262 = smul.addr %s261, 8
        %s263 = scalar_lea.vmem [#allocation10], %s262
        // Predicated region
        $region41: #{tpu_custom_call.1} parent=35 // pred_check
          %p264 = pneg %p98
        $region42: #{tpu_custom_call.1} parent=35 // pred_check_branch
          %266 = sbr.rel (%p264) target = $region44
        $region43: #{tpu_custom_call.1} parent=35 // pred_region
          %267 = dma.done %s260, 128
        $region44: #{tpu_custom_call.1} parent=35 // pred_fallthru
          _
        // Predicated region
        $region45: #{tpu_custom_call.1} parent=35 // pred_check
          %p268 = pneg %p119
        $region46: #{tpu_custom_call.1} parent=35 // pred_check_branch
          %270 = sbr.rel (%p268) target = $region48
        $region47: #{tpu_custom_call.1} parent=35 // pred_region
          %271 = dma.done [#allocation11], 768
        $region48: #{tpu_custom_call.1} parent=35 // pred_fallthru
          _
        %s272 = sand.u32 %s53, 1
        %s273 = scalar_lea.sflag [#allocation8], %s272
        %s274 = sand.u32 %s53, 1
        %s275 = smul.addr %s274, 8
        %s276 = scalar_lea.vmem [#allocation7], %s275
        %p277 = pneg %p66
        %p278 = pneg %p63
        %s279 = sand.u32 %s24, 1
        %s280 = scalar_lea.sflag [#allocation11], %s279
        %s281 = sand.u32 %s85, 1
        %s282 = smul.addr %s281, 8
        %s283 = scalar_lea.vmem [#allocation10], %s282
        %p284 = pneg %p98
        %p285 = pneg %p95
        %p286 = pneg %p119
        %p287 = pneg %p116
        %p288 = pneg %p140
        %p289 = pneg %p137
        %p290 = pneg %p168
        %p291 = pneg %p165
        %s292 = sand.u32 %s155, 1
        %s293 = scalar_lea.sflag [#allocation9], %s292
        %s294 = sand.u32 %s155, 1
        %s295 = smul.addr %s294, 8
        %s296 = scalar_lea.vmem [#allocation13], %s295
        %p297 = scmp.eq.s32.totalorder %s30, 0
        %s298 = scalar_select %p297, %s31, 0
        %p299 = scmp.eq.s32.totalorder %s31, 0
        // Predicated region
        $region49: #{tpu_custom_call.1} parent=35 // pred_check
          %p300 = pneg %p299
        $region50: #{tpu_custom_call.1} parent=35 // pred_check_branch
          %302 = sbr.rel (%p300) target = $region52
        $region51: #{tpu_custom_call.1} parent=35 // pred_region
          %v303 = vld [vmem:[%s254] sm:$0xff]
          %v304 = vld [vmem:[#allocation12] sm:$0xff]
          %v305 = vld [vmem:[#allocation12 + $0x18] sm:$0x1]
          %v306 = vld [vmem:[%s3] sm:$0x1]
          %v308 = vlaneseq
          %v309 = vshrl.u32 %v308, 7
          %v310 = vsub.s32 0, %v309
          %v311 = vrot.slane %v306, %v310
          %vm313 = vcmask 72704
          %v315 = vsel %vm313, %v303, 0
          %vm317 = vcmask 1040384
          %v319 = vsel %vm317, %v305, 0
          %321 = vmatprep.subr.mxu0 0.0
          %322 = vmatpush1.msra.mxu0 0.0
          %323 = vmatprep.subr.mxu0 0.0
          %324 = vmatpush1.msra.mxu0 0.0
          %325 = vmatprep.subr.mxu0 0.0
          %326 = vmatpush1.msra.mxu0 0.0
          %327 = vmatprep.subr.mxu0 0.0
          %328 = vmatpush1.msra.mxu0 0.0
          %329 = vmatprep.subr.mxu0 0.0
          %330 = vmatpush1.msra.mxu0 0.0
          %331 = vmatprep.subr.mxu0 0.0
          %332 = vmatpush1.msra.mxu0 0.0
          %333 = vmatprep.subr.mxu0 0.0
          %334 = vmatpush1.msra.mxu0 0.0
          %335 = vmatprep.subr.mxu0 0.0
          %336 = vmatpush1.msra.mxu0 0.0
          %337 = vmatprep.subr.mxu0 0.0
          %338 = vmatpush1.msra.mxu0 0.0
          %339 = vmatprep.subr.mxu0 0.0
          %340 = vmatpush1.msra.mxu0 0.0
          %341 = vmatprep.subr.mxu0 0.0
          %342 = vmatpush1.msra.mxu0 0.0
          %343 = vmatprep.subr.mxu0 0.0
          %344 = vmatpush1.msra.mxu0 0.0
          %345 = vmatprep.subr.mxu0 0.0
          %346 = vmatpush1.msra.mxu0 0.0
          %347 = vmatprep.subr.mxu0 0.0
          %348 = vmatpush1.msra.mxu0 0.0
          %349 = vmatprep.subr.mxu0 0.0
          %v350 = vand.u32 %v319, 4294901760
          %351 = vmatpush1.msra.mxu0 %v350
          %352 = vmatprep.subr.mxu0 0.0
          %v353 = vand.u32 %v304, 4294901760
          %354 = vmatpush1.msra.mxu0 %v353
          %355 = vmatprep.subr.mxu0 0.0
          %356 = vmatpush2.msra.mxu0 0.0
          %357 = vmatprep.subr.mxu0 0.0
          %358 = vmatpush2.msra.mxu0 0.0
          %359 = vmatprep.subr.mxu0 0.0
          %360 = vmatpush2.msra.mxu0 0.0
          %361 = vmatprep.subr.mxu0 0.0
          %362 = vmatpush2.msra.mxu0 0.0
          %363 = vmatprep.subr.mxu0 0.0
          %364 = vmatpush2.msra.mxu0 0.0
          %365 = vmatprep.subr.mxu0 0.0
          %366 = vmatpush2.msra.mxu0 0.0
          %367 = vmatprep.subr.mxu0 0.0
          %368 = vmatpush2.msra.mxu0 0.0
          %369 = vmatprep.subr.mxu0 0.0
          %370 = vmatpush2.msra.mxu0 0.0
          %371 = vmatprep.subr.mxu0 0.0
          %372 = vmatpush2.msra.mxu0 0.0
          %373 = vmatprep.subr.mxu0 0.0
          %374 = vmatpush2.msra.mxu0 0.0
          %375 = vmatprep.subr.mxu0 0.0
          %376 = vmatpush2.msra.mxu0 0.0
          %377 = vmatprep.subr.mxu0 0.0
          %378 = vmatpush2.msra.mxu0 0.0
          %379 = vmatprep.subr.mxu0 0.0
          %380 = vmatpush2.msra.mxu0 0.0
          %381 = vmatprep.subr.mxu0 0.0
          %382 = vmatpush2.msra.mxu0 0.0
          %383 = vmatprep.subr.mxu0 0.0
          %384 = vmatpush2.msra.mxu0 0.0
          %385 = vmatprep.subr.mxu0 0.0
          %386 = vmatpush2.msra.mxu0 0.0
          %387 = vmatprep.mubr.f32.mxu0 0.0
          %v388 = vand.u32 %v315, 4294901760
          %v389 = vsub.f32 %v315, %v388
          %v390 = vand.u32 %v389, 4294901760
          %v391 = vsub.f32 %v389, %v390
          %v392 = vand.u32 %v391, 4294901760
          %393 = vmatmul.mubr.f32.gmra.mxu0 %v392
          %v394 = vpop.f32.mrf.mxu0
          %v395 = vadd.f32 %v311, %v394
          %v396 = vpop.f32.mrf.mxu0
          %397 = vdwg.mxu0
          %398 = vmatprep.subr.mxu0 0.0
          %399 = vmatpush1.msra.mxu0 0.0
          %400 = vmatprep.subr.mxu0 0.0
          %401 = vmatpush1.msra.mxu0 0.0
          %402 = vmatprep.subr.mxu0 0.0
          %403 = vmatpush1.msra.mxu0 0.0
          %404 = vmatprep.subr.mxu0 0.0
          %405 = vmatpush1.msra.mxu0 0.0
          %406 = vmatprep.subr.mxu0 0.0
          %407 = vmatpush1.msra.mxu0 0.0
          %408 = vmatprep.subr.mxu0 0.0
          %409 = vmatpush1.msra.mxu0 0.0
          %410 = vmatprep.subr.mxu0 0.0
          %411 = vmatpush1.msra.mxu0 0.0
          %412 = vmatprep.subr.mxu0 0.0
          %413 = vmatpush1.msra.mxu0 0.0
          %414 = vmatprep.subr.mxu0 0.0
          %415 = vmatpush1.msra.mxu0 0.0
          %416 = vmatprep.subr.mxu0 0.0
          %417 = vmatpush1.msra.mxu0 0.0
          %418 = vmatprep.subr.mxu0 0.0
          %419 = vmatpush1.msra.mxu0 0.0
          %420 = vmatprep.subr.mxu0 0.0
          %421 = vmatpush1.msra.mxu0 0.0
          %422 = vmatprep.subr.mxu0 0.0
          %423 = vmatpush1.msra.mxu0 0.0
          %424 = vmatprep.subr.mxu0 0.0
          %425 = vmatpush1.msra.mxu0 0.0
          %426 = vmatprep.subr.mxu0 0.0
          %v427 = vand.u32 %v319, 4294901760
          %v428 = vsub.f32 %v319, %v427
          %v429 = vand.u32 %v428, 4294901760
          %v430 = vsub.f32 %v428, %v429
          %v431 = vand.u32 %v430, 4294901760
          %432 = vmatpush1.msra.mxu0 %v431
          %433 = vmatprep.subr.mxu0 0.0
          %v434 = vand.u32 %v304, 4294901760
          %v435 = vsub.f32 %v304, %v434
          %v436 = vand.u32 %v435, 4294901760
          %v437 = vsub.f32 %v435, %v436
          %v438 = vand.u32 %v437, 4294901760
          %439 = vmatpush1.msra.mxu0 %v438
          %440 = vmatprep.subr.mxu0 0.0
          %441 = vmatpush2.msra.mxu0 0.0
          %442 = vmatprep.subr.mxu0 0.0
          %443 = vmatpush2.msra.mxu0 0.0
          %444 = vmatprep.subr.mxu0 0.0
          %445 = vmatpush2.msra.mxu0 0.0
          %446 = vmatprep.subr.mxu0 0.0
          %447 = vmatpush2.msra.mxu0 0.0
          %448 = vmatprep.subr.mxu0 0.0
          %449 = vmatpush2.msra.mxu0 0.0
          %450 = vmatprep.subr.mxu0 0.0
          %451 = vmatpush2.msra.mxu0 0.0
          %452 = vmatprep.subr.mxu0 0.0
          %453 = vmatpush2.msra.mxu0 0.0
          %454 = vmatprep.subr.mxu0 0.0
          %455 = vmatpush2.msra.mxu0 0.0
          %456 = vmatprep.subr.mxu0 0.0
          %457 = vmatpush2.msra.mxu0 0.0
          %458 = vmatprep.subr.mxu0 0.0
          %459 = vmatpush2.msra.mxu0 0.0
          %460 = vmatprep.subr.mxu0 0.0
          %461 = vmatpush2.msra.mxu0 0.0
          %462 = vmatprep.subr.mxu0 0.0
          %463 = vmatpush2.msra.mxu0 0.0
          %464 = vmatprep.subr.mxu0 0.0
          %465 = vmatpush2.msra.mxu0 0.0
          %466 = vmatprep.subr.mxu0 0.0
          %467 = vmatpush2.msra.mxu0 0.0
          %468 = vmatprep.subr.mxu0 0.0
          %469 = vmatpush2.msra.mxu0 0.0
          %470 = vmatprep.subr.mxu0 0.0
          %471 = vmatpush2.msra.mxu0 0.0
          %472 = vmatprep.mubr.f32.mxu0 0.0
          %v473 = vand.u32 %v315, 4294901760
          %474 = vmatmul.mubr.f32.gmra.mxu0 %v473
          %v475 = vpop.f32.mrf.mxu0
          %v476 = vadd.f32 %v395, %v475
          %v477 = vpop.f32.mrf.mxu0
          %478 = vdwg.mxu0
          %479 = vmatprep.subr.mxu0 0.0
          %480 = vmatpush1.msra.mxu0 0.0
          %481 = vmatprep.subr.mxu0 0.0
          %482 = vmatpush1.msra.mxu0 0.0
          %483 = vmatprep.subr.mxu0 0.0
          %484 = vmatpush1.msra.mxu0 0.0
          %485 = vmatprep.subr.mxu0 0.0
          %486 = vmatpush1.msra.mxu0 0.0
          %487 = vmatprep.subr.mxu0 0.0
          %488 = vmatpush1.msra.mxu0 0.0
          %489 = vmatprep.subr.mxu0 0.0
          %490 = vmatpush1.msra.mxu0 0.0
          %491 = vmatprep.subr.mxu0 0.0
          %492 = vmatpush1.msra.mxu0 0.0
          %493 = vmatprep.subr.mxu0 0.0
          %494 = vmatpush1.msra.mxu0 0.0
          %495 = vmatprep.subr.mxu0 0.0
          %496 = vmatpush1.msra.mxu0 0.0
          %497 = vmatprep.subr.mxu0 0.0
          %498 = vmatpush1.msra.mxu0 0.0
          %499 = vmatprep.subr.mxu0 0.0
          %500 = vmatpush1.msra.mxu0 0.0
          %501 = vmatprep.subr.mxu0 0.0
          %502 = vmatpush1.msra.mxu0 0.0
          %503 = vmatprep.subr.mxu0 0.0
          %504 = vmatpush1.msra.mxu0 0.0
          %505 = vmatprep.subr.mxu0 0.0
          %506 = vmatpush1.msra.mxu0 0.0
          %507 = vmatprep.subr.mxu0 0.0
          %v508 = vand.u32 %v319, 4294901760
          %v509 = vsub.f32 %v319, %v508
          %510 = vmatpush1.msra.mxu0 %v509
          %511 = vmatprep.subr.mxu0 0.0
          %v512 = vand.u32 %v304, 4294901760
          %v513 = vsub.f32 %v304, %v512
          %514 = vmatpush1.msra.mxu0 %v513
          %515 = vmatprep.subr.mxu0 0.0
          %516 = vmatpush2.msra.mxu0 0.0
          %517 = vmatprep.subr.mxu0 0.0
          %518 = vmatpush2.msra.mxu0 0.0
          %519 = vmatprep.subr.mxu0 0.0
          %520 = vmatpush2.msra.mxu0 0.0
          %521 = vmatprep.subr.mxu0 0.0
          %522 = vmatpush2.msra.mxu0 0.0
          %523 = vmatprep.subr.mxu0 0.0
          %524 = vmatpush2.msra.mxu0 0.0
          %525 = vmatprep.subr.mxu0 0.0
          %526 = vmatpush2.msra.mxu0 0.0
          %527 = vmatprep.subr.mxu0 0.0
          %528 = vmatpush2.msra.mxu0 0.0
          %529 = vmatprep.subr.mxu0 0.0
          %530 = vmatpush2.msra.mxu0 0.0
          %531 = vmatprep.subr.mxu0 0.0
          %532 = vmatpush2.msra.mxu0 0.0
          %533 = vmatprep.subr.mxu0 0.0
          %534 = vmatpush2.msra.mxu0 0.0
          %535 = vmatprep.subr.mxu0 0.0
          %536 = vmatpush2.msra.mxu0 0.0
          %537 = vmatprep.subr.mxu0 0.0
          %538 = vmatpush2.msra.mxu0 0.0
          %539 = vmatprep.subr.mxu0 0.0
          %540 = vmatpush2.msra.mxu0 0.0
          %541 = vmatprep.subr.mxu0 0.0
          %542 = vmatpush2.msra.mxu0 0.0
          %543 = vmatprep.subr.mxu0 0.0
          %544 = vmatpush2.msra.mxu0 0.0
          %545 = vmatprep.subr.mxu0 0.0
          %546 = vmatpush2.msra.mxu0 0.0
          %547 = vmatprep.mubr.f32.mxu0 0.0
          %v548 = vand.u32 %v315, 4294901760
          %v549 = vsub.f32 %v315, %v548
          %550 = vmatmul.mubr.f32.gmra.mxu0 %v549
          %v551 = vpop.f32.mrf.mxu0
          %v552 = vadd.f32 %v476, %v551
          %v553 = vpop.f32.mrf.mxu0
          %554 = vdwg.mxu0
          %555 = vmatprep.subr.mxu0 0.0
          %556 = vmatpush1.msra.mxu0 0.0
          %557 = vmatprep.subr.mxu0 0.0
          %558 = vmatpush1.msra.mxu0 0.0
          %559 = vmatprep.subr.mxu0 0.0
          %560 = vmatpush1.msra.mxu0 0.0
          %561 = vmatprep.subr.mxu0 0.0
          %562 = vmatpush1.msra.mxu0 0.0
          %563 = vmatprep.subr.mxu0 0.0
          %564 = vmatpush1.msra.mxu0 0.0
          %565 = vmatprep.subr.mxu0 0.0
          %566 = vmatpush1.msra.mxu0 0.0
          %567 = vmatprep.subr.mxu0 0.0
          %568 = vmatpush1.msra.mxu0 0.0
          %569 = vmatprep.subr.mxu0 0.0
          %570 = vmatpush1.msra.mxu0 0.0
          %571 = vmatprep.subr.mxu0 0.0
          %572 = vmatpush1.msra.mxu0 0.0
          %573 = vmatprep.subr.mxu0 0.0
          %574 = vmatpush1.msra.mxu0 0.0
          %575 = vmatprep.subr.mxu0 0.0
          %576 = vmatpush1.msra.mxu0 0.0
          %577 = vmatprep.subr.mxu0 0.0
          %578 = vmatpush1.msra.mxu0 0.0
          %579 = vmatprep.subr.mxu0 0.0
          %580 = vmatpush1.msra.mxu0 0.0
          %581 = vmatprep.subr.mxu0 0.0
          %582 = vmatpush1.msra.mxu0 0.0
          %583 = vmatprep.subr.mxu0 0.0
          %v584 = vand.u32 %v319, 4294901760
          %585 = vmatpush1.msra.mxu0 %v584
          %586 = vmatprep.subr.mxu0 0.0
          %v587 = vand.u32 %v304, 4294901760
          %588 = vmatpush1.msra.mxu0 %v587
          %589 = vmatprep.subr.mxu0 0.0
          %590 = vmatpush2.msra.mxu0 0.0
          %591 = vmatprep.subr.mxu0 0.0
          %592 = vmatpush2.msra.mxu0 0.0
          %593 = vmatprep.subr.mxu0 0.0
          %594 = vmatpush2.msra.mxu0 0.0
          %595 = vmatprep.subr.mxu0 0.0
          %596 = vmatpush2.msra.mxu0 0.0
          %597 = vmatprep.subr.mxu0 0.0
          %598 = vmatpush2.msra.mxu0 0.0
          %599 = vmatprep.subr.mxu0 0.0
          %600 = vmatpush2.msra.mxu0 0.0
          %601 = vmatprep.subr.mxu0 0.0
          %602 = vmatpush2.msra.mxu0 0.0
          %603 = vmatprep.subr.mxu0 0.0
          %604 = vmatpush2.msra.mxu0 0.0
          %605 = vmatprep.subr.mxu0 0.0
          %606 = vmatpush2.msra.mxu0 0.0
          %607 = vmatprep.subr.mxu0 0.0
          %608 = vmatpush2.msra.mxu0 0.0
          %609 = vmatprep.subr.mxu0 0.0
          %610 = vmatpush2.msra.mxu0 0.0
          %611 = vmatprep.subr.mxu0 0.0
          %612 = vmatpush2.msra.mxu0 0.0
          %613 = vmatprep.subr.mxu0 0.0
          %614 = vmatpush2.msra.mxu0 0.0
          %615 = vmatprep.subr.mxu0 0.0
          %616 = vmatpush2.msra.mxu0 0.0
          %617 = vmatprep.subr.mxu0 0.0
          %618 = vmatpush2.msra.mxu0 0.0
          %619 = vmatprep.subr.mxu0 0.0
          %620 = vmatpush2.msra.mxu0 0.0
          %621 = vmatprep.mubr.f32.mxu0 0.0
          %v622 = vand.u32 %v315, 4294901760
          %v623 = vsub.f32 %v315, %v622
          %v624 = vand.u32 %v623, 4294901760
          %625 = vmatmul.mubr.f32.gmra.mxu0 %v624
          %v626 = vpop.f32.mrf.mxu0
          %v627 = vadd.f32 %v552, %v626
          %v628 = vpop.f32.mrf.mxu0
          %629 = vdwg.mxu0
          %630 = vmatprep.subr.mxu0 0.0
          %631 = vmatpush1.msra.mxu0 0.0
          %632 = vmatprep.subr.mxu0 0.0
          %633 = vmatpush1.msra.mxu0 0.0
          %634 = vmatprep.subr.mxu0 0.0
          %635 = vmatpush1.msra.mxu0 0.0
          %636 = vmatprep.subr.mxu0 0.0
          %637 = vmatpush1.msra.mxu0 0.0
          %638 = vmatprep.subr.mxu0 0.0
          %639 = vmatpush1.msra.mxu0 0.0
          %640 = vmatprep.subr.mxu0 0.0
          %641 = vmatpush1.msra.mxu0 0.0
          %642 = vmatprep.subr.mxu0 0.0
          %643 = vmatpush1.msra.mxu0 0.0
          %644 = vmatprep.subr.mxu0 0.0
          %645 = vmatpush1.msra.mxu0 0.0
          %646 = vmatprep.subr.mxu0 0.0
          %647 = vmatpush1.msra.mxu0 0.0
          %648 = vmatprep.subr.mxu0 0.0
          %649 = vmatpush1.msra.mxu0 0.0
          %650 = vmatprep.subr.mxu0 0.0
          %651 = vmatpush1.msra.mxu0 0.0
          %652 = vmatprep.subr.mxu0 0.0
          %653 = vmatpush1.msra.mxu0 0.0
          %654 = vmatprep.subr.mxu0 0.0
          %655 = vmatpush1.msra.mxu0 0.0
          %656 = vmatprep.subr.mxu0 0.0
          %657 = vmatpush1.msra.mxu0 0.0
          %658 = vmatprep.subr.mxu0 0.0
          %v659 = vand.u32 %v319, 4294901760
          %v660 = vsub.f32 %v319, %v659
          %v661 = vand.u32 %v660, 4294901760
          %662 = vmatpush1.msra.mxu0 %v661
          %663 = vmatprep.subr.mxu0 0.0
          %v664 = vand.u32 %v304, 4294901760
          %v665 = vsub.f32 %v304, %v664
          %v666 = vand.u32 %v665, 4294901760
          %667 = vmatpush1.msra.mxu0 %v666
          %668 = vmatprep.subr.mxu0 0.0
          %669 = vmatpush2.msra.mxu0 0.0
          %670 = vmatprep.subr.mxu0 0.0
          %671 = vmatpush2.msra.mxu0 0.0
          %672 = vmatprep.subr.mxu0 0.0
          %673 = vmatpush2.msra.mxu0 0.0
          %674 = vmatprep.subr.mxu0 0.0
          %675 = vmatpush2.msra.mxu0 0.0
          %676 = vmatprep.subr.mxu0 0.0
          %677 = vmatpush2.msra.mxu0 0.0
          %678 = vmatprep.subr.mxu0 0.0
          %679 = vmatpush2.msra.mxu0 0.0
          %680 = vmatprep.subr.mxu0 0.0
          %681 = vmatpush2.msra.mxu0 0.0
          %682 = vmatprep.subr.mxu0 0.0
          %683 = vmatpush2.msra.mxu0 0.0
          %684 = vmatprep.subr.mxu0 0.0
          %685 = vmatpush2.msra.mxu0 0.0
          %686 = vmatprep.subr.mxu0 0.0
          %687 = vmatpush2.msra.mxu0 0.0
          %688 = vmatprep.subr.mxu0 0.0
          %689 = vmatpush2.msra.mxu0 0.0
          %690 = vmatprep.subr.mxu0 0.0
          %691 = vmatpush2.msra.mxu0 0.0
          %692 = vmatprep.subr.mxu0 0.0
          %693 = vmatpush2.msra.mxu0 0.0
          %694 = vmatprep.subr.mxu0 0.0
          %695 = vmatpush2.msra.mxu0 0.0
          %696 = vmatprep.subr.mxu0 0.0
          %697 = vmatpush2.msra.mxu0 0.0
          %698 = vmatprep.subr.mxu0 0.0
          %699 = vmatpush2.msra.mxu0 0.0
          %700 = vmatprep.mubr.f32.mxu0 0.0
          %v701 = vand.u32 %v315, 4294901760
          %702 = vmatmul.mubr.f32.gmra.mxu0 %v701
          %v703 = vpop.f32.mrf.mxu0
          %v704 = vadd.f32 %v627, %v703
          %v705 = vpop.f32.mrf.mxu0
          %706 = vdwg.mxu0
          %707 = vmatprep.subr.mxu0 0.0
          %708 = vmatpush1.msra.mxu0 0.0
          %709 = vmatprep.subr.mxu0 0.0
          %710 = vmatpush1.msra.mxu0 0.0
          %711 = vmatprep.subr.mxu0 0.0
          %712 = vmatpush1.msra.mxu0 0.0
          %713 = vmatprep.subr.mxu0 0.0
          %714 = vmatpush1.msra.mxu0 0.0
          %715 = vmatprep.subr.mxu0 0.0
          %716 = vmatpush1.msra.mxu0 0.0
          %717 = vmatprep.subr.mxu0 0.0
          %718 = vmatpush1.msra.mxu0 0.0
          %719 = vmatprep.subr.mxu0 0.0
          %720 = vmatpush1.msra.mxu0 0.0
          %721 = vmatprep.subr.mxu0 0.0
          %722 = vmatpush1.msra.mxu0 0.0
          %723 = vmatprep.subr.mxu0 0.0
          %724 = vmatpush1.msra.mxu0 0.0
          %725 = vmatprep.subr.mxu0 0.0
          %726 = vmatpush1.msra.mxu0 0.0
          %727 = vmatprep.subr.mxu0 0.0
          %728 = vmatpush1.msra.mxu0 0.0
          %729 = vmatprep.subr.mxu0 0.0
          %730 = vmatpush1.msra.mxu0 0.0
          %731 = vmatprep.subr.mxu0 0.0
          %732 = vmatpush1.msra.mxu0 0.0
          %733 = vmatprep.subr.mxu0 0.0
          %734 = vmatpush1.msra.mxu0 0.0
          %735 = vmatprep.subr.mxu0 0.0
          %v736 = vand.u32 %v319, 4294901760
          %737 = vmatpush1.msra.mxu0 %v736
          %738 = vmatprep.subr.mxu0 0.0
          %v739 = vand.u32 %v304, 4294901760
          %740 = vmatpush1.msra.mxu0 %v739
          %741 = vmatprep.subr.mxu0 0.0
          %742 = vmatpush2.msra.mxu0 0.0
          %743 = vmatprep.subr.mxu0 0.0
          %744 = vmatpush2.msra.mxu0 0.0
          %745 = vmatprep.subr.mxu0 0.0
          %746 = vmatpush2.msra.mxu0 0.0
          %747 = vmatprep.subr.mxu0 0.0
          %748 = vmatpush2.msra.mxu0 0.0
          %749 = vmatprep.subr.mxu0 0.0
          %750 = vmatpush2.msra.mxu0 0.0
          %751 = vmatprep.subr.mxu0 0.0
          %752 = vmatpush2.msra.mxu0 0.0
          %753 = vmatprep.subr.mxu0 0.0
          %754 = vmatpush2.msra.mxu0 0.0
          %755 = vmatprep.subr.mxu0 0.0
          %756 = vmatpush2.msra.mxu0 0.0
          %757 = vmatprep.subr.mxu0 0.0
          %758 = vmatpush2.msra.mxu0 0.0
          %759 = vmatprep.subr.mxu0 0.0
          %760 = vmatpush2.msra.mxu0 0.0
          %761 = vmatprep.subr.mxu0 0.0
          %762 = vmatpush2.msra.mxu0 0.0
          %763 = vmatprep.subr.mxu0 0.0
          %764 = vmatpush2.msra.mxu0 0.0
          %765 = vmatprep.subr.mxu0 0.0
          %766 = vmatpush2.msra.mxu0 0.0
          %767 = vmatprep.subr.mxu0 0.0
          %768 = vmatpush2.msra.mxu0 0.0
          %769 = vmatprep.subr.mxu0 0.0
          %770 = vmatpush2.msra.mxu0 0.0
          %771 = vmatprep.subr.mxu0 0.0
          %772 = vmatpush2.msra.mxu0 0.0
          %773 = vmatprep.mubr.f32.mxu0 0.0
          %v774 = vand.u32 %v315, 4294901760
          %775 = vmatmul.mubr.f32.gmra.mxu0 %v774
          %v776 = vpop.f32.mrf.mxu0
          %v777 = vadd.f32 %v704, %v776
          %v778 = vpop.f32.mrf.mxu0
          %779 = vdwg.mxu0
          %v780 = vmul.f32 %v777, 0.5
          %781 = vst [vmem:[#allocation2] sm:$0xff] %v780
          %vm782 = vcmask 7168
          %783 = vst.msk [vmem:[#allocation4] sm:$0xff] %vm782, -inf
          %784 = vst.msk [vmem:[#allocation5] sm:$0xff] %vm782, 0.0
          %785 = vst [vmem:[#allocation6] sm:$0xff] 0.0
        $region52: #{tpu_custom_call.1} parent=35 // pred_fallthru
          _
        %p786 = scmp.eq.s32.totalorder %s30, 0
        // Predicated region
        $region53: #{tpu_custom_call.1} parent=35 // pred_check
          %p787 = pneg %p786
        $region54: #{tpu_custom_call.1} parent=35 // pred_check_branch
          %789 = sbr.rel (%p787) target = $region56
        $region55: #{tpu_custom_call.1} parent=35 // pred_region
          %v790 = vld [vmem:[%s263] sm:$0xff]
          %v791 = vld [vmem:[#allocation12 + $0x8] sm:$0xff]
          %v792 = vld [vmem:[#allocation12 + $0x10] sm:$0xff]
          %v793 = vld [vmem:[#allocation12 + $0x20] sm:$0x1]
          %v794 = vld [vmem:[#allocation12 + $0x28] sm:$0x1]
          %v795 = vld [vmem:[%s3 + $0x1] sm:$0x3]
          %v797 = vlaneseq
          %v798 = vshrl.u32 %v797, 7
          %v799 = vsub.s32 0, %v798
          %v800 = vrot.slane %v795, %v799
          %v801 = vlaneseq
          %v802 = vshrl.u32 %v801, 7
          %v803 = vsub.s32 1, %v802
          %v804 = vrot.slane %v795, %v803
          %vm807 = vcmask 72704
          %v809 = vsel %vm807, %v790, 0
          %vm811 = vcmask 1040384
          %v813 = vsel %vm811, %v793, 0
          %v816 = vsel %vm811, %v794, 0
          %818 = vmatprep.subr.mxu0 0.0
          %819 = vmatpush1.msra.mxu0 0.0
          %820 = vmatprep.subr.mxu0 0.0
          %821 = vmatpush1.msra.mxu0 0.0
          %822 = vmatprep.subr.mxu0 0.0
          %823 = vmatpush1.msra.mxu0 0.0
          %824 = vmatprep.subr.mxu0 0.0
          %825 = vmatpush1.msra.mxu0 0.0
          %826 = vmatprep.subr.mxu0 0.0
          %827 = vmatpush1.msra.mxu0 0.0
          %828 = vmatprep.subr.mxu0 0.0
          %829 = vmatpush1.msra.mxu0 0.0
          %830 = vmatprep.subr.mxu0 0.0
          %831 = vmatpush1.msra.mxu0 0.0
          %832 = vmatprep.subr.mxu0 0.0
          %833 = vmatpush1.msra.mxu0 0.0
          %834 = vmatprep.subr.mxu0 0.0
          %835 = vmatpush1.msra.mxu0 0.0
          %836 = vmatprep.subr.mxu0 0.0
          %837 = vmatpush1.msra.mxu0 0.0
          %838 = vmatprep.subr.mxu0 0.0
          %839 = vmatpush1.msra.mxu0 0.0
          %840 = vmatprep.subr.mxu0 0.0
          %841 = vmatpush1.msra.mxu0 0.0
          %842 = vmatprep.subr.mxu0 0.0
          %843 = vmatpush1.msra.mxu0 0.0
          %844 = vmatprep.subr.mxu0 0.0
          %845 = vmatpush1.msra.mxu0 0.0
          %v846 = vand.u32 %v816, 4294901760
          %847 = vmatprep.subr.mxu0 %v846
          %v848 = vand.u32 %v813, 4294901760
          %849 = vmatpush1.msra.mxu0 %v848
          %v850 = vand.u32 %v792, 4294901760
          %851 = vmatprep.subr.mxu0 %v850
          %v852 = vand.u32 %v791, 4294901760
          %853 = vmatpush1.msra.mxu0 %v852
          %854 = vmatprep.subr.mxu0 0.0
          %855 = vmatpush2.msra.mxu0 0.0
          %856 = vmatprep.subr.mxu0 0.0
          %857 = vmatpush2.msra.mxu0 0.0
          %858 = vmatprep.subr.mxu0 0.0
          %859 = vmatpush2.msra.mxu0 0.0
          %860 = vmatprep.subr.mxu0 0.0
          %861 = vmatpush2.msra.mxu0 0.0
          %862 = vmatprep.subr.mxu0 0.0
          %863 = vmatpush2.msra.mxu0 0.0
          %864 = vmatprep.subr.mxu0 0.0
          %865 = vmatpush2.msra.mxu0 0.0
          %866 = vmatprep.subr.mxu0 0.0
          %867 = vmatpush2.msra.mxu0 0.0
          %868 = vmatprep.subr.mxu0 0.0
          %869 = vmatpush2.msra.mxu0 0.0
          %870 = vmatprep.subr.mxu0 0.0
          %871 = vmatpush2.msra.mxu0 0.0
          %872 = vmatprep.subr.mxu0 0.0
          %873 = vmatpush2.msra.mxu0 0.0
          %874 = vmatprep.subr.mxu0 0.0
          %875 = vmatpush2.msra.mxu0 0.0
          %876 = vmatprep.subr.mxu0 0.0
          %877 = vmatpush2.msra.mxu0 0.0
          %878 = vmatprep.subr.mxu0 0.0
          %879 = vmatpush2.msra.mxu0 0.0
          %880 = vmatprep.subr.mxu0 0.0
          %881 = vmatpush2.msra.mxu0 0.0
          %882 = vmatprep.subr.mxu0 0.0
          %883 = vmatpush2.msra.mxu0 0.0
          %884 = vmatprep.subr.mxu0 0.0
          %885 = vmatpush2.msra.mxu0 0.0
          %886 = vmatprep.mubr.f32.mxu0 0.0
          %v887 = vand.u32 %v809, 4294901760
          %v888 = vsub.f32 %v809, %v887
          %v889 = vand.u32 %v888, 4294901760
          %v890 = vsub.f32 %v888, %v889
          %v891 = vand.u32 %v890, 4294901760
          %892 = vmatmul.mubr.f32.gmra.mxu0 %v891
          %v893 = vpop.f32.mrf.mxu0
          %v894 = vadd.f32 %v800, %v893
          %v895 = vpop.f32.mrf.mxu0
          %v896 = vadd.f32 %v804, %v895
          %897 = vdwg.mxu0
          %898 = vmatprep.subr.mxu0 0.0
          %899 = vmatpush1.msra.mxu0 0.0
          %900 = vmatprep.subr.mxu0 0.0
          %901 = vmatpush1.msra.mxu0 0.0
          %902 = vmatprep.subr.mxu0 0.0
          %903 = vmatpush1.msra.mxu0 0.0
          %904 = vmatprep.subr.mxu0 0.0
          %905 = vmatpush1.msra.mxu0 0.0
          %906 = vmatprep.subr.mxu0 0.0
          %907 = vmatpush1.msra.mxu0 0.0
          %908 = vmatprep.subr.mxu0 0.0
          %909 = vmatpush1.msra.mxu0 0.0
          %910 = vmatprep.subr.mxu0 0.0
          %911 = vmatpush1.msra.mxu0 0.0
          %912 = vmatprep.subr.mxu0 0.0
          %913 = vmatpush1.msra.mxu0 0.0
          %914 = vmatprep.subr.mxu0 0.0
          %915 = vmatpush1.msra.mxu0 0.0
          %916 = vmatprep.subr.mxu0 0.0
          %917 = vmatpush1.msra.mxu0 0.0
          %918 = vmatprep.subr.mxu0 0.0
          %919 = vmatpush1.msra.mxu0 0.0
          %920 = vmatprep.subr.mxu0 0.0
          %921 = vmatpush1.msra.mxu0 0.0
          %922 = vmatprep.subr.mxu0 0.0
          %923 = vmatpush1.msra.mxu0 0.0
          %924 = vmatprep.subr.mxu0 0.0
          %925 = vmatpush1.msra.mxu0 0.0
          %v926 = vand.u32 %v816, 4294901760
          %v927 = vsub.f32 %v816, %v926
          %v928 = vand.u32 %v927, 4294901760
          %v929 = vsub.f32 %v927, %v928
          %v930 = vand.u32 %v929, 4294901760
          %931 = vmatprep.subr.mxu0 %v930
          %v932 = vand.u32 %v813, 4294901760
          %v933 = vsub.f32 %v813, %v932
          %v934 = vand.u32 %v933, 4294901760
          %v935 = vsub.f32 %v933, %v934
          %v936 = vand.u32 %v935, 4294901760
          %937 = vmatpush1.msra.mxu0 %v936
          %v938 = vand.u32 %v792, 4294901760
          %v939 = vsub.f32 %v792, %v938
          %v940 = vand.u32 %v939, 4294901760
          %v941 = vsub.f32 %v939, %v940
          %v942 = vand.u32 %v941, 4294901760
          %943 = vmatprep.subr.mxu0 %v942
          %v944 = vand.u32 %v791, 4294901760
          %v945 = vsub.f32 %v791, %v944
          %v946 = vand.u32 %v945, 4294901760
          %v947 = vsub.f32 %v945, %v946
          %v948 = vand.u32 %v947, 4294901760
          %949 = vmatpush1.msra.mxu0 %v948
          %950 = vmatprep.subr.mxu0 0.0
          %951 = vmatpush2.msra.mxu0 0.0
          %952 = vmatprep.subr.mxu0 0.0
          %953 = vmatpush2.msra.mxu0 0.0
          %954 = vmatprep.subr.mxu0 0.0
          %955 = vmatpush2.msra.mxu0 0.0
          %956 = vmatprep.subr.mxu0 0.0
          %957 = vmatpush2.msra.mxu0 0.0
          %958 = vmatprep.subr.mxu0 0.0
          %959 = vmatpush2.msra.mxu0 0.0
          %960 = vmatprep.subr.mxu0 0.0
          %961 = vmatpush2.msra.mxu0 0.0
          %962 = vmatprep.subr.mxu0 0.0
          %963 = vmatpush2.msra.mxu0 0.0
          %964 = vmatprep.subr.mxu0 0.0
          %965 = vmatpush2.msra.mxu0 0.0
          %966 = vmatprep.subr.mxu0 0.0
          %967 = vmatpush2.msra.mxu0 0.0
          %968 = vmatprep.subr.mxu0 0.0
          %969 = vmatpush2.msra.mxu0 0.0
          %970 = vmatprep.subr.mxu0 0.0
          %971 = vmatpush2.msra.mxu0 0.0
          %972 = vmatprep.subr.mxu0 0.0
          %973 = vmatpush2.msra.mxu0 0.0
          %974 = vmatprep.subr.mxu0 0.0
          %975 = vmatpush2.msra.mxu0 0.0
          %976 = vmatprep.subr.mxu0 0.0
          %977 = vmatpush2.msra.mxu0 0.0
          %978 = vmatprep.subr.mxu0 0.0
          %979 = vmatpush2.msra.mxu0 0.0
          %980 = vmatprep.subr.mxu0 0.0
          %981 = vmatpush2.msra.mxu0 0.0
          %982 = vmatprep.mubr.f32.mxu0 0.0
          %v983 = vand.u32 %v809, 4294901760
          %984 = vmatmul.mubr.f32.gmra.mxu0 %v983
          %v985 = vpop.f32.mrf.mxu0
          %v986 = vadd.f32 %v894, %v985
          %v987 = vpop.f32.mrf.mxu0
          %v988 = vadd.f32 %v896, %v987
          %989 = vdwg.mxu0
          %990 = vmatprep.subr.mxu0 0.0
          %991 = vmatpush1.msra.mxu0 0.0
          %992 = vmatprep.subr.mxu0 0.0
          %993 = vmatpush1.msra.mxu0 0.0
          %994 = vmatprep.subr.mxu0 0.0
          %995 = vmatpush1.msra.mxu0 0.0
          %996 = vmatprep.subr.mxu0 0.0
          %997 = vmatpush1.msra.mxu0 0.0
          %998 = vmatprep.subr.mxu0 0.0
          %999 = vmatpush1.msra.mxu0 0.0
          %1000 = vmatprep.subr.mxu0 0.0
          %1001 = vmatpush1.msra.mxu0 0.0
          %1002 = vmatprep.subr.mxu0 0.0
          %1003 = vmatpush1.msra.mxu0 0.0
          %1004 = vmatprep.subr.mxu0 0.0
          %1005 = vmatpush1.msra.mxu0 0.0
          %1006 = vmatprep.subr.mxu0 0.0
          %1007 = vmatpush1.msra.mxu0 0.0
          %1008 = vmatprep.subr.mxu0 0.0
          %1009 = vmatpush1.msra.mxu0 0.0
          %1010 = vmatprep.subr.mxu0 0.0
          %1011 = vmatpush1.msra.mxu0 0.0
          %1012 = vmatprep.subr.mxu0 0.0
          %1013 = vmatpush1.msra.mxu0 0.0
          %1014 = vmatprep.subr.mxu0 0.0
          %1015 = vmatpush1.msra.mxu0 0.0
          %1016 = vmatprep.subr.mxu0 0.0
          %1017 = vmatpush1.msra.mxu0 0.0
          %v1018 = vand.u32 %v816, 4294901760
          %v1019 = vsub.f32 %v816, %v1018
          %1020 = vmatprep.subr.mxu0 %v1019
          %v1021 = vand.u32 %v813, 4294901760
          %v1022 = vsub.f32 %v813, %v1021
          %1023 = vmatpush1.msra.mxu0 %v1022
          %v1024 = vand.u32 %v792, 4294901760
          %v1025 = vsub.f32 %v792, %v1024
          %1026 = vmatprep.subr.mxu0 %v1025
          %v1027 = vand.u32 %v791, 4294901760
          %v1028 = vsub.f32 %v791, %v1027
          %1029 = vmatpush1.msra.mxu0 %v1028
          %1030 = vmatprep.subr.mxu0 0.0
          %1031 = vmatpush2.msra.mxu0 0.0
          %1032 = vmatprep.subr.mxu0 0.0
          %1033 = vmatpush2.msra.mxu0 0.0
          %1034 = vmatprep.subr.mxu0 0.0
          %1035 = vmatpush2.msra.mxu0 0.0
          %1036 = vmatprep.subr.mxu0 0.0
          %1037 = vmatpush2.msra.mxu0 0.0
          %1038 = vmatprep.subr.mxu0 0.0
          %1039 = vmatpush2.msra.mxu0 0.0
          %1040 = vmatprep.subr.mxu0 0.0
          %1041 = vmatpush2.msra.mxu0 0.0
          %1042 = vmatprep.subr.mxu0 0.0
          %1043 = vmatpush2.msra.mxu0 0.0
          %1044 = vmatprep.subr.mxu0 0.0
          %1045 = vmatpush2.msra.mxu0 0.0
          %1046 = vmatprep.subr.mxu0 0.0
          %1047 = vmatpush2.msra.mxu0 0.0
          %1048 = vmatprep.subr.mxu0 0.0
          %1049 = vmatpush2.msra.mxu0 0.0
          %1050 = vmatprep.subr.mxu0 0.0
          %1051 = vmatpush2.msra.mxu0 0.0
          %1052 = vmatprep.subr.mxu0 0.0
          %1053 = vmatpush2.msra.mxu0 0.0
          %1054 = vmatprep.subr.mxu0 0.0
          %1055 = vmatpush2.msra.mxu0 0.0
          %1056 = vmatprep.subr.mxu0 0.0
          %1057 = vmatpush2.msra.mxu0 0.0
          %1058 = vmatprep.subr.mxu0 0.0
          %1059 = vmatpush2.msra.mxu0 0.0
          %1060 = vmatprep.subr.mxu0 0.0
          %1061 = vmatpush2.msra.mxu0 0.0
          %1062 = vmatprep.mubr.f32.mxu0 0.0
          %v1063 = vand.u32 %v809, 4294901760
          %v1064 = vsub.f32 %v809, %v1063
          %1065 = vmatmul.mubr.f32.gmra.mxu0 %v1064
          %v1066 = vpop.f32.mrf.mxu0
          %v1067 = vadd.f32 %v986, %v1066
          %v1068 = vpop.f32.mrf.mxu0
          %v1069 = vadd.f32 %v988, %v1068
          %1070 = vdwg.mxu0
          %1071 = vmatprep.subr.mxu0 0.0
          %1072 = vmatpush1.msra.mxu0 0.0
          %1073 = vmatprep.subr.mxu0 0.0
          %1074 = vmatpush1.msra.mxu0 0.0
          %1075 = vmatprep.subr.mxu0 0.0
          %1076 = vmatpush1.msra.mxu0 0.0
          %1077 = vmatprep.subr.mxu0 0.0
          %1078 = vmatpush1.msra.mxu0 0.0
          %1079 = vmatprep.subr.mxu0 0.0
          %1080 = vmatpush1.msra.mxu0 0.0
          %1081 = vmatprep.subr.mxu0 0.0
          %1082 = vmatpush1.msra.mxu0 0.0
          %1083 = vmatprep.subr.mxu0 0.0
          %1084 = vmatpush1.msra.mxu0 0.0
          %1085 = vmatprep.subr.mxu0 0.0
          %1086 = vmatpush1.msra.mxu0 0.0
          %1087 = vmatprep.subr.mxu0 0.0
          %1088 = vmatpush1.msra.mxu0 0.0
          %1089 = vmatprep.subr.mxu0 0.0
          %1090 = vmatpush1.msra.mxu0 0.0
          %1091 = vmatprep.subr.mxu0 0.0
          %1092 = vmatpush1.msra.mxu0 0.0
          %1093 = vmatprep.subr.mxu0 0.0
          %1094 = vmatpush1.msra.mxu0 0.0
          %1095 = vmatprep.subr.mxu0 0.0
          %1096 = vmatpush1.msra.mxu0 0.0
          %1097 = vmatprep.subr.mxu0 0.0
          %1098 = vmatpush1.msra.mxu0 0.0
          %v1099 = vand.u32 %v816, 4294901760
          %1100 = vmatprep.subr.mxu0 %v1099
          %v1101 = vand.u32 %v813, 4294901760
          %1102 = vmatpush1.msra.mxu0 %v1101
          %v1103 = vand.u32 %v792, 4294901760
          %1104 = vmatprep.subr.mxu0 %v1103
          %v1105 = vand.u32 %v791, 4294901760
          %1106 = vmatpush1.msra.mxu0 %v1105
          %1107 = vmatprep.subr.mxu0 0.0
          %1108 = vmatpush2.msra.mxu0 0.0
          %1109 = vmatprep.subr.mxu0 0.0
          %1110 = vmatpush2.msra.mxu0 0.0
          %1111 = vmatprep.subr.mxu0 0.0
          %1112 = vmatpush2.msra.mxu0 0.0
          %1113 = vmatprep.subr.mxu0 0.0
          %1114 = vmatpush2.msra.mxu0 0.0
          %1115 = vmatprep.subr.mxu0 0.0
          %1116 = vmatpush2.msra.mxu0 0.0
          %1117 = vmatprep.subr.mxu0 0.0
          %1118 = vmatpush2.msra.mxu0 0.0
          %1119 = vmatprep.subr.mxu0 0.0
          %1120 = vmatpush2.msra.mxu0 0.0
          %1121 = vmatprep.subr.mxu0 0.0
          %1122 = vmatpush2.msra.mxu0 0.0
          %1123 = vmatprep.subr.mxu0 0.0
          %1124 = vmatpush2.msra.mxu0 0.0
          %1125 = vmatprep.subr.mxu0 0.0
          %1126 = vmatpush2.msra.mxu0 0.0
          %1127 = vmatprep.subr.mxu0 0.0
          %1128 = vmatpush2.msra.mxu0 0.0
          %1129 = vmatprep.subr.mxu0 0.0
          %1130 = vmatpush2.msra.mxu0 0.0
          %1131 = vmatprep.subr.mxu0 0.0
          %1132 = vmatpush2.msra.mxu0 0.0
          %1133 = vmatprep.subr.mxu0 0.0
          %1134 = vmatpush2.msra.mxu0 0.0
          %1135 = vmatprep.subr.mxu0 0.0
          %1136 = vmatpush2.msra.mxu0 0.0
          %1137 = vmatprep.subr.mxu0 0.0
          %1138 = vmatpush2.msra.mxu0 0.0
          %1139 = vmatprep.mubr.f32.mxu0 0.0
          %v1140 = vand.u32 %v809, 4294901760
          %v1141 = vsub.f32 %v809, %v1140
          %v1142 = vand.u32 %v1141, 4294901760
          %1143 = vmatmul.mubr.f32.gmra.mxu0 %v1142
          %v1144 = vpop.f32.mrf.mxu0
          %v1145 = vadd.f32 %v1067, %v1144
          %v1146 = vpop.f32.mrf.mxu0
          %v1147 = vadd.f32 %v1069, %v1146
          %1148 = vdwg.mxu0
          %1149 = vmatprep.subr.mxu0 0.0
          %1150 = vmatpush1.msra.mxu0 0.0
          %1151 = vmatprep.subr.mxu0 0.0
          %1152 = vmatpush1.msra.mxu0 0.0
          %1153 = vmatprep.subr.mxu0 0.0
          %1154 = vmatpush1.msra.mxu0 0.0
          %1155 = vmatprep.subr.mxu0 0.0
          %1156 = vmatpush1.msra.mxu0 0.0
          %1157 = vmatprep.subr.mxu0 0.0
          %1158 = vmatpush1.msra.mxu0 0.0
          %1159 = vmatprep.subr.mxu0 0.0
          %1160 = vmatpush1.msra.mxu0 0.0
          %1161 = vmatprep.subr.mxu0 0.0
          %1162 = vmatpush1.msra.mxu0 0.0
          %1163 = vmatprep.subr.mxu0 0.0
          %1164 = vmatpush1.msra.mxu0 0.0
          %1165 = vmatprep.subr.mxu0 0.0
          %1166 = vmatpush1.msra.mxu0 0.0
          %1167 = vmatprep.subr.mxu0 0.0
          %1168 = vmatpush1.msra.mxu0 0.0
          %1169 = vmatprep.subr.mxu0 0.0
          %1170 = vmatpush1.msra.mxu0 0.0
          %1171 = vmatprep.subr.mxu0 0.0
          %1172 = vmatpush1.msra.mxu0 0.0
          %1173 = vmatprep.subr.mxu0 0.0
          %1174 = vmatpush1.msra.mxu0 0.0
          %1175 = vmatprep.subr.mxu0 0.0
          %1176 = vmatpush1.msra.mxu0 0.0
          %v1177 = vand.u32 %v816, 4294901760
          %v1178 = vsub.f32 %v816, %v1177
          %v1179 = vand.u32 %v1178, 4294901760
          %1180 = vmatprep.subr.mxu0 %v1179
          %v1181 = vand.u32 %v813, 4294901760
          %v1182 = vsub.f32 %v813, %v1181
          %v1183 = vand.u32 %v1182, 4294901760
          %1184 = vmatpush1.msra.mxu0 %v1183
          %v1185 = vand.u32 %v792, 4294901760
          %v1186 = vsub.f32 %v792, %v1185
          %v1187 = vand.u32 %v1186, 4294901760
          %1188 = vmatprep.subr.mxu0 %v1187
          %v1189 = vand.u32 %v791, 4294901760
          %v1190 = vsub.f32 %v791, %v1189
          %v1191 = vand.u32 %v1190, 4294901760
          %1192 = vmatpush1.msra.mxu0 %v1191
          %1193 = vmatprep.subr.mxu0 0.0
          %1194 = vmatpush2.msra.mxu0 0.0
          %1195 = vmatprep.subr.mxu0 0.0
          %1196 = vmatpush2.msra.mxu0 0.0
          %1197 = vmatprep.subr.mxu0 0.0
          %1198 = vmatpush2.msra.mxu0 0.0
          %1199 = vmatprep.subr.mxu0 0.0
          %1200 = vmatpush2.msra.mxu0 0.0
          %1201 = vmatprep.subr.mxu0 0.0
          %1202 = vmatpush2.msra.mxu0 0.0
          %1203 = vmatprep.subr.mxu0 0.0
          %1204 = vmatpush2.msra.mxu0 0.0
          %1205 = vmatprep.subr.mxu0 0.0
          %1206 = vmatpush2.msra.mxu0 0.0
          %1207 = vmatprep.subr.mxu0 0.0
          %1208 = vmatpush2.msra.mxu0 0.0
          %1209 = vmatprep.subr.mxu0 0.0
          %1210 = vmatpush2.msra.mxu0 0.0
          %1211 = vmatprep.subr.mxu0 0.0
          %1212 = vmatpush2.msra.mxu0 0.0
          %1213 = vmatprep.subr.mxu0 0.0
          %1214 = vmatpush2.msra.mxu0 0.0
          %1215 = vmatprep.subr.mxu0 0.0
          %1216 = vmatpush2.msra.mxu0 0.0
          %1217 = vmatprep.subr.mxu0 0.0
          %1218 = vmatpush2.msra.mxu0 0.0
          %1219 = vmatprep.subr.mxu0 0.0
          %1220 = vmatpush2.msra.mxu0 0.0
          %1221 = vmatprep.subr.mxu0 0.0
          %1222 = vmatpush2.msra.mxu0 0.0
          %1223 = vmatprep.subr.mxu0 0.0
          %1224 = vmatpush2.msra.mxu0 0.0
          %1225 = vmatprep.mubr.f32.mxu0 0.0
          %v1226 = vand.u32 %v809, 4294901760
          %1227 = vmatmul.mubr.f32.gmra.mxu0 %v1226
          %v1228 = vpop.f32.mrf.mxu0
          %v1229 = vadd.f32 %v1145, %v1228
          %v1230 = vpop.f32.mrf.mxu0
          %v1231 = vadd.f32 %v1147, %v1230
          %1232 = vdwg.mxu0
          %1233 = vmatprep.subr.mxu0 0.0
          %1234 = vmatpush1.msra.mxu0 0.0
          %1235 = vmatprep.subr.mxu0 0.0
          %1236 = vmatpush1.msra.mxu0 0.0
          %1237 = vmatprep.subr.mxu0 0.0
          %1238 = vmatpush1.msra.mxu0 0.0
          %1239 = vmatprep.subr.mxu0 0.0
          %1240 = vmatpush1.msra.mxu0 0.0
          %1241 = vmatprep.subr.mxu0 0.0
          %1242 = vmatpush1.msra.mxu0 0.0
          %1243 = vmatprep.subr.mxu0 0.0
          %1244 = vmatpush1.msra.mxu0 0.0
          %1245 = vmatprep.subr.mxu0 0.0
          %1246 = vmatpush1.msra.mxu0 0.0
          %1247 = vmatprep.subr.mxu0 0.0
          %1248 = vmatpush1.msra.mxu0 0.0
          %1249 = vmatprep.subr.mxu0 0.0
          %1250 = vmatpush1.msra.mxu0 0.0
          %1251 = vmatprep.subr.mxu0 0.0
          %1252 = vmatpush1.msra.mxu0 0.0
          %1253 = vmatprep.subr.mxu0 0.0
          %1254 = vmatpush1.msra.mxu0 0.0
          %1255 = vmatprep.subr.mxu0 0.0
          %1256 = vmatpush1.msra.mxu0 0.0
          %1257 = vmatprep.subr.mxu0 0.0
          %1258 = vmatpush1.msra.mxu0 0.0
          %1259 = vmatprep.subr.mxu0 0.0
          %1260 = vmatpush1.msra.mxu0 0.0
          %v1261 = vand.u32 %v816, 4294901760
          %1262 = vmatprep.subr.mxu0 %v1261
          %v1263 = vand.u32 %v813, 4294901760
          %1264 = vmatpush1.msra.mxu0 %v1263
          %v1265 = vand.u32 %v792, 4294901760
          %1266 = vmatprep.subr.mxu0 %v1265
          %v1267 = vand.u32 %v791, 4294901760
          %1268 = vmatpush1.msra.mxu0 %v1267
          %1269 = vmatprep.subr.mxu0 0.0
          %1270 = vmatpush2.msra.mxu0 0.0
          %1271 = vmatprep.subr.mxu0 0.0
          %1272 = vmatpush2.msra.mxu0 0.0
          %1273 = vmatprep.subr.mxu0 0.0
          %1274 = vmatpush2.msra.mxu0 0.0
          %1275 = vmatprep.subr.mxu0 0.0
          %1276 = vmatpush2.msra.mxu0 0.0
          %1277 = vmatprep.subr.mxu0 0.0
          %1278 = vmatpush2.msra.mxu0 0.0
          %1279 = vmatprep.subr.mxu0 0.0
          %1280 = vmatpush2.msra.mxu0 0.0
          %1281 = vmatprep.subr.mxu0 0.0
          %1282 = vmatpush2.msra.mxu0 0.0
          %1283 = vmatprep.subr.mxu0 0.0
          %1284 = vmatpush2.msra.mxu0 0.0
          %1285 = vmatprep.subr.mxu0 0.0
          %1286 = vmatpush2.msra.mxu0 0.0
          %1287 = vmatprep.subr.mxu0 0.0
          %1288 = vmatpush2.msra.mxu0 0.0
          %1289 = vmatprep.subr.mxu0 0.0
          %1290 = vmatpush2.msra.mxu0 0.0
          %1291 = vmatprep.subr.mxu0 0.0
          %1292 = vmatpush2.msra.mxu0 0.0
          %1293 = vmatprep.subr.mxu0 0.0
          %1294 = vmatpush2.msra.mxu0 0.0
          %1295 = vmatprep.subr.mxu0 0.0
          %1296 = vmatpush2.msra.mxu0 0.0
          %1297 = vmatprep.subr.mxu0 0.0
          %1298 = vmatpush2.msra.mxu0 0.0
          %1299 = vmatprep.subr.mxu0 0.0
          %1300 = vmatpush2.msra.mxu0 0.0
          %1301 = vmatprep.mubr.f32.mxu0 0.0
          %v1302 = vand.u32 %v809, 4294901760
          %1303 = vmatmul.mubr.f32.gmra.mxu0 %v1302
          %v1304 = vpop.f32.mrf.mxu0
          %v1305 = vadd.f32 %v1229, %v1304
          %v1306 = vpop.f32.mrf.mxu0
          %v1307 = vadd.f32 %v1231, %v1306
          %1308 = vdwg.mxu0
          %s1309 = smul.u32 %s31, 2
          %s1310 = smul.addr %s1309, 8
          %s1311 = scalar_lea.vmem [#allocation3], %s1310
          %1312 = vst [vmem:[%s1311] sm:$0xff] %v1305
          %1313 = vst [vmem:[%s1311 + $0x8] sm:$0xff] %v1307
        $region56: #{tpu_custom_call.1} parent=35 // pred_fallthru
          _
        %s1314 = smul.u32 %s31, 2
        %s1315 = smul.addr %s1314, 8
        %s1316 = scalar_lea.vmem [#allocation3], %s1315
        %v1317 = vld [vmem:[%s1316] sm:$0xff]
        %v1318 = vld [vmem:[%s1316 + $0x8] sm:$0xff]
        %v1319 = vld [vmem:[#allocation2] sm:$0xff]
        %1320 = vmatprep.subr.mxu0 0.0
        %1321 = vmatpush1.xpose.msra.mxu0 0.0
        %1322 = vmatprep.subr.mxu0 0.0
        %1323 = vmatpush1.xpose.msra.mxu0 0.0
        %1324 = vmatprep.subr.mxu0 0.0
        %1325 = vmatpush1.xpose.msra.mxu0 0.0
        %1326 = vmatprep.subr.mxu0 0.0
        %1327 = vmatpush1.xpose.msra.mxu0 0.0
        %1328 = vmatprep.subr.mxu0 0.0
        %1329 = vmatpush1.xpose.msra.mxu0 0.0
        %1330 = vmatprep.subr.mxu0 0.0
        %1331 = vmatpush1.xpose.msra.mxu0 0.0
        %1332 = vmatprep.subr.mxu0 0.0
        %1333 = vmatpush1.xpose.msra.mxu0 0.0
        %1334 = vmatprep.subr.mxu0 0.0
        %1335 = vmatpush1.xpose.msra.mxu0 0.0
        %1336 = vmatprep.subr.mxu0 0.0
        %1337 = vmatpush1.xpose.msra.mxu0 0.0
        %1338 = vmatprep.subr.mxu0 0.0
        %1339 = vmatpush1.xpose.msra.mxu0 0.0
        %1340 = vmatprep.subr.mxu0 0.0
        %1341 = vmatpush1.xpose.msra.mxu0 0.0
        %1342 = vmatprep.subr.mxu0 0.0
        %1343 = vmatpush1.xpose.msra.mxu0 0.0
        %1344 = vmatprep.subr.mxu0 0.0
        %1345 = vmatpush1.xpose.msra.mxu0 0.0
        %1346 = vmatprep.subr.mxu0 0.0
        %1347 = vmatpush1.xpose.msra.mxu0 0.0
        %1348 = vmatprep.subr.mxu0 0.0
        %1349 = vmatpush1.xpose.msra.mxu0 0.0
        %1350 = vmatprep.subr.mxu0 0.0
        %v1351 = vand.u32 %v1317, 4294901760
        %1352 = vmatpush1.xpose.msra.mxu0 %v1351
        %1353 = vmatprep.subr.mxu0 0.0
        %1354 = vmatpush2.xpose.msra.mxu0 0.0
        %1355 = vmatprep.subr.mxu0 0.0
        %1356 = vmatpush2.xpose.msra.mxu0 0.0
        %1357 = vmatprep.subr.mxu0 0.0
        %1358 = vmatpush2.xpose.msra.mxu0 0.0
        %1359 = vmatprep.subr.mxu0 0.0
        %1360 = vmatpush2.xpose.msra.mxu0 0.0
        %1361 = vmatprep.subr.mxu0 0.0
        %1362 = vmatpush2.xpose.msra.mxu0 0.0
        %1363 = vmatprep.subr.mxu0 0.0
        %1364 = vmatpush2.xpose.msra.mxu0 0.0
        %1365 = vmatprep.subr.mxu0 0.0
        %1366 = vmatpush2.xpose.msra.mxu0 0.0
        %1367 = vmatprep.subr.mxu0 0.0
        %1368 = vmatpush2.xpose.msra.mxu0 0.0
        %1369 = vmatprep.subr.mxu0 0.0
        %1370 = vmatpush2.xpose.msra.mxu0 0.0
        %1371 = vmatprep.subr.mxu0 0.0
        %1372 = vmatpush2.xpose.msra.mxu0 0.0
        %1373 = vmatprep.subr.mxu0 0.0
        %1374 = vmatpush2.xpose.msra.mxu0 0.0
        %1375 = vmatprep.subr.mxu0 0.0
        %1376 = vmatpush2.xpose.msra.mxu0 0.0
        %1377 = vmatprep.subr.mxu0 0.0
        %1378 = vmatpush2.xpose.msra.mxu0 0.0
        %1379 = vmatprep.subr.mxu0 0.0
        %1380 = vmatpush2.xpose.msra.mxu0 0.0
        %1381 = vmatprep.subr.mxu0 0.0
        %1382 = vmatpush2.xpose.msra.mxu0 0.0
        %1383 = vmatprep.subr.mxu0 0.0
        %1384 = vmatpush2.xpose.msra.mxu0 0.0
        %1385 = vmatprep.mubr.f32.mxu0 0.0
        %v1386 = vand.u32 %v1319, 4294901760
        %v1387 = vsub.f32 %v1319, %v1386
        %v1388 = vand.u32 %v1387, 4294901760
        %v1389 = vsub.f32 %v1387, %v1388
        %v1390 = vand.u32 %v1389, 4294901760
        %1391 = vmatmul.mubr.f32.gmra.mxu0 %v1390
        %v1392 = vpop.f32.mrf.mxu0
        %v1393 = vadd.f32 0.0, %v1392
        %v1394 = vpop.f32.mrf.mxu0
        %1395 = vdwg.mxu0
        %1396 = vmatprep.subr.mxu0 0.0
        %1397 = vmatpush1.xpose.msra.mxu0 0.0
        %1398 = vmatprep.subr.mxu0 0.0
        %1399 = vmatpush1.xpose.msra.mxu0 0.0
        %1400 = vmatprep.subr.mxu0 0.0
        %1401 = vmatpush1.xpose.msra.mxu0 0.0
        %1402 = vmatprep.subr.mxu0 0.0
        %1403 = vmatpush1.xpose.msra.mxu0 0.0
        %1404 = vmatprep.subr.mxu0 0.0
        %1405 = vmatpush1.xpose.msra.mxu0 0.0
        %1406 = vmatprep.subr.mxu0 0.0
        %1407 = vmatpush1.xpose.msra.mxu0 0.0
        %1408 = vmatprep.subr.mxu0 0.0
        %1409 = vmatpush1.xpose.msra.mxu0 0.0
        %1410 = vmatprep.subr.mxu0 0.0
        %1411 = vmatpush1.xpose.msra.mxu0 0.0
        %1412 = vmatprep.subr.mxu0 0.0
        %1413 = vmatpush1.xpose.msra.mxu0 0.0
        %1414 = vmatprep.subr.mxu0 0.0
        %1415 = vmatpush1.xpose.msra.mxu0 0.0
        %1416 = vmatprep.subr.mxu0 0.0
        %1417 = vmatpush1.xpose.msra.mxu0 0.0
        %1418 = vmatprep.subr.mxu0 0.0
        %1419 = vmatpush1.xpose.msra.mxu0 0.0
        %1420 = vmatprep.subr.mxu0 0.0
        %1421 = vmatpush1.xpose.msra.mxu0 0.0
        %1422 = vmatprep.subr.mxu0 0.0
        %1423 = vmatpush1.xpose.msra.mxu0 0.0
        %1424 = vmatprep.subr.mxu0 0.0
        %1425 = vmatpush1.xpose.msra.mxu0 0.0
        %1426 = vmatprep.subr.mxu0 0.0
        %v1427 = vand.u32 %v1317, 4294901760
        %v1428 = vsub.f32 %v1317, %v1427
        %v1429 = vand.u32 %v1428, 4294901760
        %v1430 = vsub.f32 %v1428, %v1429
        %v1431 = vand.u32 %v1430, 4294901760
        %1432 = vmatpush1.xpose.msra.mxu0 %v1431
        %1433 = vmatprep.subr.mxu0 0.0
        %1434 = vmatpush2.xpose.msra.mxu0 0.0
        %1435 = vmatprep.subr.mxu0 0.0
        %1436 = vmatpush2.xpose.msra.mxu0 0.0
        %1437 = vmatprep.subr.mxu0 0.0
        %1438 = vmatpush2.xpose.msra.mxu0 0.0
        %1439 = vmatprep.subr.mxu0 0.0
        %1440 = vmatpush2.xpose.msra.mxu0 0.0
        %1441 = vmatprep.subr.mxu0 0.0
        %1442 = vmatpush2.xpose.msra.mxu0 0.0
        %1443 = vmatprep.subr.mxu0 0.0
        %1444 = vmatpush2.xpose.msra.mxu0 0.0
        %1445 = vmatprep.subr.mxu0 0.0
        %1446 = vmatpush2.xpose.msra.mxu0 0.0
        %1447 = vmatprep.subr.mxu0 0.0
        %1448 = vmatpush2.xpose.msra.mxu0 0.0
        %1449 = vmatprep.subr.mxu0 0.0
        %1450 = vmatpush2.xpose.msra.mxu0 0.0
        %1451 = vmatprep.subr.mxu0 0.0
        %1452 = vmatpush2.xpose.msra.mxu0 0.0
        %1453 = vmatprep.subr.mxu0 0.0
        %1454 = vmatpush2.xpose.msra.mxu0 0.0
        %1455 = vmatprep.subr.mxu0 0.0
        %1456 = vmatpush2.xpose.msra.mxu0 0.0
        %1457 = vmatprep.subr.mxu0 0.0
        %1458 = vmatpush2.xpose.msra.mxu0 0.0
        %1459 = vmatprep.subr.mxu0 0.0
        %1460 = vmatpush2.xpose.msra.mxu0 0.0
        %1461 = vmatprep.subr.mxu0 0.0
        %1462 = vmatpush2.xpose.msra.mxu0 0.0
        %1463 = vmatprep.subr.mxu0 0.0
        %1464 = vmatpush2.xpose.msra.mxu0 0.0
        %1465 = vmatprep.mubr.f32.mxu0 0.0
        %v1466 = vand.u32 %v1319, 4294901760
        %1467 = vmatmul.mubr.f32.gmra.mxu0 %v1466
        %v1468 = vpop.f32.mrf.mxu0
        %v1469 = vadd.f32 %v1393, %v1468
        %v1470 = vpop.f32.mrf.mxu0
        %1471 = vdwg.mxu0
        %1472 = vmatprep.subr.mxu0 0.0
        %1473 = vmatpush1.xpose.msra.mxu0 0.0
        %1474 = vmatprep.subr.mxu0 0.0
        %1475 = vmatpush1.xpose.msra.mxu0 0.0
        %1476 = vmatprep.subr.mxu0 0.0
        %1477 = vmatpush1.xpose.msra.mxu0 0.0
        %1478 = vmatprep.subr.mxu0 0.0
        %1479 = vmatpush1.xpose.msra.mxu0 0.0
        %1480 = vmatprep.subr.mxu0 0.0
        %1481 = vmatpush1.xpose.msra.mxu0 0.0
        %1482 = vmatprep.subr.mxu0 0.0
        %1483 = vmatpush1.xpose.msra.mxu0 0.0
        %1484 = vmatprep.subr.mxu0 0.0
        %1485 = vmatpush1.xpose.msra.mxu0 0.0
        %1486 = vmatprep.subr.mxu0 0.0
        %1487 = vmatpush1.xpose.msra.mxu0 0.0
        %1488 = vmatprep.subr.mxu0 0.0
        %1489 = vmatpush1.xpose.msra.mxu0 0.0
        %1490 = vmatprep.subr.mxu0 0.0
        %1491 = vmatpush1.xpose.msra.mxu0 0.0
        %1492 = vmatprep.subr.mxu0 0.0
        %1493 = vmatpush1.xpose.msra.mxu0 0.0
        %1494 = vmatprep.subr.mxu0 0.0
        %1495 = vmatpush1.xpose.msra.mxu0 0.0
        %1496 = vmatprep.subr.mxu0 0.0
        %1497 = vmatpush1.xpose.msra.mxu0 0.0
        %1498 = vmatprep.subr.mxu0 0.0
        %1499 = vmatpush1.xpose.msra.mxu0 0.0
        %1500 = vmatprep.subr.mxu0 0.0
        %1501 = vmatpush1.xpose.msra.mxu0 0.0
        %1502 = vmatprep.subr.mxu0 0.0
        %v1503 = vand.u32 %v1317, 4294901760
        %v1504 = vsub.f32 %v1317, %v1503
        %1505 = vmatpush1.xpose.msra.mxu0 %v1504
        %1506 = vmatprep.subr.mxu0 0.0
        %1507 = vmatpush2.xpose.msra.mxu0 0.0
        %1508 = vmatprep.subr.mxu0 0.0
        %1509 = vmatpush2.xpose.msra.mxu0 0.0
        %1510 = vmatprep.subr.mxu0 0.0
        %1511 = vmatpush2.xpose.msra.mxu0 0.0
        %1512 = vmatprep.subr.mxu0 0.0
        %1513 = vmatpush2.xpose.msra.mxu0 0.0
        %1514 = vmatprep.subr.mxu0 0.0
        %1515 = vmatpush2.xpose.msra.mxu0 0.0
        %1516 = vmatprep.subr.mxu0 0.0
        %1517 = vmatpush2.xpose.msra.mxu0 0.0
        %1518 = vmatprep.subr.mxu0 0.0
        %1519 = vmatpush2.xpose.msra.mxu0 0.0
        %1520 = vmatprep.subr.mxu0 0.0
        %1521 = vmatpush2.xpose.msra.mxu0 0.0
        %1522 = vmatprep.subr.mxu0 0.0
        %1523 = vmatpush2.xpose.msra.mxu0 0.0
        %1524 = vmatprep.subr.mxu0 0.0
        %1525 = vmatpush2.xpose.msra.mxu0 0.0
        %1526 = vmatprep.subr.mxu0 0.0
        %1527 = vmatpush2.xpose.msra.mxu0 0.0
        %1528 = vmatprep.subr.mxu0 0.0
        %1529 = vmatpush2.xpose.msra.mxu0 0.0
        %1530 = vmatprep.subr.mxu0 0.0
        %1531 = vmatpush2.xpose.msra.mxu0 0.0
        %1532 = vmatprep.subr.mxu0 0.0
        %1533 = vmatpush2.xpose.msra.mxu0 0.0
        %1534 = vmatprep.subr.mxu0 0.0
        %1535 = vmatpush2.xpose.msra.mxu0 0.0
        %1536 = vmatprep.subr.mxu0 0.0
        %1537 = vmatpush2.xpose.msra.mxu0 0.0
        %1538 = vmatprep.mubr.f32.mxu0 0.0
        %v1539 = vand.u32 %v1319, 4294901760
        %v1540 = vsub.f32 %v1319, %v1539
        %1541 = vmatmul.mubr.f32.gmra.mxu0 %v1540
        %v1542 = vpop.f32.mrf.mxu0
        %v1543 = vadd.f32 %v1469, %v1542
        %v1544 = vpop.f32.mrf.mxu0
        %1545 = vdwg.mxu0
        %1546 = vmatprep.subr.mxu0 0.0
        %1547 = vmatpush1.xpose.msra.mxu0 0.0
        %1548 = vmatprep.subr.mxu0 0.0
        %1549 = vmatpush1.xpose.msra.mxu0 0.0
        %1550 = vmatprep.subr.mxu0 0.0
        %1551 = vmatpush1.xpose.msra.mxu0 0.0
        %1552 = vmatprep.subr.mxu0 0.0
        %1553 = vmatpush1.xpose.msra.mxu0 0.0
        %1554 = vmatprep.subr.mxu0 0.0
        %1555 = vmatpush1.xpose.msra.mxu0 0.0
        %1556 = vmatprep.subr.mxu0 0.0
        %1557 = vmatpush1.xpose.msra.mxu0 0.0
        %1558 = vmatprep.subr.mxu0 0.0
        %1559 = vmatpush1.xpose.msra.mxu0 0.0
        %1560 = vmatprep.subr.mxu0 0.0
        %1561 = vmatpush1.xpose.msra.mxu0 0.0
        %1562 = vmatprep.subr.mxu0 0.0
        %1563 = vmatpush1.xpose.msra.mxu0 0.0
        %1564 = vmatprep.subr.mxu0 0.0
        %1565 = vmatpush1.xpose.msra.mxu0 0.0
        %1566 = vmatprep.subr.mxu0 0.0
        %1567 = vmatpush1.xpose.msra.mxu0 0.0
        %1568 = vmatprep.subr.mxu0 0.0
        %1569 = vmatpush1.xpose.msra.mxu0 0.0
        %1570 = vmatprep.subr.mxu0 0.0
        %1571 = vmatpush1.xpose.msra.mxu0 0.0
        %1572 = vmatprep.subr.mxu0 0.0
        %1573 = vmatpush1.xpose.msra.mxu0 0.0
        %1574 = vmatprep.subr.mxu0 0.0
        %1575 = vmatpush1.xpose.msra.mxu0 0.0
        %1576 = vmatprep.subr.mxu0 0.0
        %v1577 = vand.u32 %v1317, 4294901760
        %1578 = vmatpush1.xpose.msra.mxu0 %v1577
        %1579 = vmatprep.subr.mxu0 0.0
        %1580 = vmatpush2.xpose.msra.mxu0 0.0
        %1581 = vmatprep.subr.mxu0 0.0
        %1582 = vmatpush2.xpose.msra.mxu0 0.0
        %1583 = vmatprep.subr.mxu0 0.0
        %1584 = vmatpush2.xpose.msra.mxu0 0.0
        %1585 = vmatprep.subr.mxu0 0.0
        %1586 = vmatpush2.xpose.msra.mxu0 0.0
        %1587 = vmatprep.subr.mxu0 0.0
        %1588 = vmatpush2.xpose.msra.mxu0 0.0
        %1589 = vmatprep.subr.mxu0 0.0
        %1590 = vmatpush2.xpose.msra.mxu0 0.0
        %1591 = vmatprep.subr.mxu0 0.0
        %1592 = vmatpush2.xpose.msra.mxu0 0.0
        %1593 = vmatprep.subr.mxu0 0.0
        %1594 = vmatpush2.xpose.msra.mxu0 0.0
        %1595 = vmatprep.subr.mxu0 0.0
        %1596 = vmatpush2.xpose.msra.mxu0 0.0
        %1597 = vmatprep.subr.mxu0 0.0
        %1598 = vmatpush2.xpose.msra.mxu0 0.0
        %1599 = vmatprep.subr.mxu0 0.0
        %1600 = vmatpush2.xpose.msra.mxu0 0.0
        %1601 = vmatprep.subr.mxu0 0.0
        %1602 = vmatpush2.xpose.msra.mxu0 0.0
        %1603 = vmatprep.subr.mxu0 0.0
        %1604 = vmatpush2.xpose.msra.mxu0 0.0
        %1605 = vmatprep.subr.mxu0 0.0
        %1606 = vmatpush2.xpose.msra.mxu0 0.0
        %1607 = vmatprep.subr.mxu0 0.0
        %1608 = vmatpush2.xpose.msra.mxu0 0.0
        %1609 = vmatprep.subr.mxu0 0.0
        %1610 = vmatpush2.xpose.msra.mxu0 0.0
        %1611 = vmatprep.mubr.f32.mxu0 0.0
        %v1612 = vand.u32 %v1319, 4294901760
        %v1613 = vsub.f32 %v1319, %v1612
        %v1614 = vand.u32 %v1613, 4294901760
        %1615 = vmatmul.mubr.f32.gmra.mxu0 %v1614
        %v1616 = vpop.f32.mrf.mxu0
        %v1617 = vadd.f32 %v1543, %v1616
        %v1618 = vpop.f32.mrf.mxu0
        %1619 = vdwg.mxu0
        %1620 = vmatprep.subr.mxu0 0.0
        %1621 = vmatpush1.xpose.msra.mxu0 0.0
        %1622 = vmatprep.subr.mxu0 0.0
        %1623 = vmatpush1.xpose.msra.mxu0 0.0
        %1624 = vmatprep.subr.mxu0 0.0
        %1625 = vmatpush1.xpose.msra.mxu0 0.0
        %1626 = vmatprep.subr.mxu0 0.0
        %1627 = vmatpush1.xpose.msra.mxu0 0.0
        %1628 = vmatprep.subr.mxu0 0.0
        %1629 = vmatpush1.xpose.msra.mxu0 0.0
        %1630 = vmatprep.subr.mxu0 0.0
        %1631 = vmatpush1.xpose.msra.mxu0 0.0
        %1632 = vmatprep.subr.mxu0 0.0
        %1633 = vmatpush1.xpose.msra.mxu0 0.0
        %1634 = vmatprep.subr.mxu0 0.0
        %1635 = vmatpush1.xpose.msra.mxu0 0.0
        %1636 = vmatprep.subr.mxu0 0.0
        %1637 = vmatpush1.xpose.msra.mxu0 0.0
        %1638 = vmatprep.subr.mxu0 0.0
        %1639 = vmatpush1.xpose.msra.mxu0 0.0
        %1640 = vmatprep.subr.mxu0 0.0
        %1641 = vmatpush1.xpose.msra.mxu0 0.0
        %1642 = vmatprep.subr.mxu0 0.0
        %1643 = vmatpush1.xpose.msra.mxu0 0.0
        %1644 = vmatprep.subr.mxu0 0.0
        %1645 = vmatpush1.xpose.msra.mxu0 0.0
        %1646 = vmatprep.subr.mxu0 0.0
        %1647 = vmatpush1.xpose.msra.mxu0 0.0
        %1648 = vmatprep.subr.mxu0 0.0
        %1649 = vmatpush1.xpose.msra.mxu0 0.0
        %1650 = vmatprep.subr.mxu0 0.0
        %v1651 = vand.u32 %v1317, 4294901760
        %v1652 = vsub.f32 %v1317, %v1651
        %v1653 = vand.u32 %v1652, 4294901760
        %1654 = vmatpush1.xpose.msra.mxu0 %v1653
        %1655 = vmatprep.subr.mxu0 0.0
        %1656 = vmatpush2.xpose.msra.mxu0 0.0
        %1657 = vmatprep.subr.mxu0 0.0
        %1658 = vmatpush2.xpose.msra.mxu0 0.0
        %1659 = vmatprep.subr.mxu0 0.0
        %1660 = vmatpush2.xpose.msra.mxu0 0.0
        %1661 = vmatprep.subr.mxu0 0.0
        %1662 = vmatpush2.xpose.msra.mxu0 0.0
        %1663 = vmatprep.subr.mxu0 0.0
        %1664 = vmatpush2.xpose.msra.mxu0 0.0
        %1665 = vmatprep.subr.mxu0 0.0
        %1666 = vmatpush2.xpose.msra.mxu0 0.0
        %1667 = vmatprep.subr.mxu0 0.0
        %1668 = vmatpush2.xpose.msra.mxu0 0.0
        %1669 = vmatprep.subr.mxu0 0.0
        %1670 = vmatpush2.xpose.msra.mxu0 0.0
        %1671 = vmatprep.subr.mxu0 0.0
        %1672 = vmatpush2.xpose.msra.mxu0 0.0
        %1673 = vmatprep.subr.mxu0 0.0
        %1674 = vmatpush2.xpose.msra.mxu0 0.0
        %1675 = vmatprep.subr.mxu0 0.0
        %1676 = vmatpush2.xpose.msra.mxu0 0.0
        %1677 = vmatprep.subr.mxu0 0.0
        %1678 = vmatpush2.xpose.msra.mxu0 0.0
        %1679 = vmatprep.subr.mxu0 0.0
        %1680 = vmatpush2.xpose.msra.mxu0 0.0
        %1681 = vmatprep.subr.mxu0 0.0
        %1682 = vmatpush2.xpose.msra.mxu0 0.0
        %1683 = vmatprep.subr.mxu0 0.0
        %1684 = vmatpush2.xpose.msra.mxu0 0.0
        %1685 = vmatprep.subr.mxu0 0.0
        %1686 = vmatpush2.xpose.msra.mxu0 0.0
        %1687 = vmatprep.mubr.f32.mxu0 0.0
        %v1688 = vand.u32 %v1319, 4294901760
        %1689 = vmatmul.mubr.f32.gmra.mxu0 %v1688
        %v1690 = vpop.f32.mrf.mxu0
        %v1691 = vadd.f32 %v1617, %v1690
        %v1692 = vpop.f32.mrf.mxu0
        %1693 = vdwg.mxu0
        %1694 = vmatprep.subr.mxu0 0.0
        %1695 = vmatpush1.xpose.msra.mxu0 0.0
        %1696 = vmatprep.subr.mxu0 0.0
        %1697 = vmatpush1.xpose.msra.mxu0 0.0
        %1698 = vmatprep.subr.mxu0 0.0
        %1699 = vmatpush1.xpose.msra.mxu0 0.0
        %1700 = vmatprep.subr.mxu0 0.0
        %1701 = vmatpush1.xpose.msra.mxu0 0.0
        %1702 = vmatprep.subr.mxu0 0.0
        %1703 = vmatpush1.xpose.msra.mxu0 0.0
        %1704 = vmatprep.subr.mxu0 0.0
        %1705 = vmatpush1.xpose.msra.mxu0 0.0
        %1706 = vmatprep.subr.mxu0 0.0
        %1707 = vmatpush1.xpose.msra.mxu0 0.0
        %1708 = vmatprep.subr.mxu0 0.0
        %1709 = vmatpush1.xpose.msra.mxu0 0.0
        %1710 = vmatprep.subr.mxu0 0.0
        %1711 = vmatpush1.xpose.msra.mxu0 0.0
        %1712 = vmatprep.subr.mxu0 0.0
        %1713 = vmatpush1.xpose.msra.mxu0 0.0
        %1714 = vmatprep.subr.mxu0 0.0
        %1715 = vmatpush1.xpose.msra.mxu0 0.0
        %1716 = vmatprep.subr.mxu0 0.0
        %1717 = vmatpush1.xpose.msra.mxu0 0.0
        %1718 = vmatprep.subr.mxu0 0.0
        %1719 = vmatpush1.xpose.msra.mxu0 0.0
        %1720 = vmatprep.subr.mxu0 0.0
        %1721 = vmatpush1.xpose.msra.mxu0 0.0
        %1722 = vmatprep.subr.mxu0 0.0
        %1723 = vmatpush1.xpose.msra.mxu0 0.0
        %1724 = vmatprep.subr.mxu0 0.0
        %v1725 = vand.u32 %v1317, 4294901760
        %1726 = vmatpush1.xpose.msra.mxu0 %v1725
        %1727 = vmatprep.subr.mxu0 0.0
        %1728 = vmatpush2.xpose.msra.mxu0 0.0
        %1729 = vmatprep.subr.mxu0 0.0
        %1730 = vmatpush2.xpose.msra.mxu0 0.0
        %1731 = vmatprep.subr.mxu0 0.0
        %1732 = vmatpush2.xpose.msra.mxu0 0.0
        %1733 = vmatprep.subr.mxu0 0.0
        %1734 = vmatpush2.xpose.msra.mxu0 0.0
        %1735 = vmatprep.subr.mxu0 0.0
        %1736 = vmatpush2.xpose.msra.mxu0 0.0
        %1737 = vmatprep.subr.mxu0 0.0
        %1738 = vmatpush2.xpose.msra.mxu0 0.0
        %1739 = vmatprep.subr.mxu0 0.0
        %1740 = vmatpush2.xpose.msra.mxu0 0.0
        %1741 = vmatprep.subr.mxu0 0.0
        %1742 = vmatpush2.xpose.msra.mxu0 0.0
        %1743 = vmatprep.subr.mxu0 0.0
        %1744 = vmatpush2.xpose.msra.mxu0 0.0
        %1745 = vmatprep.subr.mxu0 0.0
        %1746 = vmatpush2.xpose.msra.mxu0 0.0
        %1747 = vmatprep.subr.mxu0 0.0
        %1748 = vmatpush2.xpose.msra.mxu0 0.0
        %1749 = vmatprep.subr.mxu0 0.0
        %1750 = vmatpush2.xpose.msra.mxu0 0.0
        %1751 = vmatprep.subr.mxu0 0.0
        %1752 = vmatpush2.xpose.msra.mxu0 0.0
        %1753 = vmatprep.subr.mxu0 0.0
        %1754 = vmatpush2.xpose.msra.mxu0 0.0
        %1755 = vmatprep.subr.mxu0 0.0
        %1756 = vmatpush2.xpose.msra.mxu0 0.0
        %1757 = vmatprep.subr.mxu0 0.0
        %1758 = vmatpush2.xpose.msra.mxu0 0.0
        %1759 = vmatprep.mubr.f32.mxu0 0.0
        %v1760 = vand.u32 %v1319, 4294901760
        %1761 = vmatmul.mubr.f32.gmra.mxu0 %v1760
        %v1762 = vpop.f32.mrf.mxu0
        %v1763 = vadd.f32 %v1691, %v1762
        %v1764 = vpop.f32.mrf.mxu0
        %1765 = vdwg.mxu0
        %v1766 = vld [vmem:[#allocation4] sm:$0xff]
        %vm1767 = vcmask 64512
        %v1768 = vsel %vm1767, %v1763, -inf
        %1769 = vmax.xlane.f32.xlu0 %v1768
        %v1770 = vpop.xlane.xlu0 %1769
        %v1771 = vmax.f32 %v1766, %v1770
        %v1772 = vsub.f32 %v1766, %v1771
        %v1773 = vmul.f32 %v1772, 1.442695
        %v1774 = vpow.pop %v1773
        %1776 = vset.pattern.permute.xlu0 0
        %1777 = vperm.xlu0 %1776, %v1771
        %v1778 = vpop.permute.xlu0 %1777
        %v1780 = vsub.f32 %v1763, %v1778
        %v1781 = vmul.f32 %v1780, 1.442695
        %v1782 = vpow.pop %v1781
        %v1783 = vld [vmem:[#allocation5] sm:$0xff]
        %v1784 = vmul.f32 %v1774, %v1783
        %v1785 = vsel %vm1767, %v1782, 0.0
        %1786 = vadd.xlane.f32.xlu0 %v1785
        %v1787 = vpop.xlane.xlu0 %1786
        %v1788 = vadd.f32 %v1784, %v1787
        %vm1789 = vcmask 7168
        %1790 = vst.msk [vmem:[#allocation5] sm:$0xff] %vm1789, %v1788
        %v1791 = vld [vmem:[#allocation6] sm:$0xff]
        %1793 = vset.pattern.permute.xlu0 0
        %1794 = vperm.xlu0 %1793, %v1774
        %v1795 = vpop.permute.xlu0 %1794
        %v1797 = vmul.f32 %v1795, %v1791
        %v1799 = vsel %vm1767, %v1782, 0
        %1801 = vmatprep.subr.mxu0 0.0
        %1802 = vmatpush1.msra.mxu0 0.0
        %1803 = vmatprep.subr.mxu0 0.0
        %1804 = vmatpush1.msra.mxu0 0.0
        %1805 = vmatprep.subr.mxu0 0.0
        %1806 = vmatpush1.msra.mxu0 0.0
        %1807 = vmatprep.subr.mxu0 0.0
        %1808 = vmatpush1.msra.mxu0 0.0
        %1809 = vmatprep.subr.mxu0 0.0
        %1810 = vmatpush1.msra.mxu0 0.0
        %1811 = vmatprep.subr.mxu0 0.0
        %1812 = vmatpush1.msra.mxu0 0.0
        %1813 = vmatprep.subr.mxu0 0.0
        %1814 = vmatpush1.msra.mxu0 0.0
        %1815 = vmatprep.subr.mxu0 0.0
        %1816 = vmatpush1.msra.mxu0 0.0
        %1817 = vmatprep.subr.mxu0 0.0
        %1818 = vmatpush1.msra.mxu0 0.0
        %1819 = vmatprep.subr.mxu0 0.0
        %1820 = vmatpush1.msra.mxu0 0.0
        %1821 = vmatprep.subr.mxu0 0.0
        %1822 = vmatpush1.msra.mxu0 0.0
        %1823 = vmatprep.subr.mxu0 0.0
        %1824 = vmatpush1.msra.mxu0 0.0
        %1825 = vmatprep.subr.mxu0 0.0
        %1826 = vmatpush1.msra.mxu0 0.0
        %1827 = vmatprep.subr.mxu0 0.0
        %1828 = vmatpush1.msra.mxu0 0.0
        %1829 = vmatprep.subr.mxu0 0.0
        %1830 = vmatpush1.msra.mxu0 0.0
        %1831 = vmatprep.subr.mxu0 0.0
        %v1832 = vand.u32 %v1318, 4294901760
        %1833 = vmatpush1.msra.mxu0 %v1832
        %1834 = vmatprep.subr.mxu0 0.0
        %1835 = vmatpush2.msra.mxu0 0.0
        %1836 = vmatprep.subr.mxu0 0.0
        %1837 = vmatpush2.msra.mxu0 0.0
        %1838 = vmatprep.subr.mxu0 0.0
        %1839 = vmatpush2.msra.mxu0 0.0
        %1840 = vmatprep.subr.mxu0 0.0
        %1841 = vmatpush2.msra.mxu0 0.0
        %1842 = vmatprep.subr.mxu0 0.0
        %1843 = vmatpush2.msra.mxu0 0.0
        %1844 = vmatprep.subr.mxu0 0.0
        %1845 = vmatpush2.msra.mxu0 0.0
        %1846 = vmatprep.subr.mxu0 0.0
        %1847 = vmatpush2.msra.mxu0 0.0
        %1848 = vmatprep.subr.mxu0 0.0
        %1849 = vmatpush2.msra.mxu0 0.0
        %1850 = vmatprep.subr.mxu0 0.0
        %1851 = vmatpush2.msra.mxu0 0.0
        %1852 = vmatprep.subr.mxu0 0.0
        %1853 = vmatpush2.msra.mxu0 0.0
        %1854 = vmatprep.subr.mxu0 0.0
        %1855 = vmatpush2.msra.mxu0 0.0
        %1856 = vmatprep.subr.mxu0 0.0
        %1857 = vmatpush2.msra.mxu0 0.0
        %1858 = vmatprep.subr.mxu0 0.0
        %1859 = vmatpush2.msra.mxu0 0.0
        %1860 = vmatprep.subr.mxu0 0.0
        %1861 = vmatpush2.msra.mxu0 0.0
        %1862 = vmatprep.subr.mxu0 0.0
        %1863 = vmatpush2.msra.mxu0 0.0
        %1864 = vmatprep.subr.mxu0 0.0
        %1865 = vmatpush2.msra.mxu0 0.0
        %1866 = vmatprep.mubr.f32.mxu0 0.0
        %v1867 = vand.u32 %v1799, 4294901760
        %v1868 = vsub.f32 %v1799, %v1867
        %v1869 = vand.u32 %v1868, 4294901760
        %v1870 = vsub.f32 %v1868, %v1869
        %v1871 = vand.u32 %v1870, 4294901760
        %1872 = vmatmul.mubr.f32.gmra.mxu0 %v1871
        %v1873 = vpop.f32.mrf.mxu0
        %v1874 = vadd.f32 0.0, %v1873
        %v1875 = vpop.f32.mrf.mxu0
        %1876 = vdwg.mxu0
        %1877 = vmatprep.subr.mxu0 0.0
        %1878 = vmatpush1.msra.mxu0 0.0
        %1879 = vmatprep.subr.mxu0 0.0
        %1880 = vmatpush1.msra.mxu0 0.0
        %1881 = vmatprep.subr.mxu0 0.0
        %1882 = vmatpush1.msra.mxu0 0.0
        %1883 = vmatprep.subr.mxu0 0.0
        %1884 = vmatpush1.msra.mxu0 0.0
        %1885 = vmatprep.subr.mxu0 0.0
        %1886 = vmatpush1.msra.mxu0 0.0
        %1887 = vmatprep.subr.mxu0 0.0
        %1888 = vmatpush1.msra.mxu0 0.0
        %1889 = vmatprep.subr.mxu0 0.0
        %1890 = vmatpush1.msra.mxu0 0.0
        %1891 = vmatprep.subr.mxu0 0.0
        %1892 = vmatpush1.msra.mxu0 0.0
        %1893 = vmatprep.subr.mxu0 0.0
        %1894 = vmatpush1.msra.mxu0 0.0
        %1895 = vmatprep.subr.mxu0 0.0
        %1896 = vmatpush1.msra.mxu0 0.0
        %1897 = vmatprep.subr.mxu0 0.0
        %1898 = vmatpush1.msra.mxu0 0.0
        %1899 = vmatprep.subr.mxu0 0.0
        %1900 = vmatpush1.msra.mxu0 0.0
        %1901 = vmatprep.subr.mxu0 0.0
        %1902 = vmatpush1.msra.mxu0 0.0
        %1903 = vmatprep.subr.mxu0 0.0
        %1904 = vmatpush1.msra.mxu0 0.0
        %1905 = vmatprep.subr.mxu0 0.0
        %1906 = vmatpush1.msra.mxu0 0.0
        %1907 = vmatprep.subr.mxu0 0.0
        %v1908 = vand.u32 %v1318, 4294901760
        %v1909 = vsub.f32 %v1318, %v1908
        %v1910 = vand.u32 %v1909, 4294901760
        %v1911 = vsub.f32 %v1909, %v1910
        %v1912 = vand.u32 %v1911, 4294901760
        %1913 = vmatpush1.msra.mxu0 %v1912
        %1914 = vmatprep.subr.mxu0 0.0
        %1915 = vmatpush2.msra.mxu0 0.0
        %1916 = vmatprep.subr.mxu0 0.0
        %1917 = vmatpush2.msra.mxu0 0.0
        %1918 = vmatprep.subr.mxu0 0.0
        %1919 = vmatpush2.msra.mxu0 0.0
        %1920 = vmatprep.subr.mxu0 0.0
        %1921 = vmatpush2.msra.mxu0 0.0
        %1922 = vmatprep.subr.mxu0 0.0
        %1923 = vmatpush2.msra.mxu0 0.0
        %1924 = vmatprep.subr.mxu0 0.0
        %1925 = vmatpush2.msra.mxu0 0.0
        %1926 = vmatprep.subr.mxu0 0.0
        %1927 = vmatpush2.msra.mxu0 0.0
        %1928 = vmatprep.subr.mxu0 0.0
        %1929 = vmatpush2.msra.mxu0 0.0
        %1930 = vmatprep.subr.mxu0 0.0
        %1931 = vmatpush2.msra.mxu0 0.0
        %1932 = vmatprep.subr.mxu0 0.0
        %1933 = vmatpush2.msra.mxu0 0.0
        %1934 = vmatprep.subr.mxu0 0.0
        %1935 = vmatpush2.msra.mxu0 0.0
        %1936 = vmatprep.subr.mxu0 0.0
        %1937 = vmatpush2.msra.mxu0 0.0
        %1938 = vmatprep.subr.mxu0 0.0
        %1939 = vmatpush2.msra.mxu0 0.0
        %1940 = vmatprep.subr.mxu0 0.0
        %1941 = vmatpush2.msra.mxu0 0.0
        %1942 = vmatprep.subr.mxu0 0.0
        %1943 = vmatpush2.msra.mxu0 0.0
        %1944 = vmatprep.subr.mxu0 0.0
        %1945 = vmatpush2.msra.mxu0 0.0
        %1946 = vmatprep.mubr.f32.mxu0 0.0
        %v1947 = vand.u32 %v1799, 4294901760
        %1948 = vmatmul.mubr.f32.gmra.mxu0 %v1947
        %v1949 = vpop.f32.mrf.mxu0
        %v1950 = vadd.f32 %v1874, %v1949
        %v1951 = vpop.f32.mrf.mxu0
        %1952 = vdwg.mxu0
        %1953 = vmatprep.subr.mxu0 0.0
        %1954 = vmatpush1.msra.mxu0 0.0
        %1955 = vmatprep.subr.mxu0 0.0
        %1956 = vmatpush1.msra.mxu0 0.0
        %1957 = vmatprep.subr.mxu0 0.0
        %1958 = vmatpush1.msra.mxu0 0.0
        %1959 = vmatprep.subr.mxu0 0.0
        %1960 = vmatpush1.msra.mxu0 0.0
        %1961 = vmatprep.subr.mxu0 0.0
        %1962 = vmatpush1.msra.mxu0 0.0
        %1963 = vmatprep.subr.mxu0 0.0
        %1964 = vmatpush1.msra.mxu0 0.0
        %1965 = vmatprep.subr.mxu0 0.0
        %1966 = vmatpush1.msra.mxu0 0.0
        %1967 = vmatprep.subr.mxu0 0.0
        %1968 = vmatpush1.msra.mxu0 0.0
        %1969 = vmatprep.subr.mxu0 0.0
        %1970 = vmatpush1.msra.mxu0 0.0
        %1971 = vmatprep.subr.mxu0 0.0
        %1972 = vmatpush1.msra.mxu0 0.0
        %1973 = vmatprep.subr.mxu0 0.0
        %1974 = vmatpush1.msra.mxu0 0.0
        %1975 = vmatprep.subr.mxu0 0.0
        %1976 = vmatpush1.msra.mxu0 0.0
        %1977 = vmatprep.subr.mxu0 0.0
        %1978 = vmatpush1.msra.mxu0 0.0
        %1979 = vmatprep.subr.mxu0 0.0
        %1980 = vmatpush1.msra.mxu0 0.0
        %1981 = vmatprep.subr.mxu0 0.0
        %1982 = vmatpush1.msra.mxu0 0.0
        %1983 = vmatprep.subr.mxu0 0.0
        %v1984 = vand.u32 %v1318, 4294901760
        %v1985 = vsub.f32 %v1318, %v1984
        %1986 = vmatpush1.msra.mxu0 %v1985
        %1987 = vmatprep.subr.mxu0 0.0
        %1988 = vmatpush2.msra.mxu0 0.0
        %1989 = vmatprep.subr.mxu0 0.0
        %1990 = vmatpush2.msra.mxu0 0.0
        %1991 = vmatprep.subr.mxu0 0.0
        %1992 = vmatpush2.msra.mxu0 0.0
        %1993 = vmatprep.subr.mxu0 0.0
        %1994 = vmatpush2.msra.mxu0 0.0
        %1995 = vmatprep.subr.mxu0 0.0
        %1996 = vmatpush2.msra.mxu0 0.0
        %1997 = vmatprep.subr.mxu0 0.0
        %1998 = vmatpush2.msra.mxu0 0.0
        %1999 = vmatprep.subr.mxu0 0.0
        %2000 = vmatpush2.msra.mxu0 0.0
        %2001 = vmatprep.subr.mxu0 0.0
        %2002 = vmatpush2.msra.mxu0 0.0
        %2003 = vmatprep.subr.mxu0 0.0
        %2004 = vmatpush2.msra.mxu0 0.0
        %2005 = vmatprep.subr.mxu0 0.0
        %2006 = vmatpush2.msra.mxu0 0.0
        %2007 = vmatprep.subr.mxu0 0.0
        %2008 = vmatpush2.msra.mxu0 0.0
        %2009 = vmatprep.subr.mxu0 0.0
        %2010 = vmatpush2.msra.mxu0 0.0
        %2011 = vmatprep.subr.mxu0 0.0
        %2012 = vmatpush2.msra.mxu0 0.0
        %2013 = vmatprep.subr.mxu0 0.0
        %2014 = vmatpush2.msra.mxu0 0.0
        %2015 = vmatprep.subr.mxu0 0.0
        %2016 = vmatpush2.msra.mxu0 0.0
        %2017 = vmatprep.subr.mxu0 0.0
        %2018 = vmatpush2.msra.mxu0 0.0
        %2019 = vmatprep.mubr.f32.mxu0 0.0
        %v2020 = vand.u32 %v1799, 4294901760
        %v2021 = vsub.f32 %v1799, %v2020
        %2022 = vmatmul.mubr.f32.gmra.mxu0 %v2021
        %v2023 = vpop.f32.mrf.mxu0
        %v2024 = vadd.f32 %v1950, %v2023
        %v2025 = vpop.f32.mrf.mxu0
        %2026 = vdwg.mxu0
        %2027 = vmatprep.subr.mxu0 0.0
        %2028 = vmatpush1.msra.mxu0 0.0
        %2029 = vmatprep.subr.mxu0 0.0
        %2030 = vmatpush1.msra.mxu0 0.0
        %2031 = vmatprep.subr.mxu0 0.0
        %2032 = vmatpush1.msra.mxu0 0.0
        %2033 = vmatprep.subr.mxu0 0.0
        %2034 = vmatpush1.msra.mxu0 0.0
        %2035 = vmatprep.subr.mxu0 0.0
        %2036 = vmatpush1.msra.mxu0 0.0
        %2037 = vmatprep.subr.mxu0 0.0
        %2038 = vmatpush1.msra.mxu0 0.0
        %2039 = vmatprep.subr.mxu0 0.0
        %2040 = vmatpush1.msra.mxu0 0.0
        %2041 = vmatprep.subr.mxu0 0.0
        %2042 = vmatpush1.msra.mxu0 0.0
        %2043 = vmatprep.subr.mxu0 0.0
        %2044 = vmatpush1.msra.mxu0 0.0
        %2045 = vmatprep.subr.mxu0 0.0
        %2046 = vmatpush1.msra.mxu0 0.0
        %2047 = vmatprep.subr.mxu0 0.0
        %2048 = vmatpush1.msra.mxu0 0.0
        %2049 = vmatprep.subr.mxu0 0.0
        %2050 = vmatpush1.msra.mxu0 0.0
        %2051 = vmatprep.subr.mxu0 0.0
        %2052 = vmatpush1.msra.mxu0 0.0
        %2053 = vmatprep.subr.mxu0 0.0
        %2054 = vmatpush1.msra.mxu0 0.0
        %2055 = vmatprep.subr.mxu0 0.0
        %2056 = vmatpush1.msra.mxu0 0.0
        %2057 = vmatprep.subr.mxu0 0.0
        %v2058 = vand.u32 %v1318, 4294901760
        %2059 = vmatpush1.msra.mxu0 %v2058
        %2060 = vmatprep.subr.mxu0 0.0
        %2061 = vmatpush2.msra.mxu0 0.0
        %2062 = vmatprep.subr.mxu0 0.0
        %2063 = vmatpush2.msra.mxu0 0.0
        %2064 = vmatprep.subr.mxu0 0.0
        %2065 = vmatpush2.msra.mxu0 0.0
        %2066 = vmatprep.subr.mxu0 0.0
        %2067 = vmatpush2.msra.mxu0 0.0
        %2068 = vmatprep.subr.mxu0 0.0
        %2069 = vmatpush2.msra.mxu0 0.0
        %2070 = vmatprep.subr.mxu0 0.0
        %2071 = vmatpush2.msra.mxu0 0.0
        %2072 = vmatprep.subr.mxu0 0.0
        %2073 = vmatpush2.msra.mxu0 0.0
        %2074 = vmatprep.subr.mxu0 0.0
        %2075 = vmatpush2.msra.mxu0 0.0
        %2076 = vmatprep.subr.mxu0 0.0
        %2077 = vmatpush2.msra.mxu0 0.0
        %2078 = vmatprep.subr.mxu0 0.0
        %2079 = vmatpush2.msra.mxu0 0.0
        %2080 = vmatprep.subr.mxu0 0.0
        %2081 = vmatpush2.msra.mxu0 0.0
        %2082 = vmatprep.subr.mxu0 0.0
        %2083 = vmatpush2.msra.mxu0 0.0
        %2084 = vmatprep.subr.mxu0 0.0
        %2085 = vmatpush2.msra.mxu0 0.0
        %2086 = vmatprep.subr.mxu0 0.0
        %2087 = vmatpush2.msra.mxu0 0.0
        %2088 = vmatprep.subr.mxu0 0.0
        %2089 = vmatpush2.msra.mxu0 0.0
        %2090 = vmatprep.subr.mxu0 0.0
        %2091 = vmatpush2.msra.mxu0 0.0
        %2092 = vmatprep.mubr.f32.mxu0 0.0
        %v2093 = vand.u32 %v1799, 4294901760
        %v2094 = vsub.f32 %v1799, %v2093
        %v2095 = vand.u32 %v2094, 4294901760
        %2096 = vmatmul.mubr.f32.gmra.mxu0 %v2095
        %v2097 = vpop.f32.mrf.mxu0
        %v2098 = vadd.f32 %v2024, %v2097
        %v2099 = vpop.f32.mrf.mxu0
        %2100 = vdwg.mxu0
        %2101 = vmatprep.subr.mxu0 0.0
        %2102 = vmatpush1.msra.mxu0 0.0
        %2103 = vmatprep.subr.mxu0 0.0
        %2104 = vmatpush1.msra.mxu0 0.0
        %2105 = vmatprep.subr.mxu0 0.0
        %2106 = vmatpush1.msra.mxu0 0.0
        %2107 = vmatprep.subr.mxu0 0.0
        %2108 = vmatpush1.msra.mxu0 0.0
        %2109 = vmatprep.subr.mxu0 0.0
        %2110 = vmatpush1.msra.mxu0 0.0
        %2111 = vmatprep.subr.mxu0 0.0
        %2112 = vmatpush1.msra.mxu0 0.0
        %2113 = vmatprep.subr.mxu0 0.0
        %2114 = vmatpush1.msra.mxu0 0.0
        %2115 = vmatprep.subr.mxu0 0.0
        %2116 = vmatpush1.msra.mxu0 0.0
        %2117 = vmatprep.subr.mxu0 0.0
        %2118 = vmatpush1.msra.mxu0 0.0
        %2119 = vmatprep.subr.mxu0 0.0
        %2120 = vmatpush1.msra.mxu0 0.0
        %2121 = vmatprep.subr.mxu0 0.0
        %2122 = vmatpush1.msra.mxu0 0.0
        %2123 = vmatprep.subr.mxu0 0.0
        %2124 = vmatpush1.msra.mxu0 0.0
        %2125 = vmatprep.subr.mxu0 0.0
        %2126 = vmatpush1.msra.mxu0 0.0
        %2127 = vmatprep.subr.mxu0 0.0
        %2128 = vmatpush1.msra.mxu0 0.0
        %2129 = vmatprep.subr.mxu0 0.0
        %2130 = vmatpush1.msra.mxu0 0.0
        %2131 = vmatprep.subr.mxu0 0.0
        %v2132 = vand.u32 %v1318, 4294901760
        %v2133 = vsub.f32 %v1318, %v2132
        %v2134 = vand.u32 %v2133, 4294901760
        %2135 = vmatpush1.msra.mxu0 %v2134
        %2136 = vmatprep.subr.mxu0 0.0
        %2137 = vmatpush2.msra.mxu0 0.0
        %2138 = vmatprep.subr.mxu0 0.0
        %2139 = vmatpush2.msra.mxu0 0.0
        %2140 = vmatprep.subr.mxu0 0.0
        %2141 = vmatpush2.msra.mxu0 0.0
        %2142 = vmatprep.subr.mxu0 0.0
        %2143 = vmatpush2.msra.mxu0 0.0
        %2144 = vmatprep.subr.mxu0 0.0
        %2145 = vmatpush2.msra.mxu0 0.0
        %2146 = vmatprep.subr.mxu0 0.0
        %2147 = vmatpush2.msra.mxu0 0.0
        %2148 = vmatprep.subr.mxu0 0.0
        %2149 = vmatpush2.msra.mxu0 0.0
        %2150 = vmatprep.subr.mxu0 0.0
        %2151 = vmatpush2.msra.mxu0 0.0
        %2152 = vmatprep.subr.mxu0 0.0
        %2153 = vmatpush2.msra.mxu0 0.0
        %2154 = vmatprep.subr.mxu0 0.0
        %2155 = vmatpush2.msra.mxu0 0.0
        %2156 = vmatprep.subr.mxu0 0.0
        %2157 = vmatpush2.msra.mxu0 0.0
        %2158 = vmatprep.subr.mxu0 0.0
        %2159 = vmatpush2.msra.mxu0 0.0
        %2160 = vmatprep.subr.mxu0 0.0
        %2161 = vmatpush2.msra.mxu0 0.0
        %2162 = vmatprep.subr.mxu0 0.0
        %2163 = vmatpush2.msra.mxu0 0.0
        %2164 = vmatprep.subr.mxu0 0.0
        %2165 = vmatpush2.msra.mxu0 0.0
        %2166 = vmatprep.subr.mxu0 0.0
        %2167 = vmatpush2.msra.mxu0 0.0
        %2168 = vmatprep.mubr.f32.mxu0 0.0
        %v2169 = vand.u32 %v1799, 4294901760
        %2170 = vmatmul.mubr.f32.gmra.mxu0 %v2169
        %v2171 = vpop.f32.mrf.mxu0
        %v2172 = vadd.f32 %v2098, %v2171
        %v2173 = vpop.f32.mrf.mxu0
        %2174 = vdwg.mxu0
        %2175 = vmatprep.subr.mxu0 0.0
        %2176 = vmatpush1.msra.mxu0 0.0
        %2177 = vmatprep.subr.mxu0 0.0
        %2178 = vmatpush1.msra.mxu0 0.0
        %2179 = vmatprep.subr.mxu0 0.0
        %2180 = vmatpush1.msra.mxu0 0.0
        %2181 = vmatprep.subr.mxu0 0.0
        %2182 = vmatpush1.msra.mxu0 0.0
        %2183 = vmatprep.subr.mxu0 0.0
        %2184 = vmatpush1.msra.mxu0 0.0
        %2185 = vmatprep.subr.mxu0 0.0
        %2186 = vmatpush1.msra.mxu0 0.0
        %2187 = vmatprep.subr.mxu0 0.0
        %2188 = vmatpush1.msra.mxu0 0.0
        %2189 = vmatprep.subr.mxu0 0.0
        %2190 = vmatpush1.msra.mxu0 0.0
        %2191 = vmatprep.subr.mxu0 0.0
        %2192 = vmatpush1.msra.mxu0 0.0
        %2193 = vmatprep.subr.mxu0 0.0
        %2194 = vmatpush1.msra.mxu0 0.0
        %2195 = vmatprep.subr.mxu0 0.0
        %2196 = vmatpush1.msra.mxu0 0.0
        %2197 = vmatprep.subr.mxu0 0.0
        %2198 = vmatpush1.msra.mxu0 0.0
        %2199 = vmatprep.subr.mxu0 0.0
        %2200 = vmatpush1.msra.mxu0 0.0
        %2201 = vmatprep.subr.mxu0 0.0
        %2202 = vmatpush1.msra.mxu0 0.0
        %2203 = vmatprep.subr.mxu0 0.0
        %2204 = vmatpush1.msra.mxu0 0.0
        %2205 = vmatprep.subr.mxu0 0.0
        %v2206 = vand.u32 %v1318, 4294901760
        %2207 = vmatpush1.msra.mxu0 %v2206
        %2208 = vmatprep.subr.mxu0 0.0
        %2209 = vmatpush2.msra.mxu0 0.0
        %2210 = vmatprep.subr.mxu0 0.0
        %2211 = vmatpush2.msra.mxu0 0.0
        %2212 = vmatprep.subr.mxu0 0.0
        %2213 = vmatpush2.msra.mxu0 0.0
        %2214 = vmatprep.subr.mxu0 0.0
        %2215 = vmatpush2.msra.mxu0 0.0
        %2216 = vmatprep.subr.mxu0 0.0
        %2217 = vmatpush2.msra.mxu0 0.0
        %2218 = vmatprep.subr.mxu0 0.0
        %2219 = vmatpush2.msra.mxu0 0.0
        %2220 = vmatprep.subr.mxu0 0.0
        %2221 = vmatpush2.msra.mxu0 0.0
        %2222 = vmatprep.subr.mxu0 0.0
        %2223 = vmatpush2.msra.mxu0 0.0
        %2224 = vmatprep.subr.mxu0 0.0
        %2225 = vmatpush2.msra.mxu0 0.0
        %2226 = vmatprep.subr.mxu0 0.0
        %2227 = vmatpush2.msra.mxu0 0.0
        %2228 = vmatprep.subr.mxu0 0.0
        %2229 = vmatpush2.msra.mxu0 0.0
        %2230 = vmatprep.subr.mxu0 0.0
        %2231 = vmatpush2.msra.mxu0 0.0
        %2232 = vmatprep.subr.mxu0 0.0
        %2233 = vmatpush2.msra.mxu0 0.0
        %2234 = vmatprep.subr.mxu0 0.0
        %2235 = vmatpush2.msra.mxu0 0.0
        %2236 = vmatprep.subr.mxu0 0.0
        %2237 = vmatpush2.msra.mxu0 0.0
        %2238 = vmatprep.subr.mxu0 0.0
        %2239 = vmatpush2.msra.mxu0 0.0
        %2240 = vmatprep.mubr.f32.mxu0 0.0
        %v2241 = vand.u32 %v1799, 4294901760
        %2242 = vmatmul.mubr.f32.gmra.mxu0 %v2241
        %v2243 = vpop.f32.mrf.mxu0
        %v2244 = vadd.f32 %v2172, %v2243
        %v2245 = vpop.f32.mrf.mxu0
        %2246 = vdwg.mxu0
        %v2247 = vadd.f32 %v1797, %v2244
        %2248 = vst [vmem:[#allocation6] sm:$0xff] %v2247
        %2249 = vst.msk [vmem:[#allocation4] sm:$0xff] %vm1789, %v1771
        // Predicated region
        $region57: #{tpu_custom_call.1} parent=35 // pred_check
          %p2250 = pneg %p299
        $region58: #{tpu_custom_call.1} parent=35 // pred_check_branch
          %2252 = sbr.rel (%p2250) target = $region60
        $region59: #{tpu_custom_call.1} parent=35 // pred_region
          %v2253 = vld [vmem:[#allocation5] sm:$0xff]
          %v2254 = vrcp.pop %v2253
          %v2255 = vld [vmem:[#allocation6] sm:$0xff]
          %2257 = vset.pattern.permute.xlu0 0
          %2258 = vperm.xlu0 %2257, %v2254
          %v2259 = vpop.permute.xlu0 %2258
          %v2261 = vmul.f32 %v2255, %v2259
          %2262 = vst [vmem:[%s296] sm:$0xff] %v2261
        $region60: #{tpu_custom_call.1} parent=35 // pred_fallthru
          _
        %s2263 = sand.u32 %s155, 1
        %s2264 = scalar_lea.sflag [#allocation9], %s2263
        %s2265 = sand.u32 %s155, 1
        %s2266 = smul.addr %s2265, 8
        %s2267 = scalar_lea.vmem [#allocation13], %s2266
        // Predicated region
        $region61: #{tpu_custom_call.1} parent=35 // pred_check
          %p2268 = pneg %p165
        $region62: #{tpu_custom_call.1} parent=35 // pred_check_branch
          %2270 = sbr.rel (%p2268) target = $region64
        $region63: #{tpu_custom_call.1} parent=35 // pred_region
          %s2272 = ssub.s32 128, 128
          %2273 = vsyncadd %s2264, %s2272
          %s2274 = sadd.s32 %s30, %s29
          %s2275 = smul.addr %s2274, 128
          %s2276 = scalar_lea.hbm %s4, %s2275
          %s2278 = sshll.u32 %s2267, 4
          %s2279 = int_to_ptr.vmem [resolvable:$true] %s2278
          %2281 = dma.vmem_to_hbm [thread:$0]  %s2279, 128, %s2276, %s2264
        $region64: #{tpu_custom_call.1} parent=35 // pred_fallthru
          _
      $region36: #{tpu_custom_call.1} parent=5 // pred_fallthru
        _
      %p2282 = scmp.le.s32.totalorder 2, %s19
      // Predicated region
      $region65: #{tpu_custom_call.1} parent=5 // pred_check
        %p2283 = pneg %p2282
      $region66: #{tpu_custom_call.1} parent=5 // pred_check_branch
        %2285 = sbr.rel (%p2283) target = $region68
      $region67: #{tpu_custom_call.1} parent=5 // pred_region
        %s2286 = ssub.s32 %s19, 2
        // Predicated region
        $region69: #{tpu_custom_call.1} parent=67 // pred_check
          %p2287 = pneg %p171
        $region70: #{tpu_custom_call.1} parent=67 // pred_check_branch
          %2289 = sbr.rel (%p2287) target = $region72
        $region71: #{tpu_custom_call.1} parent=67 // pred_region
          %s2290 = sand.u32 %s156, 1
          %s2291 = scalar_lea.sflag [#allocation9], %s2290
          %s2292 = sand.u32 %s156, 1
          %s2293 = smul.addr %s2292, 8
          %s2294 = scalar_lea.vmem [#allocation13], %s2293
          %2295 = dma.done %s2291, 128
        $region72: #{tpu_custom_call.1} parent=67 // pred_fallthru
          _
      $region68: #{tpu_custom_call.1} parent=5 // pred_fallthru
        _
    $region6: #{tpu_custom_call.1} parent=1 // loop_footer
      %s23 = sadd.s32 1, %s19
    $region7: #{tpu_custom_call.1} parent=1 // loop_footer_branch
      %18 = sbr.rel target = $region3
    $region8: #{tpu_custom_call.1} parent=1 // loop_exit
      _
    %2296 = vsyncpa [#allocation8], 1
    %s2297 = scalar_lea.sflag [#allocation8], 1
    %2298 = vsyncpa %s2297, 1
    %2299 = vsyncpa [#allocation11], 1
    %s2300 = scalar_lea.sflag [#allocation11], 1
    %2301 = vsyncpa %s2300, 1
    %2302 = vsyncpa [#allocation9], 1
    %s2303 = scalar_lea.sflag [#allocation9], 1
    %2304 = vsyncpa %s2303, 1

</llo_original>
